<compile_context>
chip_gen: v6e
topology: v6e:2x2x1
jax: 0.10.0
libtpu: 0.0.40
codegen_flags: <defaults>
</compile_context>

<pallas_src>
import functools

import jax
import jax.numpy as jnp
from jax import lax
from jax.experimental import pallas as pl
from jax.experimental.pallas import tpu as pltpu

C_IN = 20
C_OUT = 10
H = 64
W = 64


def _bias_matmul_kernel(x_ref, wv_ref, b_ref, o_ref, *, batch_tile):
    # x_ref:  (batch_tile, C_IN, S_TILE)  activations, NCHW-resident
    # wv_ref: (C_IN, C_OUT)               weights.view(20, 10) (reshape, NOT transpose)
    # b_ref:  (C_IN, 1)                   bias
    # o_ref:  (batch_tile, C_OUT, S_TILE) lane-dense output tile
    wv = wv_ref[...]

    # Fold the bias through the matmul: (x + b)^T @ Wv  ==  Wv^T @ x + Wv^T @ b.
    # Tiny (20x10 @ 20x1) dot, negligible to recompute each grid step.
    fb = lax.dot_general(
        wv, b_ref[...], (((0,), (0,)), ((), ())),
        preferred_element_type=jnp.float32,
        precision=lax.Precision.HIGHEST)                      # (C_OUT, 1)

    # Contract dim 0 of both operands: (C_IN,C_OUT) x (C_IN,S) -> (C_OUT,S).
    # Static unrolled loop over the (small) batch tile keeps every matmul 2-D
    # and avoids any in-kernel transpose.
    for bi in range(batch_tile):
        acc = lax.dot_general(
            wv, x_ref[bi], (((0,), (0,)), ((), ())),
            preferred_element_type=jnp.float32,
            precision=lax.Precision.HIGHEST)                  # (C_OUT, S_TILE)
        o_ref[bi] = (acc + fb).astype(o_ref.dtype)


def model_forward(x, linear_weights, linear_bias, *, batch_tile=None, s_tile=None):
    """x: (N, 20, 64, 64) float32 (NCHW). Returns (N, 10, 64, 64) float32 (NCHW)."""
    n = x.shape[0]
    assert x.shape == (n, C_IN, H, W)
    hw = H * W

    # ---- tiling heuristics ------------------------------------------------
    if batch_tile is None:
        if n >= 8:
            batch_tile = 8
            while n % batch_tile:
                batch_tile -= 1
        else:
            batch_tile = 1
    assert n % batch_tile == 0

    if s_tile is None:
        # Prefer one full contiguous image per step; split the spatial axis only
        # as needed to keep >= 4 grid steps total (>= 2 per TensorCore on v7x)
        # so the DMA pipeline stays overlapped.
        s_tile = hw
        while (n // batch_tile) * (hw // s_tile) < 4 and s_tile > 512:
            s_tile //= 2
    assert hw % s_tile == 0 and s_tile % 128 == 0

    # ---- free reshapes (no data movement) ---------------------------------
    x_flat = x.reshape(n, C_IN, hw)                 # NCHW -> (N, C_IN, H*W)
    wv = linear_weights.reshape(C_IN, C_OUT)        # weights.view(20, 10) semantics
    b2d = linear_bias.reshape(C_IN, 1)

    grid = (n // batch_tile, hw // s_tile)

    cost = pl.CostEstimate(
        flops=2 * n * hw * C_IN * C_OUT,
        transcendentals=0,
        bytes_accessed=4 * (n * C_IN * hw + n * C_OUT * hw + C_IN * C_OUT + C_IN),
    )

    out_flat = pl.pallas_call(
        functools.partial(_bias_matmul_kernel, batch_tile=batch_tile),
        out_shape=jax.ShapeDtypeStruct((n, C_OUT, hw), jnp.float32),
        grid_spec=pltpu.PrefetchScalarGridSpec(
            num_scalar_prefetch=0,
            grid=grid,
            in_specs=[
                pl.BlockSpec((batch_tile, C_IN, s_tile), lambda b, s: (b, 0, s)),
                pl.BlockSpec((C_IN, C_OUT), lambda b, s: (0, 0)),
                pl.BlockSpec((C_IN, 1), lambda b, s: (0, 0)),
            ],
            out_specs=pl.BlockSpec((batch_tile, C_OUT, s_tile),
                                   lambda b, s: (b, 0, s)),
        ),
        compiler_params=pltpu.CompilerParams(
            dimension_semantics=("parallel", "parallel")),
        cost_estimate=cost,
    )(x_flat, wv, b2d)

    # Free reshape: (N, 10, H*W) -> NCHW (N, 10, 64, 64); no transpose needed.
    return out_flat.reshape(n, C_OUT, H, W)


if __name__ == "__main__":
    key = jax.random.PRNGKey(0)
    k_w, k_b, k_x = jax.random.split(key, 3)

    # deterministic parameter init matching __init__ shapes/semantics
    linear_weights = jax.random.uniform(k_w, (C_OUT, C_IN), dtype=jnp.float32)  # torch.rand(10, 20)
    linear_bias = 20.0 * jax.random.normal(k_b, (C_IN,), dtype=jnp.float32)     # normal(0, 20), 20 elems

    # forward hardcodes 64x64 spatial and 20 input channels; keep batch small
    x = jax.random.normal(k_x, (2, C_IN, H, W), dtype=jnp.float32)

    out = model_forward(x, linear_weights, linear_bias)
    jax.block_until_ready(out)

    # reference check in plain JAX (original NHWC formulation)
    v1 = jnp.transpose(x, (0, 2, 3, 1)).reshape(-1, C_IN)
    ref = jnp.dot(v1 + linear_bias.reshape(1, C_IN),
                  linear_weights.reshape(C_IN, C_OUT),
                  precision=lax.Precision.HIGHEST)
    ref = ref.reshape(x.shape[0], H, W, C_OUT).transpose(0, 3, 1, 2)

    assert out.shape == (2, C_OUT, H, W)
    assert jnp.allclose(out, ref, atol=1e-4, rtol=1e-4)

    print("KERNEL_OK")
</pallas_src>

<mosaic_0001>
module attributes {stable_mosaic.version = 11 : i64} {
  func.func @_bias_matmul_kernel(%arg0: i32, %arg1: i32, %arg2: memref<1x20x2048xf32, #tpu.memory_space<vmem>>, %arg3: memref<20x10xf32, #tpu.memory_space<vmem>>, %arg4: memref<20x1xf32, #tpu.memory_space<vmem>>, %arg5: memref<1x10x2048xf32, #tpu.memory_space<vmem>>) attributes {dimension_semantics = [#tpu.dimension_semantics<parallel>, #tpu.dimension_semantics<parallel>], iteration_bounds = array<i64: 2, 2>, scalar_prefetch = 0 : i64, scratch_operands = 0 : i64, tpu.core_type = #tpu.core_type<tc>, window_params = [{transform_indices = @transform_0, window_bounds = array<i64: 1, 20, 2048>}, {pipeline_mode = #tpu.pipeline_mode<synchronous>, transform_indices = @transform_1, window_bounds = array<i64: 20, 10>}, {pipeline_mode = #tpu.pipeline_mode<synchronous>, transform_indices = @transform_2, window_bounds = array<i64: 20, 1>}, {transform_indices = @transform_3, window_bounds = array<i64: 1, 10, 2048>}]} {
    %c0 = arith.constant 0 : index
    %c0_0 = arith.constant 0 : index
    %0 = vector.load %arg3[%c0, %c0_0] : memref<20x10xf32, #tpu.memory_space<vmem>>, vector<20x10xf32>
    %c0_1 = arith.constant 0 : index
    %c0_2 = arith.constant 0 : index
    %1 = vector.load %arg4[%c0_1, %c0_2] : memref<20x1xf32, #tpu.memory_space<vmem>>, vector<20x1xf32>
    %cst = arith.constant dense<0.000000e+00> : vector<10x1xf32>
    %2 = tpu.matmul %0, %1, %cst {dimension_numbers = #tpu.dot_dimension_numbers<[0], [0], [1], [1], [0, 1, 1, 1], [], []>, precision = #tpu.contract_precision<fp32>} : vector<20x10xf32>, vector<20x1xf32>, vector<10x1xf32> -> vector<10x1xf32>
    %c0_3 = arith.constant 0 : index
    %c0_4 = arith.constant 0 : index
    %c0_5 = arith.constant 0 : index
    %3 = vector.load %arg2[%c0_3, %c0_4, %c0_5] : memref<1x20x2048xf32, #tpu.memory_space<vmem>>, vector<1x20x2048xf32>
    %4 = vector.shape_cast %3 : vector<1x20x2048xf32> to vector<20x2048xf32>
    %cst_6 = arith.constant dense<0.000000e+00> : vector<10x2048xf32>
    %5 = tpu.matmul %0, %4, %cst_6 {dimension_numbers = #tpu.dot_dimension_numbers<[0], [0], [1], [1], [0, 1, 1, 1], [], []>, precision = #tpu.contract_precision<fp32>} : vector<20x10xf32>, vector<20x2048xf32>, vector<10x2048xf32> -> vector<10x2048xf32>
    %6 = vector.broadcast %2 : vector<10x1xf32> to vector<10x2048xf32>
    %7 = arith.addf %5, %6 : vector<10x2048xf32>
    %c0_7 = arith.constant 0 : index
    %c0_8 = arith.constant 0 : index
    %c0_9 = arith.constant 0 : index
    %8 = vector.load %arg5[%c0_7, %c0_8, %c0_9] : memref<1x10x2048xf32, #tpu.memory_space<vmem>>, vector<1x10x2048xf32>
    %9 = vector.shape_cast %8 : vector<1x10x2048xf32> to vector<10x2048xf32>
    %10 = vector.shape_cast %7 : vector<10x2048xf32> to vector<1x10x2048xf32>
    tpu.vector_store %arg5[%c0_7, %c0_8, %c0_9], %10 {strides = array<i32>} : memref<1x10x2048xf32, #tpu.memory_space<vmem>>, vector<1x10x2048xf32>,
    return
  }
  func.func @transform_0(%arg0: i32, %arg1: i32) -> (i32, i32, i32) {
    %c0_i32 = arith.constant 0 : i32
    %c0_i32_0 = arith.constant 0 : i32
    return %arg0, %c0_i32, %arg1 : i32, i32, i32
  }
  func.func @transform_1(%arg0: i32, %arg1: i32) -> (i32, i32) {
    %c0_i32 = arith.constant 0 : i32
    %c0_i32_0 = arith.constant 0 : i32
    %c0_i32_1 = arith.constant 0 : i32
    return %c0_i32, %c0_i32_0 : i32, i32
  }
  func.func @transform_2(%arg0: i32, %arg1: i32) -> (i32, i32) {
    %c0_i32 = arith.constant 0 : i32
    %c0_i32_0 = arith.constant 0 : i32
    %c0_i32_1 = arith.constant 0 : i32
    return %c0_i32, %c0_i32_0 : i32, i32
  }
  func.func @transform_3(%arg0: i32, %arg1: i32) -> (i32, i32, i32) {
    %c0_i32 = arith.constant 0 : i32
    %c0_i32_0 = arith.constant 0 : i32
    return %arg0, %c0_i32, %arg1 : i32, i32, i32
  }
}

</mosaic_0001>

<llo_original>
// kernel: tpu_custom_call.1
$region0: #{tpu_custom_call.1}
  #allocation0 [shape = 'u32[]', space=smem, size = 0x4, offset = 0x4, fixed_abs, tag = 'smem constant byte address 0x4 - core index']
  #allocation1 [shape = 'u32[144,128]{1,0:T(1,128)}', space=vmem, size = 0x12000, scoped, tag = 'internal scratch']
  %s0 = inlined_call_operand.vmem [shape: f32[2,20,4096], index: 0, kind: input, shape index: {}]
  %s1 = inlined_call_operand.vmem [shape: f32[20,10], index: 1, kind: input, shape index: {}]
  %s2 = inlined_call_operand.vmem [shape: f32[20,1], index: 2, kind: input, shape index: {}]
  %s3 = inlined_call_operand.vmem [shape: f32[2,10,4096], index: 3, kind: output, shape index: {}]
  %s4 = sld [smem:[#allocation0]]
  $region87: #{tpu_custom_call.1} parent=0
    _
  %s6 = ssub.s32 1, %s4
  %s7 = scalar_select 0, %s6, %s4
  $region1: #{tpu_custom_call.1} parent=0
    #allocation2 [shape = 'u8[393216]{0}', space=vmem, size = 0x60000, scoped, tag = 'input window, operand 0']
    #allocation3 [shape = 'u8[262144]{0}', space=vmem, size = 0x40000, scoped, tag = 'output window, operand 0']
    loop: start=0, step=1, limit=6
    $region2: #{tpu_custom_call.1} parent=1 // loop_pre_header
      _
    $region3: #{tpu_custom_call.1} parent=1 // loop_header
      %s9 = sphi 0, %s13
      %p10 = scmp.ge.s32.totalorder %s9, 6
      %s16 = sphi 0, %s28
      %s17 = sphi 0, %s24
      %s18 = sphi 0, %s16
      %s19 = sphi 0, %s17
      %s20 = sphi 0, %s18
      %s21 = sphi 0, %s19
      %s33 = sphi 0, %s35
      %s36 = sphi 0, %s33
      %s37 = sphi 0, %s36
      %s53 = sphi 0, %s37
      %s57 = sphi 0, %s57
      %s59 = sphi 0, %s57
      %s60 = sphi 0, %s59
      %s74 = sphi 0, %s60
      %s78 = sphi 0, %s78
      %s80 = sphi 0, %s78
      %s81 = sphi 0, %s80
      %s95 = sphi 0, %s81
      %s103 = sphi 0, %s105
      %s106 = sphi 0, %s103
      %s107 = sphi 0, %s106
      %s123 = sphi 0, %s107
    $region4: #{tpu_custom_call.1} parent=1 // loop_header_branch
      %12 = sbr.rel (%p10) target = $region8
    $region5: #{tpu_custom_call.1} parent=1 // loop_body
      %s14 = ssub.s32 %s9, 1
      %s15 = ssub.s32 %s9, 2
      %s22 = sadd.s32 1, %s17
      %p23 = scmp.ge.s32.totalorder %s22, 2
      %s24 = scalar_select %p23, 0, %s22
      %s25 = sadd.s32 1, %s16
      %s26 = scalar_select %p23, %s25, %s16
      %p27 = scmp.ge.s32.totalorder %s26, 2
      %s28 = scalar_select %p27, 0, %s26
      %s29 = ssub.s32 %s16, %s28
      %s30 = ssub.s32 %s17, %s24
      %s31 = sor.u32 %s29, %s30
      %p32 = scmp.eq.s32.totalorder %s31, 0
      %s34 = sadd.s32 %s33, 1
      %s35 = scalar_select %p32, %s33, %s34
      %p38 = pneg %p32
      %p39 = scmp.eq.s32.totalorder %s9, 3
      %p40 = por %p38, %p39
      %p41 = scmp.ne.s32.totalorder %s33, %s36
      %p42 = scmp.eq.s32.totalorder %s9, 0
      %p43 = por %p41, %p42
      %p44 = scmp.ne.s32.totalorder %s33, %s36
      %p45 = scmp.eq.s32.totalorder %s14, 3
      %p46 = por %p44, %p45
      %p47 = scmp.ne.s32.totalorder %s36, %s37
      %p48 = scmp.eq.s32.totalorder %s14, 0
      %p49 = por %p47, %p48
      %p50 = scmp.ne.s32.totalorder %s36, %s37
      %p51 = scmp.eq.s32.totalorder %s15, 3
      %p52 = por %p50, %p51
      %p54 = scmp.ne.s32.totalorder %s37, %s53
      %p55 = scmp.eq.s32.totalorder %s15, 0
      %p56 = por %p54, %p55
      %s58 = sadd.s32 %s57, 1
      %p61 = scmp.eq.s32.totalorder %s9, 3
      %p62 = scmp.ne.s32.totalorder %s57, %s59
      %p63 = scmp.eq.s32.totalorder %s9, 0
      %p64 = por %p62, %p63
      %p65 = scmp.ne.s32.totalorder %s57, %s59
      %p66 = scmp.eq.s32.totalorder %s14, 3
      %p67 = por %p65, %p66
      %p68 = scmp.ne.s32.totalorder %s59, %s60
      %p69 = scmp.eq.s32.totalorder %s14, 0
      %p70 = por %p68, %p69
      %p71 = scmp.ne.s32.totalorder %s59, %s60
      %p72 = scmp.eq.s32.totalorder %s15, 3
      %p73 = por %p71, %p72
      %p75 = scmp.ne.s32.totalorder %s60, %s74
      %p76 = scmp.eq.s32.totalorder %s15, 0
      %p77 = por %p75, %p76
      %s79 = sadd.s32 %s78, 1
      %p82 = scmp.eq.s32.totalorder %s9, 3
      %p83 = scmp.ne.s32.totalorder %s78, %s80
      %p84 = scmp.eq.s32.totalorder %s9, 0
      %p85 = por %p83, %p84
      %p86 = scmp.ne.s32.totalorder %s78, %s80
      %p87 = scmp.eq.s32.totalorder %s14, 3
      %p88 = por %p86, %p87
      %p89 = scmp.ne.s32.totalorder %s80, %s81
      %p90 = scmp.eq.s32.totalorder %s14, 0
      %p91 = por %p89, %p90
      %p92 = scmp.ne.s32.totalorder %s80, %s81
      %p93 = scmp.eq.s32.totalorder %s15, 3
      %p94 = por %p92, %p93
      %p96 = scmp.ne.s32.totalorder %s81, %s95
      %p97 = scmp.eq.s32.totalorder %s15, 0
      %p98 = por %p96, %p97
      %s99 = ssub.s32 %s16, %s28
      %s100 = ssub.s32 %s17, %s24
      %s101 = sor.u32 %s99, %s100
      %p102 = scmp.eq.s32.totalorder %s101, 0
      %s104 = sadd.s32 %s103, 1
      %s105 = scalar_select %p102, %s103, %s104
      %p108 = pneg %p102
      %p109 = scmp.eq.s32.totalorder %s9, 3
      %p110 = por %p108, %p109
      %p111 = scmp.ne.s32.totalorder %s103, %s106
      %p112 = scmp.eq.s32.totalorder %s9, 0
      %p113 = por %p111, %p112
      %p114 = scmp.ne.s32.totalorder %s103, %s106
      %p115 = scmp.eq.s32.totalorder %s14, 3
      %p116 = por %p114, %p115
      %p117 = scmp.ne.s32.totalorder %s106, %s107
      %p118 = scmp.eq.s32.totalorder %s14, 0
      %p119 = por %p117, %p118
      %p120 = scmp.ne.s32.totalorder %s106, %s107
      %p121 = scmp.eq.s32.totalorder %s15, 3
      %p122 = por %p120, %p121
      %p124 = scmp.ne.s32.totalorder %s107, %s123
      %p125 = scmp.eq.s32.totalorder %s15, 0
      %p126 = por %p124, %p125
      %p127 = scmp.le.s32.totalorder 1, %s9
      %p128 = scmp.lt.s32.totalorder %s9, 5
      %p129 = pnand %p127, %p128
      %p130 = pneg %p129
      // Predicated region
      $region9: #{tpu_custom_call.1} parent=5 // pred_check
        _
      $region10: #{tpu_custom_call.1} parent=5 // pred_check_branch
        %132 = sbr.rel (%p129) target = $region12
      $region11: #{tpu_custom_call.1} parent=5 // pred_region
        %s133 = ssub.s32 %s9, 1
        // Predicated region
        $region13: #{tpu_custom_call.1} parent=11 // pred_check
          %p134 = pneg %p70
        $region14: #{tpu_custom_call.1} parent=11 // pred_check_branch
          %136 = sbr.rel (%p134) target = $region16
        $region15: #{tpu_custom_call.1} parent=11 // pred_region
          _
        $region16: #{tpu_custom_call.1} parent=11 // pred_fallthru
          _
        // Predicated region
        $region17: #{tpu_custom_call.1} parent=11 // pred_check
          %p137 = pneg %p91
        $region18: #{tpu_custom_call.1} parent=11 // pred_check_branch
          %139 = sbr.rel (%p137) target = $region20
        $region19: #{tpu_custom_call.1} parent=11 // pred_region
          _
        $region20: #{tpu_custom_call.1} parent=11 // pred_fallthru
          _
      $region12: #{tpu_custom_call.1} parent=5 // pred_fallthru
        _
      %p140 = scmp.lt.s32.totalorder %s9, 4
      // Predicated region
      $region21: #{tpu_custom_call.1} parent=5 // pred_check
        %p141 = pneg %p140
      $region22: #{tpu_custom_call.1} parent=5 // pred_check_branch
        %143 = sbr.rel (%p141) target = $region24
      $region23: #{tpu_custom_call.1} parent=5 // pred_region
        // Predicated region
        $region25: #{tpu_custom_call.1} parent=23 // pred_check
          %p144 = pneg %p43
        $region26: #{tpu_custom_call.1} parent=23 // pred_check_branch
          %146 = sbr.rel (%p144) target = $region28
        $region27: #{tpu_custom_call.1} parent=23 // pred_region
          %s147 = sand.u32 %s33, 1
          %s148 = sand.u32 %s33, 1
          %s149 = smul.addr %s148, 384
          %s150 = scalar_lea.vmem [#allocation2], %s149
          %s151 = smul.u32 16, %s17
          %s152 = smul.addr %s16, 96
          %s153 = sadd.s32 %s151, %s152
          %s154 = smul.addr %s153, 8
          %s155 = scalar_lea.vmem %s0, %s154
          // Predicated region
          $region29: #{tpu_custom_call.1} parent=27 // pred_check
            _
          $region30: #{tpu_custom_call.1} parent=27 // pred_check_branch
            %157 = sbr.rel (0) target = $region32
          $region31: #{tpu_custom_call.1} parent=27 // pred_region
            // Predicated region
            $region33: #{tpu_custom_call.1} parent=31 // pred_check
              _
            $region34: #{tpu_custom_call.1} parent=31 // pred_check_branch
              %159 = sbr.rel (0) target = $region36
            $region35: #{tpu_custom_call.1} parent=31 // pred_region
              loop: start=0, step=1, limit=1
              $region37: #{tpu_custom_call.1} parent=35 // loop_pre_header
                _
              $region38: #{tpu_custom_call.1} parent=35 // loop_header
                %s161 = sphi 0, %s165
                %p162 = scmp.ge.s32.totalorder %s161, 1
                %s166 = sphi %s155, %s155
                %s167 = sphi %s150, %s150
              $region39: #{tpu_custom_call.1} parent=35 // loop_header_branch
                %164 = sbr.rel (%p162) target = $region43
              $region40: #{tpu_custom_call.1} parent=35 // loop_body
                %v168 = vld [vmem:[%s166] sm:$0xff]
                %169 = vst [vmem:[%s167] sm:$0xff] %v168
                %v170 = vld [vmem:[%s166 + $0x8] sm:$0xff]
                %171 = vst [vmem:[%s167 + $0x8] sm:$0xff] %v170
                %v172 = vld [vmem:[%s166 + $0x10] sm:$0xff]
                %173 = vst [vmem:[%s167 + $0x10] sm:$0xff] %v172
                %v174 = vld [vmem:[%s166 + $0x18] sm:$0xff]
                %175 = vst [vmem:[%s167 + $0x18] sm:$0xff] %v174
                %v176 = vld [vmem:[%s166 + $0x20] sm:$0xff]
                %177 = vst [vmem:[%s167 + $0x20] sm:$0xff] %v176
                %v178 = vld [vmem:[%s166 + $0x28] sm:$0xff]
                %179 = vst [vmem:[%s167 + $0x28] sm:$0xff] %v178
                %v180 = vld [vmem:[%s166 + $0x30] sm:$0xff]
                %181 = vst [vmem:[%s167 + $0x30] sm:$0xff] %v180
                %v182 = vld [vmem:[%s166 + $0x38] sm:$0xff]
                %183 = vst [vmem:[%s167 + $0x38] sm:$0xff] %v182
                %v184 = vld [vmem:[%s166 + $0x40] sm:$0xff]
                %185 = vst [vmem:[%s167 + $0x40] sm:$0xff] %v184
                %v186 = vld [vmem:[%s166 + $0x48] sm:$0xff]
                %187 = vst [vmem:[%s167 + $0x48] sm:$0xff] %v186
                %v188 = vld [vmem:[%s166 + $0x50] sm:$0xff]
                %189 = vst [vmem:[%s167 + $0x50] sm:$0xff] %v188
                %v190 = vld [vmem:[%s166 + $0x58] sm:$0xff]
                %191 = vst [vmem:[%s167 + $0x58] sm:$0xff] %v190
                %v192 = vld [vmem:[%s166 + $0x60] sm:$0xff]
                %193 = vst [vmem:[%s167 + $0x60] sm:$0xff] %v192
                %v194 = vld [vmem:[%s166 + $0x68] sm:$0xff]
                %195 = vst [vmem:[%s167 + $0x68] sm:$0xff] %v194
                %v196 = vld [vmem:[%s166 + $0x70] sm:$0xff]
                %197 = vst [vmem:[%s167 + $0x70] sm:$0xff] %v196
                %v198 = vld [vmem:[%s166 + $0x78] sm:$0xff]
                %199 = vst [vmem:[%s167 + $0x78] sm:$0xff] %v198
                %v200 = vld [vmem:[%s166 + $0x100] sm:$0xff]
                %201 = vst [vmem:[%s167 + $0x80] sm:$0xff] %v200
                %v202 = vld [vmem:[%s166 + $0x108] sm:$0xff]
                %203 = vst [vmem:[%s167 + $0x88] sm:$0xff] %v202
                %v204 = vld [vmem:[%s166 + $0x110] sm:$0xff]
                %205 = vst [vmem:[%s167 + $0x90] sm:$0xff] %v204
                %v206 = vld [vmem:[%s166 + $0x118] sm:$0xff]
                %207 = vst [vmem:[%s167 + $0x98] sm:$0xff] %v206
                %v208 = vld [vmem:[%s166 + $0x120] sm:$0xff]
                %209 = vst [vmem:[%s167 + $0xa0] sm:$0xff] %v208
                %v210 = vld [vmem:[%s166 + $0x128] sm:$0xff]
                %211 = vst [vmem:[%s167 + $0xa8] sm:$0xff] %v210
                %v212 = vld [vmem:[%s166 + $0x130] sm:$0xff]
                %213 = vst [vmem:[%s167 + $0xb0] sm:$0xff] %v212
                %v214 = vld [vmem:[%s166 + $0x138] sm:$0xff]
                %215 = vst [vmem:[%s167 + $0xb8] sm:$0xff] %v214
                %v216 = vld [vmem:[%s166 + $0x140] sm:$0xff]
                %217 = vst [vmem:[%s167 + $0xc0] sm:$0xff] %v216
                %v218 = vld [vmem:[%s166 + $0x148] sm:$0xff]
                %219 = vst [vmem:[%s167 + $0xc8] sm:$0xff] %v218
                %v220 = vld [vmem:[%s166 + $0x150] sm:$0xff]
                %221 = vst [vmem:[%s167 + $0xd0] sm:$0xff] %v220
                %v222 = vld [vmem:[%s166 + $0x158] sm:$0xff]
                %223 = vst [vmem:[%s167 + $0xd8] sm:$0xff] %v222
                %v224 = vld [vmem:[%s166 + $0x160] sm:$0xff]
                %225 = vst [vmem:[%s167 + $0xe0] sm:$0xff] %v224
                %v226 = vld [vmem:[%s166 + $0x168] sm:$0xff]
                %227 = vst [vmem:[%s167 + $0xe8] sm:$0xff] %v226
                %v228 = vld [vmem:[%s166 + $0x170] sm:$0xff]
                %229 = vst [vmem:[%s167 + $0xf0] sm:$0xff] %v228
                %v230 = vld [vmem:[%s166 + $0x178] sm:$0xff]
                %231 = vst [vmem:[%s167 + $0xf8] sm:$0xff] %v230
                %v232 = vld [vmem:[%s166 + $0x200] sm:$0xff]
                %233 = vst [vmem:[%s167 + $0x100] sm:$0xff] %v232
                %v234 = vld [vmem:[%s166 + $0x208] sm:$0xff]
                %235 = vst [vmem:[%s167 + $0x108] sm:$0xff] %v234
                %v236 = vld [vmem:[%s166 + $0x210] sm:$0xff]
                %237 = vst [vmem:[%s167 + $0x110] sm:$0xff] %v236
                %v238 = vld [vmem:[%s166 + $0x218] sm:$0xff]
                %239 = vst [vmem:[%s167 + $0x118] sm:$0xff] %v238
                %v240 = vld [vmem:[%s166 + $0x220] sm:$0xff]
                %241 = vst [vmem:[%s167 + $0x120] sm:$0xff] %v240
                %v242 = vld [vmem:[%s166 + $0x228] sm:$0xff]
                %243 = vst [vmem:[%s167 + $0x128] sm:$0xff] %v242
                %v244 = vld [vmem:[%s166 + $0x230] sm:$0xff]
                %245 = vst [vmem:[%s167 + $0x130] sm:$0xff] %v244
                %v246 = vld [vmem:[%s166 + $0x238] sm:$0xff]
                %247 = vst [vmem:[%s167 + $0x138] sm:$0xff] %v246
                %v248 = vld [vmem:[%s166 + $0x240] sm:$0xff]
                %249 = vst [vmem:[%s167 + $0x140] sm:$0xff] %v248
                %v250 = vld [vmem:[%s166 + $0x248] sm:$0xff]
                %251 = vst [vmem:[%s167 + $0x148] sm:$0xff] %v250
                %v252 = vld [vmem:[%s166 + $0x250] sm:$0xff]
                %253 = vst [vmem:[%s167 + $0x150] sm:$0xff] %v252
                %v254 = vld [vmem:[%s166 + $0x258] sm:$0xff]
                %255 = vst [vmem:[%s167 + $0x158] sm:$0xff] %v254
                %v256 = vld [vmem:[%s166 + $0x260] sm:$0xff]
                %257 = vst [vmem:[%s167 + $0x160] sm:$0xff] %v256
                %v258 = vld [vmem:[%s166 + $0x268] sm:$0xff]
                %259 = vst [vmem:[%s167 + $0x168] sm:$0xff] %v258
                %v260 = vld [vmem:[%s166 + $0x270] sm:$0xff]
                %261 = vst [vmem:[%s167 + $0x170] sm:$0xff] %v260
                %v262 = vld [vmem:[%s166 + $0x278] sm:$0xff]
                %263 = vst [vmem:[%s167 + $0x178] sm:$0xff] %v262
              $region41: #{tpu_custom_call.1} parent=35 // loop_footer
                %s165 = sadd.s32 1, %s161
              $region42: #{tpu_custom_call.1} parent=35 // loop_footer_branch
                %160 = sbr.rel target = $region38
              $region43: #{tpu_custom_call.1} parent=35 // loop_exit
                _
            $region36: #{tpu_custom_call.1} parent=31 // pred_fallthru
              _
            // Predicated region
            $region44: #{tpu_custom_call.1} parent=31 // pred_check
              _
            $region45: #{tpu_custom_call.1} parent=31 // pred_check_branch
              %265 = sbr.rel target = $region47
            $region46: #{tpu_custom_call.1} parent=31 // pred_region
              _
            $region47: #{tpu_custom_call.1} parent=31 // pred_fallthru
              _
          $region32: #{tpu_custom_call.1} parent=27 // pred_fallthru
            _
          %266 = vnop
        $region28: #{tpu_custom_call.1} parent=23 // pred_fallthru
          _
      $region24: #{tpu_custom_call.1} parent=5 // pred_fallthru
        _
      %p267 = scmp.le.s32.totalorder 1, %s9
      %p268 = scmp.lt.s32.totalorder %s9, 5
      %p269 = pnand %p267, %p268
      %p270 = pneg %p269
      // Predicated region
      $region48: #{tpu_custom_call.1} parent=5 // pred_check
        _
      $region49: #{tpu_custom_call.1} parent=5 // pred_check_branch
        %272 = sbr.rel (%p269) target = $region51
      $region50: #{tpu_custom_call.1} parent=5 // pred_region
        %s273 = ssub.s32 %s9, 1
        %s274 = sand.u32 %s36, 1
        %s275 = sand.u32 %s36, 1
        %s276 = smul.addr %s275, 384
        %s277 = scalar_lea.vmem [#allocation2], %s276
        // Predicated region
        $region52: #{tpu_custom_call.1} parent=50 // pred_check
          %p278 = pneg %p49
        $region53: #{tpu_custom_call.1} parent=50 // pred_check_branch
          %280 = sbr.rel (%p278) target = $region55
        $region54: #{tpu_custom_call.1} parent=50 // pred_region
          _
        $region55: #{tpu_custom_call.1} parent=50 // pred_fallthru
          _
        %s281 = sand.u32 %s36, 1
        %s282 = sand.u32 %s36, 1
        %s283 = smul.addr %s282, 384
        %s284 = scalar_lea.vmem [#allocation2], %s283
        %p285 = pneg %p49
        %p286 = pneg %p46
        %p287 = pneg %p70
        %p288 = pneg %p67
        %p289 = pneg %p91
        %p290 = pneg %p88
        %p291 = pneg %p119
        %p292 = pneg %p116
        %s293 = sand.u32 %s106, 1
        %s294 = sand.u32 %s106, 1
        %s295 = smul.addr %s294, 256
        %s296 = scalar_lea.vmem [#allocation3], %s295
        %s297 = smul.u32 16, %s19
        %s298 = smul.u32 16, %s19
        %v299 = vld [vmem:[%s1] sm:$0xff]
        %v300 = vld [vmem:[%s1 + $0x8] sm:$0xff]
        %v301 = vld [vmem:[%s1 + $0x10] sm:$0xf]
        %v302 = vld [vmem:[%s2] sm:$0xff]
        %v303 = vld [vmem:[%s2 + $0x8] sm:$0xff]
        %v304 = vld [vmem:[%s2 + $0x10] sm:$0xf]
        %305 = vxpose.xlu0.b32.start [1/16] %v299, 128
        %306 = vxpose.xlu0.b32.cont [2/16] %v300, 128
        %307 = vxpose.xlu0.b32.cont [3/16] %v301, 128
        %308 = vxpose.xlu0.b32.cont [4/16] 0.0, 128
        %309 = vxpose.xlu0.b32.cont [5/16] 0.0, 128
        %310 = vxpose.xlu0.b32.cont [6/16] 0.0, 128
        %311 = vxpose.xlu0.b32.cont [7/16] 0.0, 128
        %312 = vxpose.xlu0.b32.cont [8/16] 0.0, 128
        %313 = vxpose.xlu0.b32.cont [9/16] 0.0, 128
        %314 = vxpose.xlu0.b32.cont [10/16] 0.0, 128
        %315 = vxpose.xlu0.b32.cont [11/16] 0.0, 128
        %316 = vxpose.xlu0.b32.cont [12/16] 0.0, 128
        %317 = vxpose.xlu0.b32.cont [13/16] 0.0, 128
        %318 = vxpose.xlu0.b32.cont [14/16] 0.0, 128
        %319 = vxpose.xlu0.b32.cont [15/16] 0.0, 128
        %320 = vxpose.xlu0.b32.end [16/16] 0.0, 128
        %v321 = vpop.trf.xlu0
        %v322 = vpop.trf.xlu0
        %v323 = vpop.trf.xlu0
        %v324 = vpop.trf.xlu0
        %v325 = vpop.trf.xlu0
        %v326 = vpop.trf.xlu0
        %v327 = vpop.trf.xlu0
        %v328 = vpop.trf.xlu0
        %v329 = vpop.trf.xlu0
        %v330 = vpop.trf.xlu0
        %v331 = vpop.trf.xlu0
        %v332 = vpop.trf.xlu0
        %v333 = vpop.trf.xlu0
        %v334 = vpop.trf.xlu0
        %v335 = vpop.trf.xlu0
        %v336 = vpop.trf.xlu0
        %vm337 = vcmask 162816
        %v339 = vsel %vm337, %v321, 0
        %v342 = vsel %vm337, %v322, 0
        %vm344 = vcmask 1043456
        %v346 = vsel %vm344, %v304, 0
        %348 = vmatprep.subr.mxu0 0.0
        %349 = vmatpush1.msra.mxu0 0.0
        %350 = vmatprep.subr.mxu0 0.0
        %351 = vmatpush1.msra.mxu0 0.0
        %352 = vmatprep.subr.mxu0 0.0
        %353 = vmatpush1.msra.mxu0 0.0
        %354 = vmatprep.subr.mxu0 0.0
        %355 = vmatpush1.msra.mxu0 0.0
        %356 = vmatprep.subr.mxu0 0.0
        %357 = vmatpush1.msra.mxu0 0.0
        %358 = vmatprep.subr.mxu0 0.0
        %359 = vmatpush1.msra.mxu0 0.0
        %360 = vmatprep.subr.mxu0 0.0
        %361 = vmatpush1.msra.mxu0 0.0
        %362 = vmatprep.subr.mxu0 0.0
        %363 = vmatpush1.msra.mxu0 0.0
        %364 = vmatprep.subr.mxu0 0.0
        %365 = vmatpush1.msra.mxu0 0.0
        %366 = vmatprep.subr.mxu0 0.0
        %367 = vmatpush1.msra.mxu0 0.0
        %368 = vmatprep.subr.mxu0 0.0
        %369 = vmatpush1.msra.mxu0 0.0
        %370 = vmatprep.subr.mxu0 0.0
        %371 = vmatpush1.msra.mxu0 0.0
        %372 = vmatprep.subr.mxu0 0.0
        %373 = vmatpush1.msra.mxu0 0.0
        %374 = vmatprep.subr.mxu0 0.0
        %v375 = vand.u32 %v346, 4294901760
        %376 = vmatpush1.msra.mxu0 %v375
        %377 = vmatprep.subr.mxu0 0.0
        %v378 = vand.u32 %v303, 4294901760
        %379 = vmatpush1.msra.mxu0 %v378
        %380 = vmatprep.subr.mxu0 0.0
        %v381 = vand.u32 %v302, 4294901760
        %382 = vmatpush1.msra.mxu0 %v381
        %383 = vmatprep.subr.mxu0 0.0
        %384 = vmatpush2.msra.mxu0 0.0
        %385 = vmatprep.subr.mxu0 0.0
        %386 = vmatpush2.msra.mxu0 0.0
        %387 = vmatprep.subr.mxu0 0.0
        %388 = vmatpush2.msra.mxu0 0.0
        %389 = vmatprep.subr.mxu0 0.0
        %390 = vmatpush2.msra.mxu0 0.0
        %391 = vmatprep.subr.mxu0 0.0
        %392 = vmatpush2.msra.mxu0 0.0
        %393 = vmatprep.subr.mxu0 0.0
        %394 = vmatpush2.msra.mxu0 0.0
        %395 = vmatprep.subr.mxu0 0.0
        %396 = vmatpush2.msra.mxu0 0.0
        %397 = vmatprep.subr.mxu0 0.0
        %398 = vmatpush2.msra.mxu0 0.0
        %399 = vmatprep.subr.mxu0 0.0
        %400 = vmatpush2.msra.mxu0 0.0
        %401 = vmatprep.subr.mxu0 0.0
        %402 = vmatpush2.msra.mxu0 0.0
        %403 = vmatprep.subr.mxu0 0.0
        %404 = vmatpush2.msra.mxu0 0.0
        %405 = vmatprep.subr.mxu0 0.0
        %406 = vmatpush2.msra.mxu0 0.0
        %407 = vmatprep.subr.mxu0 0.0
        %408 = vmatpush2.msra.mxu0 0.0
        %409 = vmatprep.subr.mxu0 0.0
        %410 = vmatpush2.msra.mxu0 0.0
        %411 = vmatprep.subr.mxu0 0.0
        %412 = vmatpush2.msra.mxu0 0.0
        %413 = vmatprep.subr.mxu0 0.0
        %414 = vmatpush2.msra.mxu0 0.0
        %415 = vmatprep.mubr.f32.mxu0 0.0
        %v416 = vand.u32 %v339, 4294901760
        %v417 = vsub.f32 %v339, %v416
        %v418 = vand.u32 %v417, 4294901760
        %v419 = vsub.f32 %v417, %v418
        %v420 = vand.u32 %v419, 4294901760
        %421 = vmatmul.mubr.f32.gmra.mxu0 %v420
        %v422 = vpop.f32.mrf.mxu0
        %v423 = vadd.f32 0.0, %v422
        %v424 = vpop.f32.mrf.mxu0
        %425 = vmatprep.mubr.f32.mxu0 0.0
        %v426 = vand.u32 %v342, 4294901760
        %v427 = vsub.f32 %v342, %v426
        %v428 = vand.u32 %v427, 4294901760
        %v429 = vsub.f32 %v427, %v428
        %v430 = vand.u32 %v429, 4294901760
        %431 = vmatmul.mubr.f32.gmra.mxu0 %v430
        %v432 = vpop.f32.mrf.mxu0
        %v433 = vadd.f32 0.0, %v432
        %v434 = vpop.f32.mrf.mxu0
        %435 = vdwg.mxu0
        %436 = vmatprep.subr.mxu0 0.0
        %437 = vmatpush1.msra.mxu0 0.0
        %438 = vmatprep.subr.mxu0 0.0
        %439 = vmatpush1.msra.mxu0 0.0
        %440 = vmatprep.subr.mxu0 0.0
        %441 = vmatpush1.msra.mxu0 0.0
        %442 = vmatprep.subr.mxu0 0.0
        %443 = vmatpush1.msra.mxu0 0.0
        %444 = vmatprep.subr.mxu0 0.0
        %445 = vmatpush1.msra.mxu0 0.0
        %446 = vmatprep.subr.mxu0 0.0
        %447 = vmatpush1.msra.mxu0 0.0
        %448 = vmatprep.subr.mxu0 0.0
        %449 = vmatpush1.msra.mxu0 0.0
        %450 = vmatprep.subr.mxu0 0.0
        %451 = vmatpush1.msra.mxu0 0.0
        %452 = vmatprep.subr.mxu0 0.0
        %453 = vmatpush1.msra.mxu0 0.0
        %454 = vmatprep.subr.mxu0 0.0
        %455 = vmatpush1.msra.mxu0 0.0
        %456 = vmatprep.subr.mxu0 0.0
        %457 = vmatpush1.msra.mxu0 0.0
        %458 = vmatprep.subr.mxu0 0.0
        %459 = vmatpush1.msra.mxu0 0.0
        %460 = vmatprep.subr.mxu0 0.0
        %461 = vmatpush1.msra.mxu0 0.0
        %462 = vmatprep.subr.mxu0 0.0
        %v463 = vand.u32 %v346, 4294901760
        %v464 = vsub.f32 %v346, %v463
        %v465 = vand.u32 %v464, 4294901760
        %v466 = vsub.f32 %v464, %v465
        %v467 = vand.u32 %v466, 4294901760
        %468 = vmatpush1.msra.mxu0 %v467
        %469 = vmatprep.subr.mxu0 0.0
        %v470 = vand.u32 %v303, 4294901760
        %v471 = vsub.f32 %v303, %v470
        %v472 = vand.u32 %v471, 4294901760
        %v473 = vsub.f32 %v471, %v472
        %v474 = vand.u32 %v473, 4294901760
        %475 = vmatpush1.msra.mxu0 %v474
        %476 = vmatprep.subr.mxu0 0.0
        %v477 = vand.u32 %v302, 4294901760
        %v478 = vsub.f32 %v302, %v477
        %v479 = vand.u32 %v478, 4294901760
        %v480 = vsub.f32 %v478, %v479
        %v481 = vand.u32 %v480, 4294901760
        %482 = vmatpush1.msra.mxu0 %v481
        %483 = vmatprep.subr.mxu0 0.0
        %484 = vmatpush2.msra.mxu0 0.0
        %485 = vmatprep.subr.mxu0 0.0
        %486 = vmatpush2.msra.mxu0 0.0
        %487 = vmatprep.subr.mxu0 0.0
        %488 = vmatpush2.msra.mxu0 0.0
        %489 = vmatprep.subr.mxu0 0.0
        %490 = vmatpush2.msra.mxu0 0.0
        %491 = vmatprep.subr.mxu0 0.0
        %492 = vmatpush2.msra.mxu0 0.0
        %493 = vmatprep.subr.mxu0 0.0
        %494 = vmatpush2.msra.mxu0 0.0
        %495 = vmatprep.subr.mxu0 0.0
        %496 = vmatpush2.msra.mxu0 0.0
        %497 = vmatprep.subr.mxu0 0.0
        %498 = vmatpush2.msra.mxu0 0.0
        %499 = vmatprep.subr.mxu0 0.0
        %500 = vmatpush2.msra.mxu0 0.0
        %501 = vmatprep.subr.mxu0 0.0
        %502 = vmatpush2.msra.mxu0 0.0
        %503 = vmatprep.subr.mxu0 0.0
        %504 = vmatpush2.msra.mxu0 0.0
        %505 = vmatprep.subr.mxu0 0.0
        %506 = vmatpush2.msra.mxu0 0.0
        %507 = vmatprep.subr.mxu0 0.0
        %508 = vmatpush2.msra.mxu0 0.0
        %509 = vmatprep.subr.mxu0 0.0
        %510 = vmatpush2.msra.mxu0 0.0
        %511 = vmatprep.subr.mxu0 0.0
        %512 = vmatpush2.msra.mxu0 0.0
        %513 = vmatprep.subr.mxu0 0.0
        %514 = vmatpush2.msra.mxu0 0.0
        %515 = vmatprep.mubr.f32.mxu0 0.0
        %v516 = vand.u32 %v339, 4294901760
        %517 = vmatmul.mubr.f32.gmra.mxu0 %v516
        %v518 = vpop.f32.mrf.mxu0
        %v519 = vadd.f32 %v423, %v518
        %v520 = vpop.f32.mrf.mxu0
        %521 = vmatprep.mubr.f32.mxu0 0.0
        %v522 = vand.u32 %v342, 4294901760
        %523 = vmatmul.mubr.f32.gmra.mxu0 %v522
        %v524 = vpop.f32.mrf.mxu0
        %v525 = vadd.f32 %v433, %v524
        %v526 = vpop.f32.mrf.mxu0
        %527 = vdwg.mxu0
        %528 = vmatprep.subr.mxu0 0.0
        %529 = vmatpush1.msra.mxu0 0.0
        %530 = vmatprep.subr.mxu0 0.0
        %531 = vmatpush1.msra.mxu0 0.0
        %532 = vmatprep.subr.mxu0 0.0
        %533 = vmatpush1.msra.mxu0 0.0
        %534 = vmatprep.subr.mxu0 0.0
        %535 = vmatpush1.msra.mxu0 0.0
        %536 = vmatprep.subr.mxu0 0.0
        %537 = vmatpush1.msra.mxu0 0.0
        %538 = vmatprep.subr.mxu0 0.0
        %539 = vmatpush1.msra.mxu0 0.0
        %540 = vmatprep.subr.mxu0 0.0
        %541 = vmatpush1.msra.mxu0 0.0
        %542 = vmatprep.subr.mxu0 0.0
        %543 = vmatpush1.msra.mxu0 0.0
        %544 = vmatprep.subr.mxu0 0.0
        %545 = vmatpush1.msra.mxu0 0.0
        %546 = vmatprep.subr.mxu0 0.0
        %547 = vmatpush1.msra.mxu0 0.0
        %548 = vmatprep.subr.mxu0 0.0
        %549 = vmatpush1.msra.mxu0 0.0
        %550 = vmatprep.subr.mxu0 0.0
        %551 = vmatpush1.msra.mxu0 0.0
        %552 = vmatprep.subr.mxu0 0.0
        %553 = vmatpush1.msra.mxu0 0.0
        %554 = vmatprep.subr.mxu0 0.0
        %v555 = vand.u32 %v346, 4294901760
        %v556 = vsub.f32 %v346, %v555
        %557 = vmatpush1.msra.mxu0 %v556
        %558 = vmatprep.subr.mxu0 0.0
        %v559 = vand.u32 %v303, 4294901760
        %v560 = vsub.f32 %v303, %v559
        %561 = vmatpush1.msra.mxu0 %v560
        %562 = vmatprep.subr.mxu0 0.0
        %v563 = vand.u32 %v302, 4294901760
        %v564 = vsub.f32 %v302, %v563
        %565 = vmatpush1.msra.mxu0 %v564
        %566 = vmatprep.subr.mxu0 0.0
        %567 = vmatpush2.msra.mxu0 0.0
        %568 = vmatprep.subr.mxu0 0.0
        %569 = vmatpush2.msra.mxu0 0.0
        %570 = vmatprep.subr.mxu0 0.0
        %571 = vmatpush2.msra.mxu0 0.0
        %572 = vmatprep.subr.mxu0 0.0
        %573 = vmatpush2.msra.mxu0 0.0
        %574 = vmatprep.subr.mxu0 0.0
        %575 = vmatpush2.msra.mxu0 0.0
        %576 = vmatprep.subr.mxu0 0.0
        %577 = vmatpush2.msra.mxu0 0.0
        %578 = vmatprep.subr.mxu0 0.0
        %579 = vmatpush2.msra.mxu0 0.0
        %580 = vmatprep.subr.mxu0 0.0
        %581 = vmatpush2.msra.mxu0 0.0
        %582 = vmatprep.subr.mxu0 0.0
        %583 = vmatpush2.msra.mxu0 0.0
        %584 = vmatprep.subr.mxu0 0.0
        %585 = vmatpush2.msra.mxu0 0.0
        %586 = vmatprep.subr.mxu0 0.0
        %587 = vmatpush2.msra.mxu0 0.0
        %588 = vmatprep.subr.mxu0 0.0
        %589 = vmatpush2.msra.mxu0 0.0
        %590 = vmatprep.subr.mxu0 0.0
        %591 = vmatpush2.msra.mxu0 0.0
        %592 = vmatprep.subr.mxu0 0.0
        %593 = vmatpush2.msra.mxu0 0.0
        %594 = vmatprep.subr.mxu0 0.0
        %595 = vmatpush2.msra.mxu0 0.0
        %596 = vmatprep.subr.mxu0 0.0
        %597 = vmatpush2.msra.mxu0 0.0
        %598 = vmatprep.mubr.f32.mxu0 0.0
        %v599 = vand.u32 %v339, 4294901760
        %v600 = vsub.f32 %v339, %v599
        %601 = vmatmul.mubr.f32.gmra.mxu0 %v600
        %v602 = vpop.f32.mrf.mxu0
        %v603 = vadd.f32 %v519, %v602
        %v604 = vpop.f32.mrf.mxu0
        %605 = vmatprep.mubr.f32.mxu0 0.0
        %v606 = vand.u32 %v342, 4294901760
        %v607 = vsub.f32 %v342, %v606
        %608 = vmatmul.mubr.f32.gmra.mxu0 %v607
        %v609 = vpop.f32.mrf.mxu0
        %v610 = vadd.f32 %v525, %v609
        %v611 = vpop.f32.mrf.mxu0
        %612 = vdwg.mxu0
        %613 = vmatprep.subr.mxu0 0.0
        %614 = vmatpush1.msra.mxu0 0.0
        %615 = vmatprep.subr.mxu0 0.0
        %616 = vmatpush1.msra.mxu0 0.0
        %617 = vmatprep.subr.mxu0 0.0
        %618 = vmatpush1.msra.mxu0 0.0
        %619 = vmatprep.subr.mxu0 0.0
        %620 = vmatpush1.msra.mxu0 0.0
        %621 = vmatprep.subr.mxu0 0.0
        %622 = vmatpush1.msra.mxu0 0.0
        %623 = vmatprep.subr.mxu0 0.0
        %624 = vmatpush1.msra.mxu0 0.0
        %625 = vmatprep.subr.mxu0 0.0
        %626 = vmatpush1.msra.mxu0 0.0
        %627 = vmatprep.subr.mxu0 0.0
        %628 = vmatpush1.msra.mxu0 0.0
        %629 = vmatprep.subr.mxu0 0.0
        %630 = vmatpush1.msra.mxu0 0.0
        %631 = vmatprep.subr.mxu0 0.0
        %632 = vmatpush1.msra.mxu0 0.0
        %633 = vmatprep.subr.mxu0 0.0
        %634 = vmatpush1.msra.mxu0 0.0
        %635 = vmatprep.subr.mxu0 0.0
        %636 = vmatpush1.msra.mxu0 0.0
        %637 = vmatprep.subr.mxu0 0.0
        %638 = vmatpush1.msra.mxu0 0.0
        %639 = vmatprep.subr.mxu0 0.0
        %v640 = vand.u32 %v346, 4294901760
        %641 = vmatpush1.msra.mxu0 %v640
        %642 = vmatprep.subr.mxu0 0.0
        %v643 = vand.u32 %v303, 4294901760
        %644 = vmatpush1.msra.mxu0 %v643
        %645 = vmatprep.subr.mxu0 0.0
        %v646 = vand.u32 %v302, 4294901760
        %647 = vmatpush1.msra.mxu0 %v646
        %648 = vmatprep.subr.mxu0 0.0
        %649 = vmatpush2.msra.mxu0 0.0
        %650 = vmatprep.subr.mxu0 0.0
        %651 = vmatpush2.msra.mxu0 0.0
        %652 = vmatprep.subr.mxu0 0.0
        %653 = vmatpush2.msra.mxu0 0.0
        %654 = vmatprep.subr.mxu0 0.0
        %655 = vmatpush2.msra.mxu0 0.0
        %656 = vmatprep.subr.mxu0 0.0
        %657 = vmatpush2.msra.mxu0 0.0
        %658 = vmatprep.subr.mxu0 0.0
        %659 = vmatpush2.msra.mxu0 0.0
        %660 = vmatprep.subr.mxu0 0.0
        %661 = vmatpush2.msra.mxu0 0.0
        %662 = vmatprep.subr.mxu0 0.0
        %663 = vmatpush2.msra.mxu0 0.0
        %664 = vmatprep.subr.mxu0 0.0
        %665 = vmatpush2.msra.mxu0 0.0
        %666 = vmatprep.subr.mxu0 0.0
        %667 = vmatpush2.msra.mxu0 0.0
        %668 = vmatprep.subr.mxu0 0.0
        %669 = vmatpush2.msra.mxu0 0.0
        %670 = vmatprep.subr.mxu0 0.0
        %671 = vmatpush2.msra.mxu0 0.0
        %672 = vmatprep.subr.mxu0 0.0
        %673 = vmatpush2.msra.mxu0 0.0
        %674 = vmatprep.subr.mxu0 0.0
        %675 = vmatpush2.msra.mxu0 0.0
        %676 = vmatprep.subr.mxu0 0.0
        %677 = vmatpush2.msra.mxu0 0.0
        %678 = vmatprep.subr.mxu0 0.0
        %679 = vmatpush2.msra.mxu0 0.0
        %680 = vmatprep.mubr.f32.mxu0 0.0
        %v681 = vand.u32 %v339, 4294901760
        %v682 = vsub.f32 %v339, %v681
        %v683 = vand.u32 %v682, 4294901760
        %684 = vmatmul.mubr.f32.gmra.mxu0 %v683
        %v685 = vpop.f32.mrf.mxu0
        %v686 = vadd.f32 %v603, %v685
        %v687 = vpop.f32.mrf.mxu0
        %688 = vmatprep.mubr.f32.mxu0 0.0
        %v689 = vand.u32 %v342, 4294901760
        %v690 = vsub.f32 %v342, %v689
        %v691 = vand.u32 %v690, 4294901760
        %692 = vmatmul.mubr.f32.gmra.mxu0 %v691
        %v693 = vpop.f32.mrf.mxu0
        %v694 = vadd.f32 %v610, %v693
        %v695 = vpop.f32.mrf.mxu0
        %696 = vdwg.mxu0
        %697 = vmatprep.subr.mxu0 0.0
        %698 = vmatpush1.msra.mxu0 0.0
        %699 = vmatprep.subr.mxu0 0.0
        %700 = vmatpush1.msra.mxu0 0.0
        %701 = vmatprep.subr.mxu0 0.0
        %702 = vmatpush1.msra.mxu0 0.0
        %703 = vmatprep.subr.mxu0 0.0
        %704 = vmatpush1.msra.mxu0 0.0
        %705 = vmatprep.subr.mxu0 0.0
        %706 = vmatpush1.msra.mxu0 0.0
        %707 = vmatprep.subr.mxu0 0.0
        %708 = vmatpush1.msra.mxu0 0.0
        %709 = vmatprep.subr.mxu0 0.0
        %710 = vmatpush1.msra.mxu0 0.0
        %711 = vmatprep.subr.mxu0 0.0
        %712 = vmatpush1.msra.mxu0 0.0
        %713 = vmatprep.subr.mxu0 0.0
        %714 = vmatpush1.msra.mxu0 0.0
        %715 = vmatprep.subr.mxu0 0.0
        %716 = vmatpush1.msra.mxu0 0.0
        %717 = vmatprep.subr.mxu0 0.0
        %718 = vmatpush1.msra.mxu0 0.0
        %719 = vmatprep.subr.mxu0 0.0
        %720 = vmatpush1.msra.mxu0 0.0
        %721 = vmatprep.subr.mxu0 0.0
        %722 = vmatpush1.msra.mxu0 0.0
        %723 = vmatprep.subr.mxu0 0.0
        %v724 = vand.u32 %v346, 4294901760
        %v725 = vsub.f32 %v346, %v724
        %v726 = vand.u32 %v725, 4294901760
        %727 = vmatpush1.msra.mxu0 %v726
        %728 = vmatprep.subr.mxu0 0.0
        %v729 = vand.u32 %v303, 4294901760
        %v730 = vsub.f32 %v303, %v729
        %v731 = vand.u32 %v730, 4294901760
        %732 = vmatpush1.msra.mxu0 %v731
        %733 = vmatprep.subr.mxu0 0.0
        %v734 = vand.u32 %v302, 4294901760
        %v735 = vsub.f32 %v302, %v734
        %v736 = vand.u32 %v735, 4294901760
        %737 = vmatpush1.msra.mxu0 %v736
        %738 = vmatprep.subr.mxu0 0.0
        %739 = vmatpush2.msra.mxu0 0.0
        %740 = vmatprep.subr.mxu0 0.0
        %741 = vmatpush2.msra.mxu0 0.0
        %742 = vmatprep.subr.mxu0 0.0
        %743 = vmatpush2.msra.mxu0 0.0
        %744 = vmatprep.subr.mxu0 0.0
        %745 = vmatpush2.msra.mxu0 0.0
        %746 = vmatprep.subr.mxu0 0.0
        %747 = vmatpush2.msra.mxu0 0.0
        %748 = vmatprep.subr.mxu0 0.0
        %749 = vmatpush2.msra.mxu0 0.0
        %750 = vmatprep.subr.mxu0 0.0
        %751 = vmatpush2.msra.mxu0 0.0
        %752 = vmatprep.subr.mxu0 0.0
        %753 = vmatpush2.msra.mxu0 0.0
        %754 = vmatprep.subr.mxu0 0.0
        %755 = vmatpush2.msra.mxu0 0.0
        %756 = vmatprep.subr.mxu0 0.0
        %757 = vmatpush2.msra.mxu0 0.0
        %758 = vmatprep.subr.mxu0 0.0
        %759 = vmatpush2.msra.mxu0 0.0
        %760 = vmatprep.subr.mxu0 0.0
        %761 = vmatpush2.msra.mxu0 0.0
        %762 = vmatprep.subr.mxu0 0.0
        %763 = vmatpush2.msra.mxu0 0.0
        %764 = vmatprep.subr.mxu0 0.0
        %765 = vmatpush2.msra.mxu0 0.0
        %766 = vmatprep.subr.mxu0 0.0
        %767 = vmatpush2.msra.mxu0 0.0
        %768 = vmatprep.subr.mxu0 0.0
        %769 = vmatpush2.msra.mxu0 0.0
        %770 = vmatprep.mubr.f32.mxu0 0.0
        %v771 = vand.u32 %v339, 4294901760
        %772 = vmatmul.mubr.f32.gmra.mxu0 %v771
        %v773 = vpop.f32.mrf.mxu0
        %v774 = vadd.f32 %v686, %v773
        %v775 = vpop.f32.mrf.mxu0
        %776 = vmatprep.mubr.f32.mxu0 0.0
        %v777 = vand.u32 %v342, 4294901760
        %778 = vmatmul.mubr.f32.gmra.mxu0 %v777
        %v779 = vpop.f32.mrf.mxu0
        %v780 = vadd.f32 %v694, %v779
        %v781 = vpop.f32.mrf.mxu0
        %782 = vdwg.mxu0
        %783 = vmatprep.subr.mxu0 0.0
        %784 = vmatpush1.msra.mxu0 0.0
        %785 = vmatprep.subr.mxu0 0.0
        %786 = vmatpush1.msra.mxu0 0.0
        %787 = vmatprep.subr.mxu0 0.0
        %788 = vmatpush1.msra.mxu0 0.0
        %789 = vmatprep.subr.mxu0 0.0
        %790 = vmatpush1.msra.mxu0 0.0
        %791 = vmatprep.subr.mxu0 0.0
        %792 = vmatpush1.msra.mxu0 0.0
        %793 = vmatprep.subr.mxu0 0.0
        %794 = vmatpush1.msra.mxu0 0.0
        %795 = vmatprep.subr.mxu0 0.0
        %796 = vmatpush1.msra.mxu0 0.0
        %797 = vmatprep.subr.mxu0 0.0
        %798 = vmatpush1.msra.mxu0 0.0
        %799 = vmatprep.subr.mxu0 0.0
        %800 = vmatpush1.msra.mxu0 0.0
        %801 = vmatprep.subr.mxu0 0.0
        %802 = vmatpush1.msra.mxu0 0.0
        %803 = vmatprep.subr.mxu0 0.0
        %804 = vmatpush1.msra.mxu0 0.0
        %805 = vmatprep.subr.mxu0 0.0
        %806 = vmatpush1.msra.mxu0 0.0
        %807 = vmatprep.subr.mxu0 0.0
        %808 = vmatpush1.msra.mxu0 0.0
        %809 = vmatprep.subr.mxu0 0.0
        %v810 = vand.u32 %v346, 4294901760
        %811 = vmatpush1.msra.mxu0 %v810
        %812 = vmatprep.subr.mxu0 0.0
        %v813 = vand.u32 %v303, 4294901760
        %814 = vmatpush1.msra.mxu0 %v813
        %815 = vmatprep.subr.mxu0 0.0
        %v816 = vand.u32 %v302, 4294901760
        %817 = vmatpush1.msra.mxu0 %v816
        %818 = vmatprep.subr.mxu0 0.0
        %819 = vmatpush2.msra.mxu0 0.0
        %820 = vmatprep.subr.mxu0 0.0
        %821 = vmatpush2.msra.mxu0 0.0
        %822 = vmatprep.subr.mxu0 0.0
        %823 = vmatpush2.msra.mxu0 0.0
        %824 = vmatprep.subr.mxu0 0.0
        %825 = vmatpush2.msra.mxu0 0.0
        %826 = vmatprep.subr.mxu0 0.0
        %827 = vmatpush2.msra.mxu0 0.0
        %828 = vmatprep.subr.mxu0 0.0
        %829 = vmatpush2.msra.mxu0 0.0
        %830 = vmatprep.subr.mxu0 0.0
        %831 = vmatpush2.msra.mxu0 0.0
        %832 = vmatprep.subr.mxu0 0.0
        %833 = vmatpush2.msra.mxu0 0.0
        %834 = vmatprep.subr.mxu0 0.0
        %835 = vmatpush2.msra.mxu0 0.0
        %836 = vmatprep.subr.mxu0 0.0
        %837 = vmatpush2.msra.mxu0 0.0
        %838 = vmatprep.subr.mxu0 0.0
        %839 = vmatpush2.msra.mxu0 0.0
        %840 = vmatprep.subr.mxu0 0.0
        %841 = vmatpush2.msra.mxu0 0.0
        %842 = vmatprep.subr.mxu0 0.0
        %843 = vmatpush2.msra.mxu0 0.0
        %844 = vmatprep.subr.mxu0 0.0
        %845 = vmatpush2.msra.mxu0 0.0
        %846 = vmatprep.subr.mxu0 0.0
        %847 = vmatpush2.msra.mxu0 0.0
        %848 = vmatprep.subr.mxu0 0.0
        %849 = vmatpush2.msra.mxu0 0.0
        %850 = vmatprep.mubr.f32.mxu0 0.0
        %v851 = vand.u32 %v339, 4294901760
        %852 = vmatmul.mubr.f32.gmra.mxu0 %v851
        %v853 = vpop.f32.mrf.mxu0
        %v854 = vadd.f32 %v774, %v853
        %v855 = vpop.f32.mrf.mxu0
        %856 = vmatprep.mubr.f32.mxu0 0.0
        %v857 = vand.u32 %v342, 4294901760
        %858 = vmatmul.mubr.f32.gmra.mxu0 %v857
        %v859 = vpop.f32.mrf.mxu0
        %v860 = vadd.f32 %v780, %v859
        %v861 = vpop.f32.mrf.mxu0
        %862 = vdwg.mxu0
        %v863 = vld [vmem:[%s277] sm:$0xff]
        %v864 = vld [vmem:[%s277 + $0x8] sm:$0xff]
        %v865 = vld [vmem:[%s277 + $0x10] sm:$0xff]
        %v866 = vld [vmem:[%s277 + $0x18] sm:$0xff]
        %v867 = vld [vmem:[%s277 + $0x20] sm:$0xff]
        %v868 = vld [vmem:[%s277 + $0x28] sm:$0xff]
        %v869 = vld [vmem:[%s277 + $0x30] sm:$0xff]
        %v870 = vld [vmem:[%s277 + $0x38] sm:$0xff]
        %v871 = vld [vmem:[%s277 + $0x40] sm:$0xff]
        %v872 = vld [vmem:[%s277 + $0x48] sm:$0xff]
        %v873 = vld [vmem:[%s277 + $0x50] sm:$0xff]
        %v874 = vld [vmem:[%s277 + $0x58] sm:$0xff]
        %v875 = vld [vmem:[%s277 + $0x60] sm:$0xff]
        %v876 = vld [vmem:[%s277 + $0x68] sm:$0xff]
        %v877 = vld [vmem:[%s277 + $0x70] sm:$0xff]
        %v878 = vld [vmem:[%s277 + $0x78] sm:$0xff]
        %v879 = vld [vmem:[%s277 + $0x80] sm:$0xff]
        %v880 = vld [vmem:[%s277 + $0x88] sm:$0xff]
        %v881 = vld [vmem:[%s277 + $0x90] sm:$0xff]
        %v882 = vld [vmem:[%s277 + $0x98] sm:$0xff]
        %v883 = vld [vmem:[%s277 + $0xa0] sm:$0xff]
        %v884 = vld [vmem:[%s277 + $0xa8] sm:$0xff]
        %v885 = vld [vmem:[%s277 + $0xb0] sm:$0xff]
        %v886 = vld [vmem:[%s277 + $0xb8] sm:$0xff]
        %v887 = vld [vmem:[%s277 + $0xc0] sm:$0xff]
        %v888 = vld [vmem:[%s277 + $0xc8] sm:$0xff]
        %v889 = vld [vmem:[%s277 + $0xd0] sm:$0xff]
        %v890 = vld [vmem:[%s277 + $0xd8] sm:$0xff]
        %v891 = vld [vmem:[%s277 + $0xe0] sm:$0xff]
        %v892 = vld [vmem:[%s277 + $0xe8] sm:$0xff]
        %v893 = vld [vmem:[%s277 + $0xf0] sm:$0xff]
        %v894 = vld [vmem:[%s277 + $0xf8] sm:$0xff]
        %v895 = vld [vmem:[%s277 + $0x100] sm:$0xf]
        %v896 = vld [vmem:[%s277 + $0x108] sm:$0xf]
        %v897 = vld [vmem:[%s277 + $0x110] sm:$0xf]
        %v898 = vld [vmem:[%s277 + $0x118] sm:$0xf]
        %v899 = vld [vmem:[%s277 + $0x120] sm:$0xf]
        %v900 = vld [vmem:[%s277 + $0x128] sm:$0xf]
        %v901 = vld [vmem:[%s277 + $0x130] sm:$0xf]
        %v902 = vld [vmem:[%s277 + $0x138] sm:$0xf]
        %v903 = vld [vmem:[%s277 + $0x140] sm:$0xf]
        %v904 = vld [vmem:[%s277 + $0x148] sm:$0xf]
        %v905 = vld [vmem:[%s277 + $0x150] sm:$0xf]
        %v906 = vld [vmem:[%s277 + $0x158] sm:$0xf]
        %v907 = vld [vmem:[%s277 + $0x160] sm:$0xf]
        %v908 = vld [vmem:[%s277 + $0x168] sm:$0xf]
        %v909 = vld [vmem:[%s277 + $0x170] sm:$0xf]
        %v910 = vld [vmem:[%s277 + $0x178] sm:$0xf]
        %912 = vset.pattern.permute.xlu0 0
        %913 = vperm.xlu0 %912, %v854
        %v914 = vpop.permute.xlu0 %913
        %917 = vset.pattern.permute.xlu0 0
        %918 = vperm.xlu0 %917, %v860
        %v919 = vpop.permute.xlu0 %918
        %v922 = vsel %vm344, %v895, 0
        %v925 = vsel %vm344, %v896, 0
        %v928 = vsel %vm344, %v897, 0
        %v931 = vsel %vm344, %v898, 0
        %v934 = vsel %vm344, %v899, 0
        %v937 = vsel %vm344, %v900, 0
        %v940 = vsel %vm344, %v901, 0
        %v943 = vsel %vm344, %v902, 0
        %v946 = vsel %vm344, %v903, 0
        %v949 = vsel %vm344, %v904, 0
        %v952 = vsel %vm344, %v905, 0
        %v955 = vsel %vm344, %v906, 0
        %v958 = vsel %vm344, %v907, 0
        %v961 = vsel %vm344, %v908, 0
        %v964 = vsel %vm344, %v909, 0
        %v967 = vsel %vm344, %v910, 0
        %969 = vmatprep.subr.mxu0 0.0
        %970 = vmatpush1.msra.mxu0 0.0
        %971 = vmatprep.subr.mxu0 0.0
        %972 = vmatpush1.msra.mxu0 0.0
        %973 = vmatprep.subr.mxu0 0.0
        %974 = vmatpush1.msra.mxu0 0.0
        %975 = vmatprep.subr.mxu0 0.0
        %976 = vmatpush1.msra.mxu0 0.0
        %977 = vmatprep.subr.mxu0 0.0
        %978 = vmatpush1.msra.mxu0 0.0
        %979 = vmatprep.subr.mxu0 0.0
        %980 = vmatpush1.msra.mxu0 0.0
        %981 = vmatprep.subr.mxu0 0.0
        %982 = vmatpush1.msra.mxu0 0.0
        %983 = vmatprep.subr.mxu0 0.0
        %984 = vmatpush1.msra.mxu0 0.0
        %985 = vmatprep.subr.mxu0 0.0
        %986 = vmatpush1.msra.mxu0 0.0
        %987 = vmatprep.subr.mxu0 0.0
        %988 = vmatpush1.msra.mxu0 0.0
        %989 = vmatprep.subr.mxu0 0.0
        %990 = vmatpush1.msra.mxu0 0.0
        %991 = vmatprep.subr.mxu0 0.0
        %992 = vmatpush1.msra.mxu0 0.0
        %993 = vmatprep.subr.mxu0 0.0
        %994 = vmatpush1.msra.mxu0 0.0
        %v995 = vand.u32 %v925, 4294901760
        %996 = vmatprep.subr.mxu0 %v995
        %v997 = vand.u32 %v922, 4294901760
        %998 = vmatpush1.msra.mxu0 %v997
        %v999 = vand.u32 %v880, 4294901760
        %1000 = vmatprep.subr.mxu0 %v999
        %v1001 = vand.u32 %v879, 4294901760
        %1002 = vmatpush1.msra.mxu0 %v1001
        %v1003 = vand.u32 %v864, 4294901760
        %1004 = vmatprep.subr.mxu0 %v1003
        %v1005 = vand.u32 %v863, 4294901760
        %1006 = vmatpush1.msra.mxu0 %v1005
        %1007 = vmatprep.subr.mxu0 0.0
        %1008 = vmatpush2.msra.mxu0 0.0
        %1009 = vmatprep.subr.mxu0 0.0
        %1010 = vmatpush2.msra.mxu0 0.0
        %1011 = vmatprep.subr.mxu0 0.0
        %1012 = vmatpush2.msra.mxu0 0.0
        %1013 = vmatprep.subr.mxu0 0.0
        %1014 = vmatpush2.msra.mxu0 0.0
        %1015 = vmatprep.subr.mxu0 0.0
        %1016 = vmatpush2.msra.mxu0 0.0
        %1017 = vmatprep.subr.mxu0 0.0
        %1018 = vmatpush2.msra.mxu0 0.0
        %1019 = vmatprep.subr.mxu0 0.0
        %1020 = vmatpush2.msra.mxu0 0.0
        %1021 = vmatprep.subr.mxu0 0.0
        %1022 = vmatpush2.msra.mxu0 0.0
        %1023 = vmatprep.subr.mxu0 0.0
        %1024 = vmatpush2.msra.mxu0 0.0
        %1025 = vmatprep.subr.mxu0 0.0
        %1026 = vmatpush2.msra.mxu0 0.0
        %1027 = vmatprep.subr.mxu0 0.0
        %1028 = vmatpush2.msra.mxu0 0.0
        %1029 = vmatprep.subr.mxu0 0.0
        %1030 = vmatpush2.msra.mxu0 0.0
        %1031 = vmatprep.subr.mxu0 0.0
        %1032 = vmatpush2.msra.mxu0 0.0
        %1033 = vmatprep.subr.mxu0 0.0
        %1034 = vmatpush2.msra.mxu0 0.0
        %1035 = vmatprep.subr.mxu0 0.0
        %1036 = vmatpush2.msra.mxu0 0.0
        %1037 = vmatprep.subr.mxu0 0.0
        %1038 = vmatpush2.msra.mxu0 0.0
        %1039 = vmatprep.mubr.f32.mxu0 0.0
        %v1040 = vand.u32 %v339, 4294901760
        %v1041 = vsub.f32 %v339, %v1040
        %v1042 = vand.u32 %v1041, 4294901760
        %v1043 = vsub.f32 %v1041, %v1042
        %v1044 = vand.u32 %v1043, 4294901760
        %1045 = vmatmul.mubr.f32.gmra.mxu0 %v1044
        %v1046 = vpop.f32.mrf.mxu0
        %v1047 = vadd.f32 %v914, %v1046
        %v1048 = vpop.f32.mrf.mxu0
        %v1049 = vadd.f32 %v914, %v1048
        %1050 = vmatprep.mubr.f32.mxu0 0.0
        %v1051 = vand.u32 %v342, 4294901760
        %v1052 = vsub.f32 %v342, %v1051
        %v1053 = vand.u32 %v1052, 4294901760
        %v1054 = vsub.f32 %v1052, %v1053
        %v1055 = vand.u32 %v1054, 4294901760
        %1056 = vmatmul.mubr.f32.gmra.mxu0 %v1055
        %v1057 = vpop.f32.mrf.mxu0
        %v1058 = vadd.f32 %v919, %v1057
        %v1059 = vpop.f32.mrf.mxu0
        %v1060 = vadd.f32 %v919, %v1059
        %1061 = vdwg.mxu0
        %1062 = vmatprep.subr.mxu0 0.0
        %1063 = vmatpush1.msra.mxu0 0.0
        %1064 = vmatprep.subr.mxu0 0.0
        %1065 = vmatpush1.msra.mxu0 0.0
        %1066 = vmatprep.subr.mxu0 0.0
        %1067 = vmatpush1.msra.mxu0 0.0
        %1068 = vmatprep.subr.mxu0 0.0
        %1069 = vmatpush1.msra.mxu0 0.0
        %1070 = vmatprep.subr.mxu0 0.0
        %1071 = vmatpush1.msra.mxu0 0.0
        %1072 = vmatprep.subr.mxu0 0.0
        %1073 = vmatpush1.msra.mxu0 0.0
        %1074 = vmatprep.subr.mxu0 0.0
        %1075 = vmatpush1.msra.mxu0 0.0
        %1076 = vmatprep.subr.mxu0 0.0
        %1077 = vmatpush1.msra.mxu0 0.0
        %1078 = vmatprep.subr.mxu0 0.0
        %1079 = vmatpush1.msra.mxu0 0.0
        %1080 = vmatprep.subr.mxu0 0.0
        %1081 = vmatpush1.msra.mxu0 0.0
        %1082 = vmatprep.subr.mxu0 0.0
        %1083 = vmatpush1.msra.mxu0 0.0
        %1084 = vmatprep.subr.mxu0 0.0
        %1085 = vmatpush1.msra.mxu0 0.0
        %1086 = vmatprep.subr.mxu0 0.0
        %1087 = vmatpush1.msra.mxu0 0.0
        %v1088 = vand.u32 %v925, 4294901760
        %v1089 = vsub.f32 %v925, %v1088
        %v1090 = vand.u32 %v1089, 4294901760
        %v1091 = vsub.f32 %v1089, %v1090
        %v1092 = vand.u32 %v1091, 4294901760
        %1093 = vmatprep.subr.mxu0 %v1092
        %v1094 = vand.u32 %v922, 4294901760
        %v1095 = vsub.f32 %v922, %v1094
        %v1096 = vand.u32 %v1095, 4294901760
        %v1097 = vsub.f32 %v1095, %v1096
        %v1098 = vand.u32 %v1097, 4294901760
        %1099 = vmatpush1.msra.mxu0 %v1098
        %v1100 = vand.u32 %v880, 4294901760
        %v1101 = vsub.f32 %v880, %v1100
        %v1102 = vand.u32 %v1101, 4294901760
        %v1103 = vsub.f32 %v1101, %v1102
        %v1104 = vand.u32 %v1103, 4294901760
        %1105 = vmatprep.subr.mxu0 %v1104
        %v1106 = vand.u32 %v879, 4294901760
        %v1107 = vsub.f32 %v879, %v1106
        %v1108 = vand.u32 %v1107, 4294901760
        %v1109 = vsub.f32 %v1107, %v1108
        %v1110 = vand.u32 %v1109, 4294901760
        %1111 = vmatpush1.msra.mxu0 %v1110
        %v1112 = vand.u32 %v864, 4294901760
        %v1113 = vsub.f32 %v864, %v1112
        %v1114 = vand.u32 %v1113, 4294901760
        %v1115 = vsub.f32 %v1113, %v1114
        %v1116 = vand.u32 %v1115, 4294901760
        %1117 = vmatprep.subr.mxu0 %v1116
        %v1118 = vand.u32 %v863, 4294901760
        %v1119 = vsub.f32 %v863, %v1118
        %v1120 = vand.u32 %v1119, 4294901760
        %v1121 = vsub.f32 %v1119, %v1120
        %v1122 = vand.u32 %v1121, 4294901760
        %1123 = vmatpush1.msra.mxu0 %v1122
        %1124 = vmatprep.subr.mxu0 0.0
        %1125 = vmatpush2.msra.mxu0 0.0
        %1126 = vmatprep.subr.mxu0 0.0
        %1127 = vmatpush2.msra.mxu0 0.0
        %1128 = vmatprep.subr.mxu0 0.0
        %1129 = vmatpush2.msra.mxu0 0.0
        %1130 = vmatprep.subr.mxu0 0.0
        %1131 = vmatpush2.msra.mxu0 0.0
        %1132 = vmatprep.subr.mxu0 0.0
        %1133 = vmatpush2.msra.mxu0 0.0
        %1134 = vmatprep.subr.mxu0 0.0
        %1135 = vmatpush2.msra.mxu0 0.0
        %1136 = vmatprep.subr.mxu0 0.0
        %1137 = vmatpush2.msra.mxu0 0.0
        %1138 = vmatprep.subr.mxu0 0.0
        %1139 = vmatpush2.msra.mxu0 0.0
        %1140 = vmatprep.subr.mxu0 0.0
        %1141 = vmatpush2.msra.mxu0 0.0
        %1142 = vmatprep.subr.mxu0 0.0
        %1143 = vmatpush2.msra.mxu0 0.0
        %1144 = vmatprep.subr.mxu0 0.0
        %1145 = vmatpush2.msra.mxu0 0.0
        %1146 = vmatprep.subr.mxu0 0.0
        %1147 = vmatpush2.msra.mxu0 0.0
        %1148 = vmatprep.subr.mxu0 0.0
        %1149 = vmatpush2.msra.mxu0 0.0
        %1150 = vmatprep.subr.mxu0 0.0
        %1151 = vmatpush2.msra.mxu0 0.0
        %1152 = vmatprep.subr.mxu0 0.0
        %1153 = vmatpush2.msra.mxu0 0.0
        %1154 = vmatprep.subr.mxu0 0.0
        %1155 = vmatpush2.msra.mxu0 0.0
        %1156 = vmatprep.mubr.f32.mxu0 0.0
        %v1157 = vand.u32 %v339, 4294901760
        %1158 = vmatmul.mubr.f32.gmra.mxu0 %v1157
        %v1159 = vpop.f32.mrf.mxu0
        %v1160 = vadd.f32 %v1047, %v1159
        %v1161 = vpop.f32.mrf.mxu0
        %v1162 = vadd.f32 %v1049, %v1161
        %1163 = vmatprep.mubr.f32.mxu0 0.0
        %v1164 = vand.u32 %v342, 4294901760
        %1165 = vmatmul.mubr.f32.gmra.mxu0 %v1164
        %v1166 = vpop.f32.mrf.mxu0
        %v1167 = vadd.f32 %v1058, %v1166
        %v1168 = vpop.f32.mrf.mxu0
        %v1169 = vadd.f32 %v1060, %v1168
        %1170 = vdwg.mxu0
        %1171 = vmatprep.subr.mxu0 0.0
        %1172 = vmatpush1.msra.mxu0 0.0
        %1173 = vmatprep.subr.mxu0 0.0
        %1174 = vmatpush1.msra.mxu0 0.0
        %1175 = vmatprep.subr.mxu0 0.0
        %1176 = vmatpush1.msra.mxu0 0.0
        %1177 = vmatprep.subr.mxu0 0.0
        %1178 = vmatpush1.msra.mxu0 0.0
        %1179 = vmatprep.subr.mxu0 0.0
        %1180 = vmatpush1.msra.mxu0 0.0
        %1181 = vmatprep.subr.mxu0 0.0
        %1182 = vmatpush1.msra.mxu0 0.0
        %1183 = vmatprep.subr.mxu0 0.0
        %1184 = vmatpush1.msra.mxu0 0.0
        %1185 = vmatprep.subr.mxu0 0.0
        %1186 = vmatpush1.msra.mxu0 0.0
        %1187 = vmatprep.subr.mxu0 0.0
        %1188 = vmatpush1.msra.mxu0 0.0
        %1189 = vmatprep.subr.mxu0 0.0
        %1190 = vmatpush1.msra.mxu0 0.0
        %1191 = vmatprep.subr.mxu0 0.0
        %1192 = vmatpush1.msra.mxu0 0.0
        %1193 = vmatprep.subr.mxu0 0.0
        %1194 = vmatpush1.msra.mxu0 0.0
        %1195 = vmatprep.subr.mxu0 0.0
        %1196 = vmatpush1.msra.mxu0 0.0
        %v1197 = vand.u32 %v925, 4294901760
        %v1198 = vsub.f32 %v925, %v1197
        %1199 = vmatprep.subr.mxu0 %v1198
        %v1200 = vand.u32 %v922, 4294901760
        %v1201 = vsub.f32 %v922, %v1200
        %1202 = vmatpush1.msra.mxu0 %v1201
        %v1203 = vand.u32 %v880, 4294901760
        %v1204 = vsub.f32 %v880, %v1203
        %1205 = vmatprep.subr.mxu0 %v1204
        %v1206 = vand.u32 %v879, 4294901760
        %v1207 = vsub.f32 %v879, %v1206
        %1208 = vmatpush1.msra.mxu0 %v1207
        %v1209 = vand.u32 %v864, 4294901760
        %v1210 = vsub.f32 %v864, %v1209
        %1211 = vmatprep.subr.mxu0 %v1210
        %v1212 = vand.u32 %v863, 4294901760
        %v1213 = vsub.f32 %v863, %v1212
        %1214 = vmatpush1.msra.mxu0 %v1213
        %1215 = vmatprep.subr.mxu0 0.0
        %1216 = vmatpush2.msra.mxu0 0.0
        %1217 = vmatprep.subr.mxu0 0.0
        %1218 = vmatpush2.msra.mxu0 0.0
        %1219 = vmatprep.subr.mxu0 0.0
        %1220 = vmatpush2.msra.mxu0 0.0
        %1221 = vmatprep.subr.mxu0 0.0
        %1222 = vmatpush2.msra.mxu0 0.0
        %1223 = vmatprep.subr.mxu0 0.0
        %1224 = vmatpush2.msra.mxu0 0.0
        %1225 = vmatprep.subr.mxu0 0.0
        %1226 = vmatpush2.msra.mxu0 0.0
        %1227 = vmatprep.subr.mxu0 0.0
        %1228 = vmatpush2.msra.mxu0 0.0
        %1229 = vmatprep.subr.mxu0 0.0
        %1230 = vmatpush2.msra.mxu0 0.0
        %1231 = vmatprep.subr.mxu0 0.0
        %1232 = vmatpush2.msra.mxu0 0.0
        %1233 = vmatprep.subr.mxu0 0.0
        %1234 = vmatpush2.msra.mxu0 0.0
        %1235 = vmatprep.subr.mxu0 0.0
        %1236 = vmatpush2.msra.mxu0 0.0
        %1237 = vmatprep.subr.mxu0 0.0
        %1238 = vmatpush2.msra.mxu0 0.0
        %1239 = vmatprep.subr.mxu0 0.0
        %1240 = vmatpush2.msra.mxu0 0.0
        %1241 = vmatprep.subr.mxu0 0.0
        %1242 = vmatpush2.msra.mxu0 0.0
        %1243 = vmatprep.subr.mxu0 0.0
        %1244 = vmatpush2.msra.mxu0 0.0
        %1245 = vmatprep.subr.mxu0 0.0
        %1246 = vmatpush2.msra.mxu0 0.0
        %1247 = vmatprep.mubr.f32.mxu0 0.0
        %v1248 = vand.u32 %v339, 4294901760
        %v1249 = vsub.f32 %v339, %v1248
        %1250 = vmatmul.mubr.f32.gmra.mxu0 %v1249
        %v1251 = vpop.f32.mrf.mxu0
        %v1252 = vadd.f32 %v1160, %v1251
        %v1253 = vpop.f32.mrf.mxu0
        %v1254 = vadd.f32 %v1162, %v1253
        %1255 = vmatprep.mubr.f32.mxu0 0.0
        %v1256 = vand.u32 %v342, 4294901760
        %v1257 = vsub.f32 %v342, %v1256
        %1258 = vmatmul.mubr.f32.gmra.mxu0 %v1257
        %v1259 = vpop.f32.mrf.mxu0
        %v1260 = vadd.f32 %v1167, %v1259
        %v1261 = vpop.f32.mrf.mxu0
        %v1262 = vadd.f32 %v1169, %v1261
        %1263 = vdwg.mxu0
        %1264 = vmatprep.subr.mxu0 0.0
        %1265 = vmatpush1.msra.mxu0 0.0
        %1266 = vmatprep.subr.mxu0 0.0
        %1267 = vmatpush1.msra.mxu0 0.0
        %1268 = vmatprep.subr.mxu0 0.0
        %1269 = vmatpush1.msra.mxu0 0.0
        %1270 = vmatprep.subr.mxu0 0.0
        %1271 = vmatpush1.msra.mxu0 0.0
        %1272 = vmatprep.subr.mxu0 0.0
        %1273 = vmatpush1.msra.mxu0 0.0
        %1274 = vmatprep.subr.mxu0 0.0
        %1275 = vmatpush1.msra.mxu0 0.0
        %1276 = vmatprep.subr.mxu0 0.0
        %1277 = vmatpush1.msra.mxu0 0.0
        %1278 = vmatprep.subr.mxu0 0.0
        %1279 = vmatpush1.msra.mxu0 0.0
        %1280 = vmatprep.subr.mxu0 0.0
        %1281 = vmatpush1.msra.mxu0 0.0
        %1282 = vmatprep.subr.mxu0 0.0
        %1283 = vmatpush1.msra.mxu0 0.0
        %1284 = vmatprep.subr.mxu0 0.0
        %1285 = vmatpush1.msra.mxu0 0.0
        %1286 = vmatprep.subr.mxu0 0.0
        %1287 = vmatpush1.msra.mxu0 0.0
        %1288 = vmatprep.subr.mxu0 0.0
        %1289 = vmatpush1.msra.mxu0 0.0
        %v1290 = vand.u32 %v925, 4294901760
        %1291 = vmatprep.subr.mxu0 %v1290
        %v1292 = vand.u32 %v922, 4294901760
        %1293 = vmatpush1.msra.mxu0 %v1292
        %v1294 = vand.u32 %v880, 4294901760
        %1295 = vmatprep.subr.mxu0 %v1294
        %v1296 = vand.u32 %v879, 4294901760
        %1297 = vmatpush1.msra.mxu0 %v1296
        %v1298 = vand.u32 %v864, 4294901760
        %1299 = vmatprep.subr.mxu0 %v1298
        %v1300 = vand.u32 %v863, 4294901760
        %1301 = vmatpush1.msra.mxu0 %v1300
        %1302 = vmatprep.subr.mxu0 0.0
        %1303 = vmatpush2.msra.mxu0 0.0
        %1304 = vmatprep.subr.mxu0 0.0
        %1305 = vmatpush2.msra.mxu0 0.0
        %1306 = vmatprep.subr.mxu0 0.0
        %1307 = vmatpush2.msra.mxu0 0.0
        %1308 = vmatprep.subr.mxu0 0.0
        %1309 = vmatpush2.msra.mxu0 0.0
        %1310 = vmatprep.subr.mxu0 0.0
        %1311 = vmatpush2.msra.mxu0 0.0
        %1312 = vmatprep.subr.mxu0 0.0
        %1313 = vmatpush2.msra.mxu0 0.0
        %1314 = vmatprep.subr.mxu0 0.0
        %1315 = vmatpush2.msra.mxu0 0.0
        %1316 = vmatprep.subr.mxu0 0.0
        %1317 = vmatpush2.msra.mxu0 0.0
        %1318 = vmatprep.subr.mxu0 0.0
        %1319 = vmatpush2.msra.mxu0 0.0
        %1320 = vmatprep.subr.mxu0 0.0
        %1321 = vmatpush2.msra.mxu0 0.0
        %1322 = vmatprep.subr.mxu0 0.0
        %1323 = vmatpush2.msra.mxu0 0.0
        %1324 = vmatprep.subr.mxu0 0.0
        %1325 = vmatpush2.msra.mxu0 0.0
        %1326 = vmatprep.subr.mxu0 0.0
        %1327 = vmatpush2.msra.mxu0 0.0
        %1328 = vmatprep.subr.mxu0 0.0
        %1329 = vmatpush2.msra.mxu0 0.0
        %1330 = vmatprep.subr.mxu0 0.0
        %1331 = vmatpush2.msra.mxu0 0.0
        %1332 = vmatprep.subr.mxu0 0.0
        %1333 = vmatpush2.msra.mxu0 0.0
        %1334 = vmatprep.mubr.f32.mxu0 0.0
        %v1335 = vand.u32 %v339, 4294901760
        %v1336 = vsub.f32 %v339, %v1335
        %v1337 = vand.u32 %v1336, 4294901760
        %1338 = vmatmul.mubr.f32.gmra.mxu0 %v1337
        %v1339 = vpop.f32.mrf.mxu0
        %v1340 = vadd.f32 %v1252, %v1339
        %v1341 = vpop.f32.mrf.mxu0
        %v1342 = vadd.f32 %v1254, %v1341
        %1343 = vmatprep.mubr.f32.mxu0 0.0
        %v1344 = vand.u32 %v342, 4294901760
        %v1345 = vsub.f32 %v342, %v1344
        %v1346 = vand.u32 %v1345, 4294901760
        %1347 = vmatmul.mubr.f32.gmra.mxu0 %v1346
        %v1348 = vpop.f32.mrf.mxu0
        %v1349 = vadd.f32 %v1260, %v1348
        %v1350 = vpop.f32.mrf.mxu0
        %v1351 = vadd.f32 %v1262, %v1350
        %1352 = vdwg.mxu0
        %1353 = vmatprep.subr.mxu0 0.0
        %1354 = vmatpush1.msra.mxu0 0.0
        %1355 = vmatprep.subr.mxu0 0.0
        %1356 = vmatpush1.msra.mxu0 0.0
        %1357 = vmatprep.subr.mxu0 0.0
        %1358 = vmatpush1.msra.mxu0 0.0
        %1359 = vmatprep.subr.mxu0 0.0
        %1360 = vmatpush1.msra.mxu0 0.0
        %1361 = vmatprep.subr.mxu0 0.0
        %1362 = vmatpush1.msra.mxu0 0.0
        %1363 = vmatprep.subr.mxu0 0.0
        %1364 = vmatpush1.msra.mxu0 0.0
        %1365 = vmatprep.subr.mxu0 0.0
        %1366 = vmatpush1.msra.mxu0 0.0
        %1367 = vmatprep.subr.mxu0 0.0
        %1368 = vmatpush1.msra.mxu0 0.0
        %1369 = vmatprep.subr.mxu0 0.0
        %1370 = vmatpush1.msra.mxu0 0.0
        %1371 = vmatprep.subr.mxu0 0.0
        %1372 = vmatpush1.msra.mxu0 0.0
        %1373 = vmatprep.subr.mxu0 0.0
        %1374 = vmatpush1.msra.mxu0 0.0
        %1375 = vmatprep.subr.mxu0 0.0
        %1376 = vmatpush1.msra.mxu0 0.0
        %1377 = vmatprep.subr.mxu0 0.0
        %1378 = vmatpush1.msra.mxu0 0.0
        %v1379 = vand.u32 %v925, 4294901760
        %v1380 = vsub.f32 %v925, %v1379
        %v1381 = vand.u32 %v1380, 4294901760
        %1382 = vmatprep.subr.mxu0 %v1381
        %v1383 = vand.u32 %v922, 4294901760
        %v1384 = vsub.f32 %v922, %v1383
        %v1385 = vand.u32 %v1384, 4294901760
        %1386 = vmatpush1.msra.mxu0 %v1385
        %v1387 = vand.u32 %v880, 4294901760
        %v1388 = vsub.f32 %v880, %v1387
        %v1389 = vand.u32 %v1388, 4294901760
        %1390 = vmatprep.subr.mxu0 %v1389
        %v1391 = vand.u32 %v879, 4294901760
        %v1392 = vsub.f32 %v879, %v1391
        %v1393 = vand.u32 %v1392, 4294901760
        %1394 = vmatpush1.msra.mxu0 %v1393
        %v1395 = vand.u32 %v864, 4294901760
        %v1396 = vsub.f32 %v864, %v1395
        %v1397 = vand.u32 %v1396, 4294901760
        %1398 = vmatprep.subr.mxu0 %v1397
        %v1399 = vand.u32 %v863, 4294901760
        %v1400 = vsub.f32 %v863, %v1399
        %v1401 = vand.u32 %v1400, 4294901760
        %1402 = vmatpush1.msra.mxu0 %v1401
        %1403 = vmatprep.subr.mxu0 0.0
        %1404 = vmatpush2.msra.mxu0 0.0
        %1405 = vmatprep.subr.mxu0 0.0
        %1406 = vmatpush2.msra.mxu0 0.0
        %1407 = vmatprep.subr.mxu0 0.0
        %1408 = vmatpush2.msra.mxu0 0.0
        %1409 = vmatprep.subr.mxu0 0.0
        %1410 = vmatpush2.msra.mxu0 0.0
        %1411 = vmatprep.subr.mxu0 0.0
        %1412 = vmatpush2.msra.mxu0 0.0
        %1413 = vmatprep.subr.mxu0 0.0
        %1414 = vmatpush2.msra.mxu0 0.0
        %1415 = vmatprep.subr.mxu0 0.0
        %1416 = vmatpush2.msra.mxu0 0.0
        %1417 = vmatprep.subr.mxu0 0.0
        %1418 = vmatpush2.msra.mxu0 0.0
        %1419 = vmatprep.subr.mxu0 0.0
        %1420 = vmatpush2.msra.mxu0 0.0
        %1421 = vmatprep.subr.mxu0 0.0
        %1422 = vmatpush2.msra.mxu0 0.0
        %1423 = vmatprep.subr.mxu0 0.0
        %1424 = vmatpush2.msra.mxu0 0.0
        %1425 = vmatprep.subr.mxu0 0.0
        %1426 = vmatpush2.msra.mxu0 0.0
        %1427 = vmatprep.subr.mxu0 0.0
        %1428 = vmatpush2.msra.mxu0 0.0
        %1429 = vmatprep.subr.mxu0 0.0
        %1430 = vmatpush2.msra.mxu0 0.0
        %1431 = vmatprep.subr.mxu0 0.0
        %1432 = vmatpush2.msra.mxu0 0.0
        %1433 = vmatprep.subr.mxu0 0.0
        %1434 = vmatpush2.msra.mxu0 0.0
        %1435 = vmatprep.mubr.f32.mxu0 0.0
        %v1436 = vand.u32 %v339, 4294901760
        %1437 = vmatmul.mubr.f32.gmra.mxu0 %v1436
        %v1438 = vpop.f32.mrf.mxu0
        %v1439 = vadd.f32 %v1340, %v1438
        %v1440 = vpop.f32.mrf.mxu0
        %v1441 = vadd.f32 %v1342, %v1440
        %1442 = vmatprep.mubr.f32.mxu0 0.0
        %v1443 = vand.u32 %v342, 4294901760
        %1444 = vmatmul.mubr.f32.gmra.mxu0 %v1443
        %v1445 = vpop.f32.mrf.mxu0
        %v1446 = vadd.f32 %v1349, %v1445
        %v1447 = vpop.f32.mrf.mxu0
        %v1448 = vadd.f32 %v1351, %v1447
        %1449 = vdwg.mxu0
        %1450 = vmatprep.subr.mxu0 0.0
        %1451 = vmatpush1.msra.mxu0 0.0
        %1452 = vmatprep.subr.mxu0 0.0
        %1453 = vmatpush1.msra.mxu0 0.0
        %1454 = vmatprep.subr.mxu0 0.0
        %1455 = vmatpush1.msra.mxu0 0.0
        %1456 = vmatprep.subr.mxu0 0.0
        %1457 = vmatpush1.msra.mxu0 0.0
        %1458 = vmatprep.subr.mxu0 0.0
        %1459 = vmatpush1.msra.mxu0 0.0
        %1460 = vmatprep.subr.mxu0 0.0
        %1461 = vmatpush1.msra.mxu0 0.0
        %1462 = vmatprep.subr.mxu0 0.0
        %1463 = vmatpush1.msra.mxu0 0.0
        %1464 = vmatprep.subr.mxu0 0.0
        %1465 = vmatpush1.msra.mxu0 0.0
        %1466 = vmatprep.subr.mxu0 0.0
        %1467 = vmatpush1.msra.mxu0 0.0
        %1468 = vmatprep.subr.mxu0 0.0
        %1469 = vmatpush1.msra.mxu0 0.0
        %1470 = vmatprep.subr.mxu0 0.0
        %1471 = vmatpush1.msra.mxu0 0.0
        %1472 = vmatprep.subr.mxu0 0.0
        %1473 = vmatpush1.msra.mxu0 0.0
        %1474 = vmatprep.subr.mxu0 0.0
        %1475 = vmatpush1.msra.mxu0 0.0
        %v1476 = vand.u32 %v925, 4294901760
        %1477 = vmatprep.subr.mxu0 %v1476
        %v1478 = vand.u32 %v922, 4294901760
        %1479 = vmatpush1.msra.mxu0 %v1478
        %v1480 = vand.u32 %v880, 4294901760
        %1481 = vmatprep.subr.mxu0 %v1480
        %v1482 = vand.u32 %v879, 4294901760
        %1483 = vmatpush1.msra.mxu0 %v1482
        %v1484 = vand.u32 %v864, 4294901760
        %1485 = vmatprep.subr.mxu0 %v1484
        %v1486 = vand.u32 %v863, 4294901760
        %1487 = vmatpush1.msra.mxu0 %v1486
        %1488 = vmatprep.subr.mxu0 0.0
        %1489 = vmatpush2.msra.mxu0 0.0
        %1490 = vmatprep.subr.mxu0 0.0
        %1491 = vmatpush2.msra.mxu0 0.0
        %1492 = vmatprep.subr.mxu0 0.0
        %1493 = vmatpush2.msra.mxu0 0.0
        %1494 = vmatprep.subr.mxu0 0.0
        %1495 = vmatpush2.msra.mxu0 0.0
        %1496 = vmatprep.subr.mxu0 0.0
        %1497 = vmatpush2.msra.mxu0 0.0
        %1498 = vmatprep.subr.mxu0 0.0
        %1499 = vmatpush2.msra.mxu0 0.0
        %1500 = vmatprep.subr.mxu0 0.0
        %1501 = vmatpush2.msra.mxu0 0.0
        %1502 = vmatprep.subr.mxu0 0.0
        %1503 = vmatpush2.msra.mxu0 0.0
        %1504 = vmatprep.subr.mxu0 0.0
        %1505 = vmatpush2.msra.mxu0 0.0
        %1506 = vmatprep.subr.mxu0 0.0
        %1507 = vmatpush2.msra.mxu0 0.0
        %1508 = vmatprep.subr.mxu0 0.0
        %1509 = vmatpush2.msra.mxu0 0.0
        %1510 = vmatprep.subr.mxu0 0.0
        %1511 = vmatpush2.msra.mxu0 0.0
        %1512 = vmatprep.subr.mxu0 0.0
        %1513 = vmatpush2.msra.mxu0 0.0
        %1514 = vmatprep.subr.mxu0 0.0
        %1515 = vmatpush2.msra.mxu0 0.0
        %1516 = vmatprep.subr.mxu0 0.0
        %1517 = vmatpush2.msra.mxu0 0.0
        %1518 = vmatprep.subr.mxu0 0.0
        %1519 = vmatpush2.msra.mxu0 0.0
        %1520 = vmatprep.mubr.f32.mxu0 0.0
        %v1521 = vand.u32 %v339, 4294901760
        %1522 = vmatmul.mubr.f32.gmra.mxu0 %v1521
        %v1523 = vpop.f32.mrf.mxu0
        %v1524 = vadd.f32 %v1439, %v1523
        %v1525 = vpop.f32.mrf.mxu0
        %v1526 = vadd.f32 %v1441, %v1525
        %1527 = vmatprep.mubr.f32.mxu0 0.0
        %v1528 = vand.u32 %v342, 4294901760
        %1529 = vmatmul.mubr.f32.gmra.mxu0 %v1528
        %v1530 = vpop.f32.mrf.mxu0
        %v1531 = vadd.f32 %v1446, %v1530
        %v1532 = vpop.f32.mrf.mxu0
        %v1533 = vadd.f32 %v1448, %v1532
        %1534 = vdwg.mxu0
        %1535 = vmatprep.subr.mxu0 0.0
        %1536 = vmatpush1.msra.mxu0 0.0
        %1537 = vmatprep.subr.mxu0 0.0
        %1538 = vmatpush1.msra.mxu0 0.0
        %1539 = vmatprep.subr.mxu0 0.0
        %1540 = vmatpush1.msra.mxu0 0.0
        %1541 = vmatprep.subr.mxu0 0.0
        %1542 = vmatpush1.msra.mxu0 0.0
        %1543 = vmatprep.subr.mxu0 0.0
        %1544 = vmatpush1.msra.mxu0 0.0
        %1545 = vmatprep.subr.mxu0 0.0
        %1546 = vmatpush1.msra.mxu0 0.0
        %1547 = vmatprep.subr.mxu0 0.0
        %1548 = vmatpush1.msra.mxu0 0.0
        %1549 = vmatprep.subr.mxu0 0.0
        %1550 = vmatpush1.msra.mxu0 0.0
        %1551 = vmatprep.subr.mxu0 0.0
        %1552 = vmatpush1.msra.mxu0 0.0
        %1553 = vmatprep.subr.mxu0 0.0
        %1554 = vmatpush1.msra.mxu0 0.0
        %1555 = vmatprep.subr.mxu0 0.0
        %1556 = vmatpush1.msra.mxu0 0.0
        %1557 = vmatprep.subr.mxu0 0.0
        %1558 = vmatpush1.msra.mxu0 0.0
        %1559 = vmatprep.subr.mxu0 0.0
        %1560 = vmatpush1.msra.mxu0 0.0
        %v1561 = vand.u32 %v931, 4294901760
        %1562 = vmatprep.subr.mxu0 %v1561
        %v1563 = vand.u32 %v928, 4294901760
        %1564 = vmatpush1.msra.mxu0 %v1563
        %v1565 = vand.u32 %v882, 4294901760
        %1566 = vmatprep.subr.mxu0 %v1565
        %v1567 = vand.u32 %v881, 4294901760
        %1568 = vmatpush1.msra.mxu0 %v1567
        %v1569 = vand.u32 %v866, 4294901760
        %1570 = vmatprep.subr.mxu0 %v1569
        %v1571 = vand.u32 %v865, 4294901760
        %1572 = vmatpush1.msra.mxu0 %v1571
        %1573 = vmatprep.subr.mxu0 0.0
        %1574 = vmatpush2.msra.mxu0 0.0
        %1575 = vmatprep.subr.mxu0 0.0
        %1576 = vmatpush2.msra.mxu0 0.0
        %1577 = vmatprep.subr.mxu0 0.0
        %1578 = vmatpush2.msra.mxu0 0.0
        %1579 = vmatprep.subr.mxu0 0.0
        %1580 = vmatpush2.msra.mxu0 0.0
        %1581 = vmatprep.subr.mxu0 0.0
        %1582 = vmatpush2.msra.mxu0 0.0
        %1583 = vmatprep.subr.mxu0 0.0
        %1584 = vmatpush2.msra.mxu0 0.0
        %1585 = vmatprep.subr.mxu0 0.0
        %1586 = vmatpush2.msra.mxu0 0.0
        %1587 = vmatprep.subr.mxu0 0.0
        %1588 = vmatpush2.msra.mxu0 0.0
        %1589 = vmatprep.subr.mxu0 0.0
        %1590 = vmatpush2.msra.mxu0 0.0
        %1591 = vmatprep.subr.mxu0 0.0
        %1592 = vmatpush2.msra.mxu0 0.0
        %1593 = vmatprep.subr.mxu0 0.0
        %1594 = vmatpush2.msra.mxu0 0.0
        %1595 = vmatprep.subr.mxu0 0.0
        %1596 = vmatpush2.msra.mxu0 0.0
        %1597 = vmatprep.subr.mxu0 0.0
        %1598 = vmatpush2.msra.mxu0 0.0
        %1599 = vmatprep.subr.mxu0 0.0
        %1600 = vmatpush2.msra.mxu0 0.0
        %1601 = vmatprep.subr.mxu0 0.0
        %1602 = vmatpush2.msra.mxu0 0.0
        %1603 = vmatprep.subr.mxu0 0.0
        %1604 = vmatpush2.msra.mxu0 0.0
        %1605 = vmatprep.mubr.f32.mxu0 0.0
        %v1606 = vand.u32 %v339, 4294901760
        %v1607 = vsub.f32 %v339, %v1606
        %v1608 = vand.u32 %v1607, 4294901760
        %v1609 = vsub.f32 %v1607, %v1608
        %v1610 = vand.u32 %v1609, 4294901760
        %1611 = vmatmul.mubr.f32.gmra.mxu0 %v1610
        %v1612 = vpop.f32.mrf.mxu0
        %v1613 = vadd.f32 %v914, %v1612
        %v1614 = vpop.f32.mrf.mxu0
        %v1615 = vadd.f32 %v914, %v1614
        %1616 = vmatprep.mubr.f32.mxu0 0.0
        %v1617 = vand.u32 %v342, 4294901760
        %v1618 = vsub.f32 %v342, %v1617
        %v1619 = vand.u32 %v1618, 4294901760
        %v1620 = vsub.f32 %v1618, %v1619
        %v1621 = vand.u32 %v1620, 4294901760
        %1622 = vmatmul.mubr.f32.gmra.mxu0 %v1621
        %v1623 = vpop.f32.mrf.mxu0
        %v1624 = vadd.f32 %v919, %v1623
        %v1625 = vpop.f32.mrf.mxu0
        %v1626 = vadd.f32 %v919, %v1625
        %1627 = vdwg.mxu0
        %1628 = vmatprep.subr.mxu0 0.0
        %1629 = vmatpush1.msra.mxu0 0.0
        %1630 = vmatprep.subr.mxu0 0.0
        %1631 = vmatpush1.msra.mxu0 0.0
        %1632 = vmatprep.subr.mxu0 0.0
        %1633 = vmatpush1.msra.mxu0 0.0
        %1634 = vmatprep.subr.mxu0 0.0
        %1635 = vmatpush1.msra.mxu0 0.0
        %1636 = vmatprep.subr.mxu0 0.0
        %1637 = vmatpush1.msra.mxu0 0.0
        %1638 = vmatprep.subr.mxu0 0.0
        %1639 = vmatpush1.msra.mxu0 0.0
        %1640 = vmatprep.subr.mxu0 0.0
        %1641 = vmatpush1.msra.mxu0 0.0
        %1642 = vmatprep.subr.mxu0 0.0
        %1643 = vmatpush1.msra.mxu0 0.0
        %1644 = vmatprep.subr.mxu0 0.0
        %1645 = vmatpush1.msra.mxu0 0.0
        %1646 = vmatprep.subr.mxu0 0.0
        %1647 = vmatpush1.msra.mxu0 0.0
        %1648 = vmatprep.subr.mxu0 0.0
        %1649 = vmatpush1.msra.mxu0 0.0
        %1650 = vmatprep.subr.mxu0 0.0
        %1651 = vmatpush1.msra.mxu0 0.0
        %1652 = vmatprep.subr.mxu0 0.0
        %1653 = vmatpush1.msra.mxu0 0.0
        %v1654 = vand.u32 %v931, 4294901760
        %v1655 = vsub.f32 %v931, %v1654
        %v1656 = vand.u32 %v1655, 4294901760
        %v1657 = vsub.f32 %v1655, %v1656
        %v1658 = vand.u32 %v1657, 4294901760
        %1659 = vmatprep.subr.mxu0 %v1658
        %v1660 = vand.u32 %v928, 4294901760
        %v1661 = vsub.f32 %v928, %v1660
        %v1662 = vand.u32 %v1661, 4294901760
        %v1663 = vsub.f32 %v1661, %v1662
        %v1664 = vand.u32 %v1663, 4294901760
        %1665 = vmatpush1.msra.mxu0 %v1664
        %v1666 = vand.u32 %v882, 4294901760
        %v1667 = vsub.f32 %v882, %v1666
        %v1668 = vand.u32 %v1667, 4294901760
        %v1669 = vsub.f32 %v1667, %v1668
        %v1670 = vand.u32 %v1669, 4294901760
        %1671 = vmatprep.subr.mxu0 %v1670
        %v1672 = vand.u32 %v881, 4294901760
        %v1673 = vsub.f32 %v881, %v1672
        %v1674 = vand.u32 %v1673, 4294901760
        %v1675 = vsub.f32 %v1673, %v1674
        %v1676 = vand.u32 %v1675, 4294901760
        %1677 = vmatpush1.msra.mxu0 %v1676
        %v1678 = vand.u32 %v866, 4294901760
        %v1679 = vsub.f32 %v866, %v1678
        %v1680 = vand.u32 %v1679, 4294901760
        %v1681 = vsub.f32 %v1679, %v1680
        %v1682 = vand.u32 %v1681, 4294901760
        %1683 = vmatprep.subr.mxu0 %v1682
        %v1684 = vand.u32 %v865, 4294901760
        %v1685 = vsub.f32 %v865, %v1684
        %v1686 = vand.u32 %v1685, 4294901760
        %v1687 = vsub.f32 %v1685, %v1686
        %v1688 = vand.u32 %v1687, 4294901760
        %1689 = vmatpush1.msra.mxu0 %v1688
        %1690 = vmatprep.subr.mxu0 0.0
        %1691 = vmatpush2.msra.mxu0 0.0
        %1692 = vmatprep.subr.mxu0 0.0
        %1693 = vmatpush2.msra.mxu0 0.0
        %1694 = vmatprep.subr.mxu0 0.0
        %1695 = vmatpush2.msra.mxu0 0.0
        %1696 = vmatprep.subr.mxu0 0.0
        %1697 = vmatpush2.msra.mxu0 0.0
        %1698 = vmatprep.subr.mxu0 0.0
        %1699 = vmatpush2.msra.mxu0 0.0
        %1700 = vmatprep.subr.mxu0 0.0
        %1701 = vmatpush2.msra.mxu0 0.0
        %1702 = vmatprep.subr.mxu0 0.0
        %1703 = vmatpush2.msra.mxu0 0.0
        %1704 = vmatprep.subr.mxu0 0.0
        %1705 = vmatpush2.msra.mxu0 0.0
        %1706 = vmatprep.subr.mxu0 0.0
        %1707 = vmatpush2.msra.mxu0 0.0
        %1708 = vmatprep.subr.mxu0 0.0
        %1709 = vmatpush2.msra.mxu0 0.0
        %1710 = vmatprep.subr.mxu0 0.0
        %1711 = vmatpush2.msra.mxu0 0.0
        %1712 = vmatprep.subr.mxu0 0.0
        %1713 = vmatpush2.msra.mxu0 0.0
        %1714 = vmatprep.subr.mxu0 0.0
        %1715 = vmatpush2.msra.mxu0 0.0
        %1716 = vmatprep.subr.mxu0 0.0
        %1717 = vmatpush2.msra.mxu0 0.0
        %1718 = vmatprep.subr.mxu0 0.0
        %1719 = vmatpush2.msra.mxu0 0.0
        %1720 = vmatprep.subr.mxu0 0.0
        %1721 = vmatpush2.msra.mxu0 0.0
        %1722 = vmatprep.mubr.f32.mxu0 0.0
        %v1723 = vand.u32 %v339, 4294901760
        %1724 = vmatmul.mubr.f32.gmra.mxu0 %v1723
        %v1725 = vpop.f32.mrf.mxu0
        %v1726 = vadd.f32 %v1613, %v1725
        %v1727 = vpop.f32.mrf.mxu0
        %v1728 = vadd.f32 %v1615, %v1727
        %1729 = vmatprep.mubr.f32.mxu0 0.0
        %v1730 = vand.u32 %v342, 4294901760
        %1731 = vmatmul.mubr.f32.gmra.mxu0 %v1730
        %v1732 = vpop.f32.mrf.mxu0
        %v1733 = vadd.f32 %v1624, %v1732
        %v1734 = vpop.f32.mrf.mxu0
        %v1735 = vadd.f32 %v1626, %v1734
        %1736 = vdwg.mxu0
        %1737 = vmatprep.subr.mxu0 0.0
        %1738 = vmatpush1.msra.mxu0 0.0
        %1739 = vmatprep.subr.mxu0 0.0
        %1740 = vmatpush1.msra.mxu0 0.0
        %1741 = vmatprep.subr.mxu0 0.0
        %1742 = vmatpush1.msra.mxu0 0.0
        %1743 = vmatprep.subr.mxu0 0.0
        %1744 = vmatpush1.msra.mxu0 0.0
        %1745 = vmatprep.subr.mxu0 0.0
        %1746 = vmatpush1.msra.mxu0 0.0
        %1747 = vmatprep.subr.mxu0 0.0
        %1748 = vmatpush1.msra.mxu0 0.0
        %1749 = vmatprep.subr.mxu0 0.0
        %1750 = vmatpush1.msra.mxu0 0.0
        %1751 = vmatprep.subr.mxu0 0.0
        %1752 = vmatpush1.msra.mxu0 0.0
        %1753 = vmatprep.subr.mxu0 0.0
        %1754 = vmatpush1.msra.mxu0 0.0
        %1755 = vmatprep.subr.mxu0 0.0
        %1756 = vmatpush1.msra.mxu0 0.0
        %1757 = vmatprep.subr.mxu0 0.0
        %1758 = vmatpush1.msra.mxu0 0.0
        %1759 = vmatprep.subr.mxu0 0.0
        %1760 = vmatpush1.msra.mxu0 0.0
        %1761 = vmatprep.subr.mxu0 0.0
        %1762 = vmatpush1.msra.mxu0 0.0
        %v1763 = vand.u32 %v931, 4294901760
        %v1764 = vsub.f32 %v931, %v1763
        %1765 = vmatprep.subr.mxu0 %v1764
        %v1766 = vand.u32 %v928, 4294901760
        %v1767 = vsub.f32 %v928, %v1766
        %1768 = vmatpush1.msra.mxu0 %v1767
        %v1769 = vand.u32 %v882, 4294901760
        %v1770 = vsub.f32 %v882, %v1769
        %1771 = vmatprep.subr.mxu0 %v1770
        %v1772 = vand.u32 %v881, 4294901760
        %v1773 = vsub.f32 %v881, %v1772
        %1774 = vmatpush1.msra.mxu0 %v1773
        %v1775 = vand.u32 %v866, 4294901760
        %v1776 = vsub.f32 %v866, %v1775
        %1777 = vmatprep.subr.mxu0 %v1776
        %v1778 = vand.u32 %v865, 4294901760
        %v1779 = vsub.f32 %v865, %v1778
        %1780 = vmatpush1.msra.mxu0 %v1779
        %1781 = vmatprep.subr.mxu0 0.0
        %1782 = vmatpush2.msra.mxu0 0.0
        %1783 = vmatprep.subr.mxu0 0.0
        %1784 = vmatpush2.msra.mxu0 0.0
        %1785 = vmatprep.subr.mxu0 0.0
        %1786 = vmatpush2.msra.mxu0 0.0
        %1787 = vmatprep.subr.mxu0 0.0
        %1788 = vmatpush2.msra.mxu0 0.0
        %1789 = vmatprep.subr.mxu0 0.0
        %1790 = vmatpush2.msra.mxu0 0.0
        %1791 = vmatprep.subr.mxu0 0.0
        %1792 = vmatpush2.msra.mxu0 0.0
        %1793 = vmatprep.subr.mxu0 0.0
        %1794 = vmatpush2.msra.mxu0 0.0
        %1795 = vmatprep.subr.mxu0 0.0
        %1796 = vmatpush2.msra.mxu0 0.0
        %1797 = vmatprep.subr.mxu0 0.0
        %1798 = vmatpush2.msra.mxu0 0.0
        %1799 = vmatprep.subr.mxu0 0.0
        %1800 = vmatpush2.msra.mxu0 0.0
        %1801 = vmatprep.subr.mxu0 0.0
        %1802 = vmatpush2.msra.mxu0 0.0
        %1803 = vmatprep.subr.mxu0 0.0
        %1804 = vmatpush2.msra.mxu0 0.0
        %1805 = vmatprep.subr.mxu0 0.0
        %1806 = vmatpush2.msra.mxu0 0.0
        %1807 = vmatprep.subr.mxu0 0.0
        %1808 = vmatpush2.msra.mxu0 0.0
        %1809 = vmatprep.subr.mxu0 0.0
        %1810 = vmatpush2.msra.mxu0 0.0
        %1811 = vmatprep.subr.mxu0 0.0
        %1812 = vmatpush2.msra.mxu0 0.0
        %1813 = vmatprep.mubr.f32.mxu0 0.0
        %v1814 = vand.u32 %v339, 4294901760
        %v1815 = vsub.f32 %v339, %v1814
        %1816 = vmatmul.mubr.f32.gmra.mxu0 %v1815
        %v1817 = vpop.f32.mrf.mxu0
        %v1818 = vadd.f32 %v1726, %v1817
        %v1819 = vpop.f32.mrf.mxu0
        %v1820 = vadd.f32 %v1728, %v1819
        %1821 = vmatprep.mubr.f32.mxu0 0.0
        %v1822 = vand.u32 %v342, 4294901760
        %v1823 = vsub.f32 %v342, %v1822
        %1824 = vmatmul.mubr.f32.gmra.mxu0 %v1823
        %v1825 = vpop.f32.mrf.mxu0
        %v1826 = vadd.f32 %v1733, %v1825
        %v1827 = vpop.f32.mrf.mxu0
        %v1828 = vadd.f32 %v1735, %v1827
        %1829 = vdwg.mxu0
        %1830 = vmatprep.subr.mxu0 0.0
        %1831 = vmatpush1.msra.mxu0 0.0
        %1832 = vmatprep.subr.mxu0 0.0
        %1833 = vmatpush1.msra.mxu0 0.0
        %1834 = vmatprep.subr.mxu0 0.0
        %1835 = vmatpush1.msra.mxu0 0.0
        %1836 = vmatprep.subr.mxu0 0.0
        %1837 = vmatpush1.msra.mxu0 0.0
        %1838 = vmatprep.subr.mxu0 0.0
        %1839 = vmatpush1.msra.mxu0 0.0
        %1840 = vmatprep.subr.mxu0 0.0
        %1841 = vmatpush1.msra.mxu0 0.0
        %1842 = vmatprep.subr.mxu0 0.0
        %1843 = vmatpush1.msra.mxu0 0.0
        %1844 = vmatprep.subr.mxu0 0.0
        %1845 = vmatpush1.msra.mxu0 0.0
        %1846 = vmatprep.subr.mxu0 0.0
        %1847 = vmatpush1.msra.mxu0 0.0
        %1848 = vmatprep.subr.mxu0 0.0
        %1849 = vmatpush1.msra.mxu0 0.0
        %1850 = vmatprep.subr.mxu0 0.0
        %1851 = vmatpush1.msra.mxu0 0.0
        %1852 = vmatprep.subr.mxu0 0.0
        %1853 = vmatpush1.msra.mxu0 0.0
        %1854 = vmatprep.subr.mxu0 0.0
        %1855 = vmatpush1.msra.mxu0 0.0
        %v1856 = vand.u32 %v931, 4294901760
        %1857 = vmatprep.subr.mxu0 %v1856
        %v1858 = vand.u32 %v928, 4294901760
        %1859 = vmatpush1.msra.mxu0 %v1858
        %v1860 = vand.u32 %v882, 4294901760
        %1861 = vmatprep.subr.mxu0 %v1860
        %v1862 = vand.u32 %v881, 4294901760
        %1863 = vmatpush1.msra.mxu0 %v1862
        %v1864 = vand.u32 %v866, 4294901760
        %1865 = vmatprep.subr.mxu0 %v1864
        %v1866 = vand.u32 %v865, 4294901760
        %1867 = vmatpush1.msra.mxu0 %v1866
        %1868 = vmatprep.subr.mxu0 0.0
        %1869 = vmatpush2.msra.mxu0 0.0
        %1870 = vmatprep.subr.mxu0 0.0
        %1871 = vmatpush2.msra.mxu0 0.0
        %1872 = vmatprep.subr.mxu0 0.0
        %1873 = vmatpush2.msra.mxu0 0.0
        %1874 = vmatprep.subr.mxu0 0.0
        %1875 = vmatpush2.msra.mxu0 0.0
        %1876 = vmatprep.subr.mxu0 0.0
        %1877 = vmatpush2.msra.mxu0 0.0
        %1878 = vmatprep.subr.mxu0 0.0
        %1879 = vmatpush2.msra.mxu0 0.0
        %1880 = vmatprep.subr.mxu0 0.0
        %1881 = vmatpush2.msra.mxu0 0.0
        %1882 = vmatprep.subr.mxu0 0.0
        %1883 = vmatpush2.msra.mxu0 0.0
        %1884 = vmatprep.subr.mxu0 0.0
        %1885 = vmatpush2.msra.mxu0 0.0
        %1886 = vmatprep.subr.mxu0 0.0
        %1887 = vmatpush2.msra.mxu0 0.0
        %1888 = vmatprep.subr.mxu0 0.0
        %1889 = vmatpush2.msra.mxu0 0.0
        %1890 = vmatprep.subr.mxu0 0.0
        %1891 = vmatpush2.msra.mxu0 0.0
        %1892 = vmatprep.subr.mxu0 0.0
        %1893 = vmatpush2.msra.mxu0 0.0
        %1894 = vmatprep.subr.mxu0 0.0
        %1895 = vmatpush2.msra.mxu0 0.0
        %1896 = vmatprep.subr.mxu0 0.0
        %1897 = vmatpush2.msra.mxu0 0.0
        %1898 = vmatprep.subr.mxu0 0.0
        %1899 = vmatpush2.msra.mxu0 0.0
        %1900 = vmatprep.mubr.f32.mxu0 0.0
        %v1901 = vand.u32 %v339, 4294901760
        %v1902 = vsub.f32 %v339, %v1901
        %v1903 = vand.u32 %v1902, 4294901760
        %1904 = vmatmul.mubr.f32.gmra.mxu0 %v1903
        %v1905 = vpop.f32.mrf.mxu0
        %v1906 = vadd.f32 %v1818, %v1905
        %v1907 = vpop.f32.mrf.mxu0
        %v1908 = vadd.f32 %v1820, %v1907
        %1909 = vmatprep.mubr.f32.mxu0 0.0
        %v1910 = vand.u32 %v342, 4294901760
        %v1911 = vsub.f32 %v342, %v1910
        %v1912 = vand.u32 %v1911, 4294901760
        %1913 = vmatmul.mubr.f32.gmra.mxu0 %v1912
        %v1914 = vpop.f32.mrf.mxu0
        %v1915 = vadd.f32 %v1826, %v1914
        %v1916 = vpop.f32.mrf.mxu0
        %v1917 = vadd.f32 %v1828, %v1916
        %1918 = vdwg.mxu0
        %1919 = vmatprep.subr.mxu0 0.0
        %1920 = vmatpush1.msra.mxu0 0.0
        %1921 = vmatprep.subr.mxu0 0.0
        %1922 = vmatpush1.msra.mxu0 0.0
        %1923 = vmatprep.subr.mxu0 0.0
        %1924 = vmatpush1.msra.mxu0 0.0
        %1925 = vmatprep.subr.mxu0 0.0
        %1926 = vmatpush1.msra.mxu0 0.0
        %1927 = vmatprep.subr.mxu0 0.0
        %1928 = vmatpush1.msra.mxu0 0.0
        %1929 = vmatprep.subr.mxu0 0.0
        %1930 = vmatpush1.msra.mxu0 0.0
        %1931 = vmatprep.subr.mxu0 0.0
        %1932 = vmatpush1.msra.mxu0 0.0
        %1933 = vmatprep.subr.mxu0 0.0
        %1934 = vmatpush1.msra.mxu0 0.0
        %1935 = vmatprep.subr.mxu0 0.0
        %1936 = vmatpush1.msra.mxu0 0.0
        %1937 = vmatprep.subr.mxu0 0.0
        %1938 = vmatpush1.msra.mxu0 0.0
        %1939 = vmatprep.subr.mxu0 0.0
        %1940 = vmatpush1.msra.mxu0 0.0
        %1941 = vmatprep.subr.mxu0 0.0
        %1942 = vmatpush1.msra.mxu0 0.0
        %1943 = vmatprep.subr.mxu0 0.0
        %1944 = vmatpush1.msra.mxu0 0.0
        %v1945 = vand.u32 %v931, 4294901760
        %v1946 = vsub.f32 %v931, %v1945
        %v1947 = vand.u32 %v1946, 4294901760
        %1948 = vmatprep.subr.mxu0 %v1947
        %v1949 = vand.u32 %v928, 4294901760
        %v1950 = vsub.f32 %v928, %v1949
        %v1951 = vand.u32 %v1950, 4294901760
        %1952 = vmatpush1.msra.mxu0 %v1951
        %v1953 = vand.u32 %v882, 4294901760
        %v1954 = vsub.f32 %v882, %v1953
        %v1955 = vand.u32 %v1954, 4294901760
        %1956 = vmatprep.subr.mxu0 %v1955
        %v1957 = vand.u32 %v881, 4294901760
        %v1958 = vsub.f32 %v881, %v1957
        %v1959 = vand.u32 %v1958, 4294901760
        %1960 = vmatpush1.msra.mxu0 %v1959
        %v1961 = vand.u32 %v866, 4294901760
        %v1962 = vsub.f32 %v866, %v1961
        %v1963 = vand.u32 %v1962, 4294901760
        %1964 = vmatprep.subr.mxu0 %v1963
        %v1965 = vand.u32 %v865, 4294901760
        %v1966 = vsub.f32 %v865, %v1965
        %v1967 = vand.u32 %v1966, 4294901760
        %1968 = vmatpush1.msra.mxu0 %v1967
        %1969 = vmatprep.subr.mxu0 0.0
        %1970 = vmatpush2.msra.mxu0 0.0
        %1971 = vmatprep.subr.mxu0 0.0
        %1972 = vmatpush2.msra.mxu0 0.0
        %1973 = vmatprep.subr.mxu0 0.0
        %1974 = vmatpush2.msra.mxu0 0.0
        %1975 = vmatprep.subr.mxu0 0.0
        %1976 = vmatpush2.msra.mxu0 0.0
        %1977 = vmatprep.subr.mxu0 0.0
        %1978 = vmatpush2.msra.mxu0 0.0
        %1979 = vmatprep.subr.mxu0 0.0
        %1980 = vmatpush2.msra.mxu0 0.0
        %1981 = vmatprep.subr.mxu0 0.0
        %1982 = vmatpush2.msra.mxu0 0.0
        %1983 = vmatprep.subr.mxu0 0.0
        %1984 = vmatpush2.msra.mxu0 0.0
        %1985 = vmatprep.subr.mxu0 0.0
        %1986 = vmatpush2.msra.mxu0 0.0
        %1987 = vmatprep.subr.mxu0 0.0
        %1988 = vmatpush2.msra.mxu0 0.0
        %1989 = vmatprep.subr.mxu0 0.0
        %1990 = vmatpush2.msra.mxu0 0.0
        %1991 = vmatprep.subr.mxu0 0.0
        %1992 = vmatpush2.msra.mxu0 0.0
        %1993 = vmatprep.subr.mxu0 0.0
        %1994 = vmatpush2.msra.mxu0 0.0
        %1995 = vmatprep.subr.mxu0 0.0
        %1996 = vmatpush2.msra.mxu0 0.0
        %1997 = vmatprep.subr.mxu0 0.0
        %1998 = vmatpush2.msra.mxu0 0.0
        %1999 = vmatprep.subr.mxu0 0.0
        %2000 = vmatpush2.msra.mxu0 0.0
        %2001 = vmatprep.mubr.f32.mxu0 0.0
        %v2002 = vand.u32 %v339, 4294901760
        %2003 = vmatmul.mubr.f32.gmra.mxu0 %v2002
        %v2004 = vpop.f32.mrf.mxu0
        %v2005 = vadd.f32 %v1906, %v2004
        %v2006 = vpop.f32.mrf.mxu0
        %v2007 = vadd.f32 %v1908, %v2006
        %2008 = vmatprep.mubr.f32.mxu0 0.0
        %v2009 = vand.u32 %v342, 4294901760
        %2010 = vmatmul.mubr.f32.gmra.mxu0 %v2009
        %v2011 = vpop.f32.mrf.mxu0
        %v2012 = vadd.f32 %v1915, %v2011
        %v2013 = vpop.f32.mrf.mxu0
        %v2014 = vadd.f32 %v1917, %v2013
        %2015 = vdwg.mxu0
        %2016 = vmatprep.subr.mxu0 0.0
        %2017 = vmatpush1.msra.mxu0 0.0
        %2018 = vmatprep.subr.mxu0 0.0
        %2019 = vmatpush1.msra.mxu0 0.0
        %2020 = vmatprep.subr.mxu0 0.0
        %2021 = vmatpush1.msra.mxu0 0.0
        %2022 = vmatprep.subr.mxu0 0.0
        %2023 = vmatpush1.msra.mxu0 0.0
        %2024 = vmatprep.subr.mxu0 0.0
        %2025 = vmatpush1.msra.mxu0 0.0
        %2026 = vmatprep.subr.mxu0 0.0
        %2027 = vmatpush1.msra.mxu0 0.0
        %2028 = vmatprep.subr.mxu0 0.0
        %2029 = vmatpush1.msra.mxu0 0.0
        %2030 = vmatprep.subr.mxu0 0.0
        %2031 = vmatpush1.msra.mxu0 0.0
        %2032 = vmatprep.subr.mxu0 0.0
        %2033 = vmatpush1.msra.mxu0 0.0
        %2034 = vmatprep.subr.mxu0 0.0
        %2035 = vmatpush1.msra.mxu0 0.0
        %2036 = vmatprep.subr.mxu0 0.0
        %2037 = vmatpush1.msra.mxu0 0.0
        %2038 = vmatprep.subr.mxu0 0.0
        %2039 = vmatpush1.msra.mxu0 0.0
        %2040 = vmatprep.subr.mxu0 0.0
        %2041 = vmatpush1.msra.mxu0 0.0
        %v2042 = vand.u32 %v931, 4294901760
        %2043 = vmatprep.subr.mxu0 %v2042
        %v2044 = vand.u32 %v928, 4294901760
        %2045 = vmatpush1.msra.mxu0 %v2044
        %v2046 = vand.u32 %v882, 4294901760
        %2047 = vmatprep.subr.mxu0 %v2046
        %v2048 = vand.u32 %v881, 4294901760
        %2049 = vmatpush1.msra.mxu0 %v2048
        %v2050 = vand.u32 %v866, 4294901760
        %2051 = vmatprep.subr.mxu0 %v2050
        %v2052 = vand.u32 %v865, 4294901760
        %2053 = vmatpush1.msra.mxu0 %v2052
        %2054 = vmatprep.subr.mxu0 0.0
        %2055 = vmatpush2.msra.mxu0 0.0
        %2056 = vmatprep.subr.mxu0 0.0
        %2057 = vmatpush2.msra.mxu0 0.0
        %2058 = vmatprep.subr.mxu0 0.0
        %2059 = vmatpush2.msra.mxu0 0.0
        %2060 = vmatprep.subr.mxu0 0.0
        %2061 = vmatpush2.msra.mxu0 0.0
        %2062 = vmatprep.subr.mxu0 0.0
        %2063 = vmatpush2.msra.mxu0 0.0
        %2064 = vmatprep.subr.mxu0 0.0
        %2065 = vmatpush2.msra.mxu0 0.0
        %2066 = vmatprep.subr.mxu0 0.0
        %2067 = vmatpush2.msra.mxu0 0.0
        %2068 = vmatprep.subr.mxu0 0.0
        %2069 = vmatpush2.msra.mxu0 0.0
        %2070 = vmatprep.subr.mxu0 0.0
        %2071 = vmatpush2.msra.mxu0 0.0
        %2072 = vmatprep.subr.mxu0 0.0
        %2073 = vmatpush2.msra.mxu0 0.0
        %2074 = vmatprep.subr.mxu0 0.0
        %2075 = vmatpush2.msra.mxu0 0.0
        %2076 = vmatprep.subr.mxu0 0.0
        %2077 = vmatpush2.msra.mxu0 0.0
        %2078 = vmatprep.subr.mxu0 0.0
        %2079 = vmatpush2.msra.mxu0 0.0
        %2080 = vmatprep.subr.mxu0 0.0
        %2081 = vmatpush2.msra.mxu0 0.0
        %2082 = vmatprep.subr.mxu0 0.0
        %2083 = vmatpush2.msra.mxu0 0.0
        %2084 = vmatprep.subr.mxu0 0.0
        %2085 = vmatpush2.msra.mxu0 0.0
        %2086 = vmatprep.mubr.f32.mxu0 0.0
        %v2087 = vand.u32 %v339, 4294901760
        %2088 = vmatmul.mubr.f32.gmra.mxu0 %v2087
        %v2089 = vpop.f32.mrf.mxu0
        %v2090 = vadd.f32 %v2005, %v2089
        %v2091 = vpop.f32.mrf.mxu0
        %v2092 = vadd.f32 %v2007, %v2091
        %2093 = vmatprep.mubr.f32.mxu0 0.0
        %v2094 = vand.u32 %v342, 4294901760
        %2095 = vmatmul.mubr.f32.gmra.mxu0 %v2094
        %v2096 = vpop.f32.mrf.mxu0
        %v2097 = vadd.f32 %v2012, %v2096
        %v2098 = vpop.f32.mrf.mxu0
        %v2099 = vadd.f32 %v2014, %v2098
        %2100 = vdwg.mxu0
        %2101 = vmatprep.subr.mxu0 0.0
        %2102 = vmatpush1.msra.mxu0 0.0
        %2103 = vmatprep.subr.mxu0 0.0
        %2104 = vmatpush1.msra.mxu0 0.0
        %2105 = vmatprep.subr.mxu0 0.0
        %2106 = vmatpush1.msra.mxu0 0.0
        %2107 = vmatprep.subr.mxu0 0.0
        %2108 = vmatpush1.msra.mxu0 0.0
        %2109 = vmatprep.subr.mxu0 0.0
        %2110 = vmatpush1.msra.mxu0 0.0
        %2111 = vmatprep.subr.mxu0 0.0
        %2112 = vmatpush1.msra.mxu0 0.0
        %2113 = vmatprep.subr.mxu0 0.0
        %2114 = vmatpush1.msra.mxu0 0.0
        %2115 = vmatprep.subr.mxu0 0.0
        %2116 = vmatpush1.msra.mxu0 0.0
        %2117 = vmatprep.subr.mxu0 0.0
        %2118 = vmatpush1.msra.mxu0 0.0
        %2119 = vmatprep.subr.mxu0 0.0
        %2120 = vmatpush1.msra.mxu0 0.0
        %2121 = vmatprep.subr.mxu0 0.0
        %2122 = vmatpush1.msra.mxu0 0.0
        %2123 = vmatprep.subr.mxu0 0.0
        %2124 = vmatpush1.msra.mxu0 0.0
        %2125 = vmatprep.subr.mxu0 0.0
        %2126 = vmatpush1.msra.mxu0 0.0
        %v2127 = vand.u32 %v937, 4294901760
        %2128 = vmatprep.subr.mxu0 %v2127
        %v2129 = vand.u32 %v934, 4294901760
        %2130 = vmatpush1.msra.mxu0 %v2129
        %v2131 = vand.u32 %v884, 4294901760
        %2132 = vmatprep.subr.mxu0 %v2131
        %v2133 = vand.u32 %v883, 4294901760
        %2134 = vmatpush1.msra.mxu0 %v2133
        %v2135 = vand.u32 %v868, 4294901760
        %2136 = vmatprep.subr.mxu0 %v2135
        %v2137 = vand.u32 %v867, 4294901760
        %2138 = vmatpush1.msra.mxu0 %v2137
        %2139 = vmatprep.subr.mxu0 0.0
        %2140 = vmatpush2.msra.mxu0 0.0
        %2141 = vmatprep.subr.mxu0 0.0
        %2142 = vmatpush2.msra.mxu0 0.0
        %2143 = vmatprep.subr.mxu0 0.0
        %2144 = vmatpush2.msra.mxu0 0.0
        %2145 = vmatprep.subr.mxu0 0.0
        %2146 = vmatpush2.msra.mxu0 0.0
        %2147 = vmatprep.subr.mxu0 0.0
        %2148 = vmatpush2.msra.mxu0 0.0
        %2149 = vmatprep.subr.mxu0 0.0
        %2150 = vmatpush2.msra.mxu0 0.0
        %2151 = vmatprep.subr.mxu0 0.0
        %2152 = vmatpush2.msra.mxu0 0.0
        %2153 = vmatprep.subr.mxu0 0.0
        %2154 = vmatpush2.msra.mxu0 0.0
        %2155 = vmatprep.subr.mxu0 0.0
        %2156 = vmatpush2.msra.mxu0 0.0
        %2157 = vmatprep.subr.mxu0 0.0
        %2158 = vmatpush2.msra.mxu0 0.0
        %2159 = vmatprep.subr.mxu0 0.0
        %2160 = vmatpush2.msra.mxu0 0.0
        %2161 = vmatprep.subr.mxu0 0.0
        %2162 = vmatpush2.msra.mxu0 0.0
        %2163 = vmatprep.subr.mxu0 0.0
        %2164 = vmatpush2.msra.mxu0 0.0
        %2165 = vmatprep.subr.mxu0 0.0
        %2166 = vmatpush2.msra.mxu0 0.0
        %2167 = vmatprep.subr.mxu0 0.0
        %2168 = vmatpush2.msra.mxu0 0.0
        %2169 = vmatprep.subr.mxu0 0.0
        %2170 = vmatpush2.msra.mxu0 0.0
        %2171 = vmatprep.mubr.f32.mxu0 0.0
        %v2172 = vand.u32 %v339, 4294901760
        %v2173 = vsub.f32 %v339, %v2172
        %v2174 = vand.u32 %v2173, 4294901760
        %v2175 = vsub.f32 %v2173, %v2174
        %v2176 = vand.u32 %v2175, 4294901760
        %2177 = vmatmul.mubr.f32.gmra.mxu0 %v2176
        %v2178 = vpop.f32.mrf.mxu0
        %v2179 = vadd.f32 %v914, %v2178
        %v2180 = vpop.f32.mrf.mxu0
        %v2181 = vadd.f32 %v914, %v2180
        %2182 = vmatprep.mubr.f32.mxu0 0.0
        %v2183 = vand.u32 %v342, 4294901760
        %v2184 = vsub.f32 %v342, %v2183
        %v2185 = vand.u32 %v2184, 4294901760
        %v2186 = vsub.f32 %v2184, %v2185
        %v2187 = vand.u32 %v2186, 4294901760
        %2188 = vmatmul.mubr.f32.gmra.mxu0 %v2187
        %v2189 = vpop.f32.mrf.mxu0
        %v2190 = vadd.f32 %v919, %v2189
        %v2191 = vpop.f32.mrf.mxu0
        %v2192 = vadd.f32 %v919, %v2191
        %2193 = vdwg.mxu0
        %2194 = vmatprep.subr.mxu0 0.0
        %2195 = vmatpush1.msra.mxu0 0.0
        %2196 = vmatprep.subr.mxu0 0.0
        %2197 = vmatpush1.msra.mxu0 0.0
        %2198 = vmatprep.subr.mxu0 0.0
        %2199 = vmatpush1.msra.mxu0 0.0
        %2200 = vmatprep.subr.mxu0 0.0
        %2201 = vmatpush1.msra.mxu0 0.0
        %2202 = vmatprep.subr.mxu0 0.0
        %2203 = vmatpush1.msra.mxu0 0.0
        %2204 = vmatprep.subr.mxu0 0.0
        %2205 = vmatpush1.msra.mxu0 0.0
        %2206 = vmatprep.subr.mxu0 0.0
        %2207 = vmatpush1.msra.mxu0 0.0
        %2208 = vmatprep.subr.mxu0 0.0
        %2209 = vmatpush1.msra.mxu0 0.0
        %2210 = vmatprep.subr.mxu0 0.0
        %2211 = vmatpush1.msra.mxu0 0.0
        %2212 = vmatprep.subr.mxu0 0.0
        %2213 = vmatpush1.msra.mxu0 0.0
        %2214 = vmatprep.subr.mxu0 0.0
        %2215 = vmatpush1.msra.mxu0 0.0
        %2216 = vmatprep.subr.mxu0 0.0
        %2217 = vmatpush1.msra.mxu0 0.0
        %2218 = vmatprep.subr.mxu0 0.0
        %2219 = vmatpush1.msra.mxu0 0.0
        %v2220 = vand.u32 %v937, 4294901760
        %v2221 = vsub.f32 %v937, %v2220
        %v2222 = vand.u32 %v2221, 4294901760
        %v2223 = vsub.f32 %v2221, %v2222
        %v2224 = vand.u32 %v2223, 4294901760
        %2225 = vmatprep.subr.mxu0 %v2224
        %v2226 = vand.u32 %v934, 4294901760
        %v2227 = vsub.f32 %v934, %v2226
        %v2228 = vand.u32 %v2227, 4294901760
        %v2229 = vsub.f32 %v2227, %v2228
        %v2230 = vand.u32 %v2229, 4294901760
        %2231 = vmatpush1.msra.mxu0 %v2230
        %v2232 = vand.u32 %v884, 4294901760
        %v2233 = vsub.f32 %v884, %v2232
        %v2234 = vand.u32 %v2233, 4294901760
        %v2235 = vsub.f32 %v2233, %v2234
        %v2236 = vand.u32 %v2235, 4294901760
        %2237 = vmatprep.subr.mxu0 %v2236
        %v2238 = vand.u32 %v883, 4294901760
        %v2239 = vsub.f32 %v883, %v2238
        %v2240 = vand.u32 %v2239, 4294901760
        %v2241 = vsub.f32 %v2239, %v2240
        %v2242 = vand.u32 %v2241, 4294901760
        %2243 = vmatpush1.msra.mxu0 %v2242
        %v2244 = vand.u32 %v868, 4294901760
        %v2245 = vsub.f32 %v868, %v2244
        %v2246 = vand.u32 %v2245, 4294901760
        %v2247 = vsub.f32 %v2245, %v2246
        %v2248 = vand.u32 %v2247, 4294901760
        %2249 = vmatprep.subr.mxu0 %v2248
        %v2250 = vand.u32 %v867, 4294901760
        %v2251 = vsub.f32 %v867, %v2250
        %v2252 = vand.u32 %v2251, 4294901760
        %v2253 = vsub.f32 %v2251, %v2252
        %v2254 = vand.u32 %v2253, 4294901760
        %2255 = vmatpush1.msra.mxu0 %v2254
        %2256 = vmatprep.subr.mxu0 0.0
        %2257 = vmatpush2.msra.mxu0 0.0
        %2258 = vmatprep.subr.mxu0 0.0
        %2259 = vmatpush2.msra.mxu0 0.0
        %2260 = vmatprep.subr.mxu0 0.0
        %2261 = vmatpush2.msra.mxu0 0.0
        %2262 = vmatprep.subr.mxu0 0.0
        %2263 = vmatpush2.msra.mxu0 0.0
        %2264 = vmatprep.subr.mxu0 0.0
        %2265 = vmatpush2.msra.mxu0 0.0
        %2266 = vmatprep.subr.mxu0 0.0
        %2267 = vmatpush2.msra.mxu0 0.0
        %2268 = vmatprep.subr.mxu0 0.0
        %2269 = vmatpush2.msra.mxu0 0.0
        %2270 = vmatprep.subr.mxu0 0.0
        %2271 = vmatpush2.msra.mxu0 0.0
        %2272 = vmatprep.subr.mxu0 0.0
        %2273 = vmatpush2.msra.mxu0 0.0
        %2274 = vmatprep.subr.mxu0 0.0
        %2275 = vmatpush2.msra.mxu0 0.0
        %2276 = vmatprep.subr.mxu0 0.0
        %2277 = vmatpush2.msra.mxu0 0.0
        %2278 = vmatprep.subr.mxu0 0.0
        %2279 = vmatpush2.msra.mxu0 0.0
        %2280 = vmatprep.subr.mxu0 0.0
        %2281 = vmatpush2.msra.mxu0 0.0
        %2282 = vmatprep.subr.mxu0 0.0
        %2283 = vmatpush2.msra.mxu0 0.0
        %2284 = vmatprep.subr.mxu0 0.0
        %2285 = vmatpush2.msra.mxu0 0.0
        %2286 = vmatprep.subr.mxu0 0.0
        %2287 = vmatpush2.msra.mxu0 0.0
        %2288 = vmatprep.mubr.f32.mxu0 0.0
        %v2289 = vand.u32 %v339, 4294901760
        %2290 = vmatmul.mubr.f32.gmra.mxu0 %v2289
        %v2291 = vpop.f32.mrf.mxu0
        %v2292 = vadd.f32 %v2179, %v2291
        %v2293 = vpop.f32.mrf.mxu0
        %v2294 = vadd.f32 %v2181, %v2293
        %2295 = vmatprep.mubr.f32.mxu0 0.0
        %v2296 = vand.u32 %v342, 4294901760
        %2297 = vmatmul.mubr.f32.gmra.mxu0 %v2296
        %v2298 = vpop.f32.mrf.mxu0
        %v2299 = vadd.f32 %v2190, %v2298
        %v2300 = vpop.f32.mrf.mxu0
        %v2301 = vadd.f32 %v2192, %v2300
        %2302 = vdwg.mxu0
        %2303 = vmatprep.subr.mxu0 0.0
        %2304 = vmatpush1.msra.mxu0 0.0
        %2305 = vmatprep.subr.mxu0 0.0
        %2306 = vmatpush1.msra.mxu0 0.0
        %2307 = vmatprep.subr.mxu0 0.0
        %2308 = vmatpush1.msra.mxu0 0.0
        %2309 = vmatprep.subr.mxu0 0.0
        %2310 = vmatpush1.msra.mxu0 0.0
        %2311 = vmatprep.subr.mxu0 0.0
        %2312 = vmatpush1.msra.mxu0 0.0
        %2313 = vmatprep.subr.mxu0 0.0
        %2314 = vmatpush1.msra.mxu0 0.0
        %2315 = vmatprep.subr.mxu0 0.0
        %2316 = vmatpush1.msra.mxu0 0.0
        %2317 = vmatprep.subr.mxu0 0.0
        %2318 = vmatpush1.msra.mxu0 0.0
        %2319 = vmatprep.subr.mxu0 0.0
        %2320 = vmatpush1.msra.mxu0 0.0
        %2321 = vmatprep.subr.mxu0 0.0
        %2322 = vmatpush1.msra.mxu0 0.0
        %2323 = vmatprep.subr.mxu0 0.0
        %2324 = vmatpush1.msra.mxu0 0.0
        %2325 = vmatprep.subr.mxu0 0.0
        %2326 = vmatpush1.msra.mxu0 0.0
        %2327 = vmatprep.subr.mxu0 0.0
        %2328 = vmatpush1.msra.mxu0 0.0
        %v2329 = vand.u32 %v937, 4294901760
        %v2330 = vsub.f32 %v937, %v2329
        %2331 = vmatprep.subr.mxu0 %v2330
        %v2332 = vand.u32 %v934, 4294901760
        %v2333 = vsub.f32 %v934, %v2332
        %2334 = vmatpush1.msra.mxu0 %v2333
        %v2335 = vand.u32 %v884, 4294901760
        %v2336 = vsub.f32 %v884, %v2335
        %2337 = vmatprep.subr.mxu0 %v2336
        %v2338 = vand.u32 %v883, 4294901760
        %v2339 = vsub.f32 %v883, %v2338
        %2340 = vmatpush1.msra.mxu0 %v2339
        %v2341 = vand.u32 %v868, 4294901760
        %v2342 = vsub.f32 %v868, %v2341
        %2343 = vmatprep.subr.mxu0 %v2342
        %v2344 = vand.u32 %v867, 4294901760
        %v2345 = vsub.f32 %v867, %v2344
        %2346 = vmatpush1.msra.mxu0 %v2345
        %2347 = vmatprep.subr.mxu0 0.0
        %2348 = vmatpush2.msra.mxu0 0.0
        %2349 = vmatprep.subr.mxu0 0.0
        %2350 = vmatpush2.msra.mxu0 0.0
        %2351 = vmatprep.subr.mxu0 0.0
        %2352 = vmatpush2.msra.mxu0 0.0
        %2353 = vmatprep.subr.mxu0 0.0
        %2354 = vmatpush2.msra.mxu0 0.0
        %2355 = vmatprep.subr.mxu0 0.0
        %2356 = vmatpush2.msra.mxu0 0.0
        %2357 = vmatprep.subr.mxu0 0.0
        %2358 = vmatpush2.msra.mxu0 0.0
        %2359 = vmatprep.subr.mxu0 0.0
        %2360 = vmatpush2.msra.mxu0 0.0
        %2361 = vmatprep.subr.mxu0 0.0
        %2362 = vmatpush2.msra.mxu0 0.0
        %2363 = vmatprep.subr.mxu0 0.0
        %2364 = vmatpush2.msra.mxu0 0.0
        %2365 = vmatprep.subr.mxu0 0.0
        %2366 = vmatpush2.msra.mxu0 0.0
        %2367 = vmatprep.subr.mxu0 0.0
        %2368 = vmatpush2.msra.mxu0 0.0
        %2369 = vmatprep.subr.mxu0 0.0
        %2370 = vmatpush2.msra.mxu0 0.0
        %2371 = vmatprep.subr.mxu0 0.0
        %2372 = vmatpush2.msra.mxu0 0.0
        %2373 = vmatprep.subr.mxu0 0.0
        %2374 = vmatpush2.msra.mxu0 0.0
        %2375 = vmatprep.subr.mxu0 0.0
        %2376 = vmatpush2.msra.mxu0 0.0
        %2377 = vmatprep.subr.mxu0 0.0
        %2378 = vmatpush2.msra.mxu0 0.0
        %2379 = vmatprep.mubr.f32.mxu0 0.0
        %v2380 = vand.u32 %v339, 4294901760
        %v2381 = vsub.f32 %v339, %v2380
        %2382 = vmatmul.mubr.f32.gmra.mxu0 %v2381
        %v2383 = vpop.f32.mrf.mxu0
        %v2384 = vadd.f32 %v2292, %v2383
        %v2385 = vpop.f32.mrf.mxu0
        %v2386 = vadd.f32 %v2294, %v2385
        %2387 = vmatprep.mubr.f32.mxu0 0.0
        %v2388 = vand.u32 %v342, 4294901760
        %v2389 = vsub.f32 %v342, %v2388
        %2390 = vmatmul.mubr.f32.gmra.mxu0 %v2389
        %v2391 = vpop.f32.mrf.mxu0
        %v2392 = vadd.f32 %v2299, %v2391
        %v2393 = vpop.f32.mrf.mxu0
        %v2394 = vadd.f32 %v2301, %v2393
        %2395 = vdwg.mxu0
        %2396 = vmatprep.subr.mxu0 0.0
        %2397 = vmatpush1.msra.mxu0 0.0
        %2398 = vmatprep.subr.mxu0 0.0
        %2399 = vmatpush1.msra.mxu0 0.0
        %2400 = vmatprep.subr.mxu0 0.0
        %2401 = vmatpush1.msra.mxu0 0.0
        %2402 = vmatprep.subr.mxu0 0.0
        %2403 = vmatpush1.msra.mxu0 0.0
        %2404 = vmatprep.subr.mxu0 0.0
        %2405 = vmatpush1.msra.mxu0 0.0
        %2406 = vmatprep.subr.mxu0 0.0
        %2407 = vmatpush1.msra.mxu0 0.0
        %2408 = vmatprep.subr.mxu0 0.0
        %2409 = vmatpush1.msra.mxu0 0.0
        %2410 = vmatprep.subr.mxu0 0.0
        %2411 = vmatpush1.msra.mxu0 0.0
        %2412 = vmatprep.subr.mxu0 0.0
        %2413 = vmatpush1.msra.mxu0 0.0
        %2414 = vmatprep.subr.mxu0 0.0
        %2415 = vmatpush1.msra.mxu0 0.0
        %2416 = vmatprep.subr.mxu0 0.0
        %2417 = vmatpush1.msra.mxu0 0.0
        %2418 = vmatprep.subr.mxu0 0.0
        %2419 = vmatpush1.msra.mxu0 0.0
        %2420 = vmatprep.subr.mxu0 0.0
        %2421 = vmatpush1.msra.mxu0 0.0
        %v2422 = vand.u32 %v937, 4294901760
        %2423 = vmatprep.subr.mxu0 %v2422
        %v2424 = vand.u32 %v934, 4294901760
        %2425 = vmatpush1.msra.mxu0 %v2424
        %v2426 = vand.u32 %v884, 4294901760
        %2427 = vmatprep.subr.mxu0 %v2426
        %v2428 = vand.u32 %v883, 4294901760
        %2429 = vmatpush1.msra.mxu0 %v2428
        %v2430 = vand.u32 %v868, 4294901760
        %2431 = vmatprep.subr.mxu0 %v2430
        %v2432 = vand.u32 %v867, 4294901760
        %2433 = vmatpush1.msra.mxu0 %v2432
        %2434 = vmatprep.subr.mxu0 0.0
        %2435 = vmatpush2.msra.mxu0 0.0
        %2436 = vmatprep.subr.mxu0 0.0
        %2437 = vmatpush2.msra.mxu0 0.0
        %2438 = vmatprep.subr.mxu0 0.0
        %2439 = vmatpush2.msra.mxu0 0.0
        %2440 = vmatprep.subr.mxu0 0.0
        %2441 = vmatpush2.msra.mxu0 0.0
        %2442 = vmatprep.subr.mxu0 0.0
        %2443 = vmatpush2.msra.mxu0 0.0
        %2444 = vmatprep.subr.mxu0 0.0
        %2445 = vmatpush2.msra.mxu0 0.0
        %2446 = vmatprep.subr.mxu0 0.0
        %2447 = vmatpush2.msra.mxu0 0.0
        %2448 = vmatprep.subr.mxu0 0.0
        %2449 = vmatpush2.msra.mxu0 0.0
        %2450 = vmatprep.subr.mxu0 0.0
        %2451 = vmatpush2.msra.mxu0 0.0
        %2452 = vmatprep.subr.mxu0 0.0
        %2453 = vmatpush2.msra.mxu0 0.0
        %2454 = vmatprep.subr.mxu0 0.0
        %2455 = vmatpush2.msra.mxu0 0.0
        %2456 = vmatprep.subr.mxu0 0.0
        %2457 = vmatpush2.msra.mxu0 0.0
        %2458 = vmatprep.subr.mxu0 0.0
        %2459 = vmatpush2.msra.mxu0 0.0
        %2460 = vmatprep.subr.mxu0 0.0
        %2461 = vmatpush2.msra.mxu0 0.0
        %2462 = vmatprep.subr.mxu0 0.0
        %2463 = vmatpush2.msra.mxu0 0.0
        %2464 = vmatprep.subr.mxu0 0.0
        %2465 = vmatpush2.msra.mxu0 0.0
        %2466 = vmatprep.mubr.f32.mxu0 0.0
        %v2467 = vand.u32 %v339, 4294901760
        %v2468 = vsub.f32 %v339, %v2467
        %v2469 = vand.u32 %v2468, 4294901760
        %2470 = vmatmul.mubr.f32.gmra.mxu0 %v2469
        %v2471 = vpop.f32.mrf.mxu0
        %v2472 = vadd.f32 %v2384, %v2471
        %v2473 = vpop.f32.mrf.mxu0
        %v2474 = vadd.f32 %v2386, %v2473
        %2475 = vmatprep.mubr.f32.mxu0 0.0
        %v2476 = vand.u32 %v342, 4294901760
        %v2477 = vsub.f32 %v342, %v2476
        %v2478 = vand.u32 %v2477, 4294901760
        %2479 = vmatmul.mubr.f32.gmra.mxu0 %v2478
        %v2480 = vpop.f32.mrf.mxu0
        %v2481 = vadd.f32 %v2392, %v2480
        %v2482 = vpop.f32.mrf.mxu0
        %v2483 = vadd.f32 %v2394, %v2482
        %2484 = vdwg.mxu0
        %2485 = vmatprep.subr.mxu0 0.0
        %2486 = vmatpush1.msra.mxu0 0.0
        %2487 = vmatprep.subr.mxu0 0.0
        %2488 = vmatpush1.msra.mxu0 0.0
        %2489 = vmatprep.subr.mxu0 0.0
        %2490 = vmatpush1.msra.mxu0 0.0
        %2491 = vmatprep.subr.mxu0 0.0
        %2492 = vmatpush1.msra.mxu0 0.0
        %2493 = vmatprep.subr.mxu0 0.0
        %2494 = vmatpush1.msra.mxu0 0.0
        %2495 = vmatprep.subr.mxu0 0.0
        %2496 = vmatpush1.msra.mxu0 0.0
        %2497 = vmatprep.subr.mxu0 0.0
        %2498 = vmatpush1.msra.mxu0 0.0
        %2499 = vmatprep.subr.mxu0 0.0
        %2500 = vmatpush1.msra.mxu0 0.0
        %2501 = vmatprep.subr.mxu0 0.0
        %2502 = vmatpush1.msra.mxu0 0.0
        %2503 = vmatprep.subr.mxu0 0.0
        %2504 = vmatpush1.msra.mxu0 0.0
        %2505 = vmatprep.subr.mxu0 0.0
        %2506 = vmatpush1.msra.mxu0 0.0
        %2507 = vmatprep.subr.mxu0 0.0
        %2508 = vmatpush1.msra.mxu0 0.0
        %2509 = vmatprep.subr.mxu0 0.0
        %2510 = vmatpush1.msra.mxu0 0.0
        %v2511 = vand.u32 %v937, 4294901760
        %v2512 = vsub.f32 %v937, %v2511
        %v2513 = vand.u32 %v2512, 4294901760
        %2514 = vmatprep.subr.mxu0 %v2513
        %v2515 = vand.u32 %v934, 4294901760
        %v2516 = vsub.f32 %v934, %v2515
        %v2517 = vand.u32 %v2516, 4294901760
        %2518 = vmatpush1.msra.mxu0 %v2517
        %v2519 = vand.u32 %v884, 4294901760
        %v2520 = vsub.f32 %v884, %v2519
        %v2521 = vand.u32 %v2520, 4294901760
        %2522 = vmatprep.subr.mxu0 %v2521
        %v2523 = vand.u32 %v883, 4294901760
        %v2524 = vsub.f32 %v883, %v2523
        %v2525 = vand.u32 %v2524, 4294901760
        %2526 = vmatpush1.msra.mxu0 %v2525
        %v2527 = vand.u32 %v868, 4294901760
        %v2528 = vsub.f32 %v868, %v2527
        %v2529 = vand.u32 %v2528, 4294901760
        %2530 = vmatprep.subr.mxu0 %v2529
        %v2531 = vand.u32 %v867, 4294901760
        %v2532 = vsub.f32 %v867, %v2531
        %v2533 = vand.u32 %v2532, 4294901760
        %2534 = vmatpush1.msra.mxu0 %v2533
        %2535 = vmatprep.subr.mxu0 0.0
        %2536 = vmatpush2.msra.mxu0 0.0
        %2537 = vmatprep.subr.mxu0 0.0
        %2538 = vmatpush2.msra.mxu0 0.0
        %2539 = vmatprep.subr.mxu0 0.0
        %2540 = vmatpush2.msra.mxu0 0.0
        %2541 = vmatprep.subr.mxu0 0.0
        %2542 = vmatpush2.msra.mxu0 0.0
        %2543 = vmatprep.subr.mxu0 0.0
        %2544 = vmatpush2.msra.mxu0 0.0
        %2545 = vmatprep.subr.mxu0 0.0
        %2546 = vmatpush2.msra.mxu0 0.0
        %2547 = vmatprep.subr.mxu0 0.0
        %2548 = vmatpush2.msra.mxu0 0.0
        %2549 = vmatprep.subr.mxu0 0.0
        %2550 = vmatpush2.msra.mxu0 0.0
        %2551 = vmatprep.subr.mxu0 0.0
        %2552 = vmatpush2.msra.mxu0 0.0
        %2553 = vmatprep.subr.mxu0 0.0
        %2554 = vmatpush2.msra.mxu0 0.0
        %2555 = vmatprep.subr.mxu0 0.0
        %2556 = vmatpush2.msra.mxu0 0.0
        %2557 = vmatprep.subr.mxu0 0.0
        %2558 = vmatpush2.msra.mxu0 0.0
        %2559 = vmatprep.subr.mxu0 0.0
        %2560 = vmatpush2.msra.mxu0 0.0
        %2561 = vmatprep.subr.mxu0 0.0
        %2562 = vmatpush2.msra.mxu0 0.0
        %2563 = vmatprep.subr.mxu0 0.0
        %2564 = vmatpush2.msra.mxu0 0.0
        %2565 = vmatprep.subr.mxu0 0.0
        %2566 = vmatpush2.msra.mxu0 0.0
        %2567 = vmatprep.mubr.f32.mxu0 0.0
        %v2568 = vand.u32 %v339, 4294901760
        %2569 = vmatmul.mubr.f32.gmra.mxu0 %v2568
        %v2570 = vpop.f32.mrf.mxu0
        %v2571 = vadd.f32 %v2472, %v2570
        %v2572 = vpop.f32.mrf.mxu0
        %v2573 = vadd.f32 %v2474, %v2572
        %2574 = vmatprep.mubr.f32.mxu0 0.0
        %v2575 = vand.u32 %v342, 4294901760
        %2576 = vmatmul.mubr.f32.gmra.mxu0 %v2575
        %v2577 = vpop.f32.mrf.mxu0
        %v2578 = vadd.f32 %v2481, %v2577
        %v2579 = vpop.f32.mrf.mxu0
        %v2580 = vadd.f32 %v2483, %v2579
        %2581 = vdwg.mxu0
        %2582 = vmatprep.subr.mxu0 0.0
        %2583 = vmatpush1.msra.mxu0 0.0
        %2584 = vmatprep.subr.mxu0 0.0
        %2585 = vmatpush1.msra.mxu0 0.0
        %2586 = vmatprep.subr.mxu0 0.0
        %2587 = vmatpush1.msra.mxu0 0.0
        %2588 = vmatprep.subr.mxu0 0.0
        %2589 = vmatpush1.msra.mxu0 0.0
        %2590 = vmatprep.subr.mxu0 0.0
        %2591 = vmatpush1.msra.mxu0 0.0
        %2592 = vmatprep.subr.mxu0 0.0
        %2593 = vmatpush1.msra.mxu0 0.0
        %2594 = vmatprep.subr.mxu0 0.0
        %2595 = vmatpush1.msra.mxu0 0.0
        %2596 = vmatprep.subr.mxu0 0.0
        %2597 = vmatpush1.msra.mxu0 0.0
        %2598 = vmatprep.subr.mxu0 0.0
        %2599 = vmatpush1.msra.mxu0 0.0
        %2600 = vmatprep.subr.mxu0 0.0
        %2601 = vmatpush1.msra.mxu0 0.0
        %2602 = vmatprep.subr.mxu0 0.0
        %2603 = vmatpush1.msra.mxu0 0.0
        %2604 = vmatprep.subr.mxu0 0.0
        %2605 = vmatpush1.msra.mxu0 0.0
        %2606 = vmatprep.subr.mxu0 0.0
        %2607 = vmatpush1.msra.mxu0 0.0
        %v2608 = vand.u32 %v937, 4294901760
        %2609 = vmatprep.subr.mxu0 %v2608
        %v2610 = vand.u32 %v934, 4294901760
        %2611 = vmatpush1.msra.mxu0 %v2610
        %v2612 = vand.u32 %v884, 4294901760
        %2613 = vmatprep.subr.mxu0 %v2612
        %v2614 = vand.u32 %v883, 4294901760
        %2615 = vmatpush1.msra.mxu0 %v2614
        %v2616 = vand.u32 %v868, 4294901760
        %2617 = vmatprep.subr.mxu0 %v2616
        %v2618 = vand.u32 %v867, 4294901760
        %2619 = vmatpush1.msra.mxu0 %v2618
        %2620 = vmatprep.subr.mxu0 0.0
        %2621 = vmatpush2.msra.mxu0 0.0
        %2622 = vmatprep.subr.mxu0 0.0
        %2623 = vmatpush2.msra.mxu0 0.0
        %2624 = vmatprep.subr.mxu0 0.0
        %2625 = vmatpush2.msra.mxu0 0.0
        %2626 = vmatprep.subr.mxu0 0.0
        %2627 = vmatpush2.msra.mxu0 0.0
        %2628 = vmatprep.subr.mxu0 0.0
        %2629 = vmatpush2.msra.mxu0 0.0
        %2630 = vmatprep.subr.mxu0 0.0
        %2631 = vmatpush2.msra.mxu0 0.0
        %2632 = vmatprep.subr.mxu0 0.0
        %2633 = vmatpush2.msra.mxu0 0.0
        %2634 = vmatprep.subr.mxu0 0.0
        %2635 = vmatpush2.msra.mxu0 0.0
        %2636 = vmatprep.subr.mxu0 0.0
        %2637 = vmatpush2.msra.mxu0 0.0
        %2638 = vmatprep.subr.mxu0 0.0
        %2639 = vmatpush2.msra.mxu0 0.0
        %2640 = vmatprep.subr.mxu0 0.0
        %2641 = vmatpush2.msra.mxu0 0.0
        %2642 = vmatprep.subr.mxu0 0.0
        %2643 = vmatpush2.msra.mxu0 0.0
        %2644 = vmatprep.subr.mxu0 0.0
        %2645 = vmatpush2.msra.mxu0 0.0
        %2646 = vmatprep.subr.mxu0 0.0
        %2647 = vmatpush2.msra.mxu0 0.0
        %2648 = vmatprep.subr.mxu0 0.0
        %2649 = vmatpush2.msra.mxu0 0.0
        %2650 = vmatprep.subr.mxu0 0.0
        %2651 = vmatpush2.msra.mxu0 0.0
        %2652 = vmatprep.mubr.f32.mxu0 0.0
        %v2653 = vand.u32 %v339, 4294901760
        %2654 = vmatmul.mubr.f32.gmra.mxu0 %v2653
        %v2655 = vpop.f32.mrf.mxu0
        %v2656 = vadd.f32 %v2571, %v2655
        %v2657 = vpop.f32.mrf.mxu0
        %v2658 = vadd.f32 %v2573, %v2657
        %2659 = vmatprep.mubr.f32.mxu0 0.0
        %v2660 = vand.u32 %v342, 4294901760
        %2661 = vmatmul.mubr.f32.gmra.mxu0 %v2660
        %v2662 = vpop.f32.mrf.mxu0
        %v2663 = vadd.f32 %v2578, %v2662
        %v2664 = vpop.f32.mrf.mxu0
        %v2665 = vadd.f32 %v2580, %v2664
        %2666 = vdwg.mxu0
        %2667 = vmatprep.subr.mxu0 0.0
        %2668 = vmatpush1.msra.mxu0 0.0
        %2669 = vmatprep.subr.mxu0 0.0
        %2670 = vmatpush1.msra.mxu0 0.0
        %2671 = vmatprep.subr.mxu0 0.0
        %2672 = vmatpush1.msra.mxu0 0.0
        %2673 = vmatprep.subr.mxu0 0.0
        %2674 = vmatpush1.msra.mxu0 0.0
        %2675 = vmatprep.subr.mxu0 0.0
        %2676 = vmatpush1.msra.mxu0 0.0
        %2677 = vmatprep.subr.mxu0 0.0
        %2678 = vmatpush1.msra.mxu0 0.0
        %2679 = vmatprep.subr.mxu0 0.0
        %2680 = vmatpush1.msra.mxu0 0.0
        %2681 = vmatprep.subr.mxu0 0.0
        %2682 = vmatpush1.msra.mxu0 0.0
        %2683 = vmatprep.subr.mxu0 0.0
        %2684 = vmatpush1.msra.mxu0 0.0
        %2685 = vmatprep.subr.mxu0 0.0
        %2686 = vmatpush1.msra.mxu0 0.0
        %2687 = vmatprep.subr.mxu0 0.0
        %2688 = vmatpush1.msra.mxu0 0.0
        %2689 = vmatprep.subr.mxu0 0.0
        %2690 = vmatpush1.msra.mxu0 0.0
        %2691 = vmatprep.subr.mxu0 0.0
        %2692 = vmatpush1.msra.mxu0 0.0
        %v2693 = vand.u32 %v943, 4294901760
        %2694 = vmatprep.subr.mxu0 %v2693
        %v2695 = vand.u32 %v940, 4294901760
        %2696 = vmatpush1.msra.mxu0 %v2695
        %v2697 = vand.u32 %v886, 4294901760
        %2698 = vmatprep.subr.mxu0 %v2697
        %v2699 = vand.u32 %v885, 4294901760
        %2700 = vmatpush1.msra.mxu0 %v2699
        %v2701 = vand.u32 %v870, 4294901760
        %2702 = vmatprep.subr.mxu0 %v2701
        %v2703 = vand.u32 %v869, 4294901760
        %2704 = vmatpush1.msra.mxu0 %v2703
        %2705 = vmatprep.subr.mxu0 0.0
        %2706 = vmatpush2.msra.mxu0 0.0
        %2707 = vmatprep.subr.mxu0 0.0
        %2708 = vmatpush2.msra.mxu0 0.0
        %2709 = vmatprep.subr.mxu0 0.0
        %2710 = vmatpush2.msra.mxu0 0.0
        %2711 = vmatprep.subr.mxu0 0.0
        %2712 = vmatpush2.msra.mxu0 0.0
        %2713 = vmatprep.subr.mxu0 0.0
        %2714 = vmatpush2.msra.mxu0 0.0
        %2715 = vmatprep.subr.mxu0 0.0
        %2716 = vmatpush2.msra.mxu0 0.0
        %2717 = vmatprep.subr.mxu0 0.0
        %2718 = vmatpush2.msra.mxu0 0.0
        %2719 = vmatprep.subr.mxu0 0.0
        %2720 = vmatpush2.msra.mxu0 0.0
        %2721 = vmatprep.subr.mxu0 0.0
        %2722 = vmatpush2.msra.mxu0 0.0
        %2723 = vmatprep.subr.mxu0 0.0
        %2724 = vmatpush2.msra.mxu0 0.0
        %2725 = vmatprep.subr.mxu0 0.0
        %2726 = vmatpush2.msra.mxu0 0.0
        %2727 = vmatprep.subr.mxu0 0.0
        %2728 = vmatpush2.msra.mxu0 0.0
        %2729 = vmatprep.subr.mxu0 0.0
        %2730 = vmatpush2.msra.mxu0 0.0
        %2731 = vmatprep.subr.mxu0 0.0
        %2732 = vmatpush2.msra.mxu0 0.0
        %2733 = vmatprep.subr.mxu0 0.0
        %2734 = vmatpush2.msra.mxu0 0.0
        %2735 = vmatprep.subr.mxu0 0.0
        %2736 = vmatpush2.msra.mxu0 0.0
        %2737 = vmatprep.mubr.f32.mxu0 0.0
        %v2738 = vand.u32 %v339, 4294901760
        %v2739 = vsub.f32 %v339, %v2738
        %v2740 = vand.u32 %v2739, 4294901760
        %v2741 = vsub.f32 %v2739, %v2740
        %v2742 = vand.u32 %v2741, 4294901760
        %2743 = vmatmul.mubr.f32.gmra.mxu0 %v2742
        %v2744 = vpop.f32.mrf.mxu0
        %v2745 = vadd.f32 %v914, %v2744
        %v2746 = vpop.f32.mrf.mxu0
        %v2747 = vadd.f32 %v914, %v2746
        %2748 = vmatprep.mubr.f32.mxu0 0.0
        %v2749 = vand.u32 %v342, 4294901760
        %v2750 = vsub.f32 %v342, %v2749
        %v2751 = vand.u32 %v2750, 4294901760
        %v2752 = vsub.f32 %v2750, %v2751
        %v2753 = vand.u32 %v2752, 4294901760
        %2754 = vmatmul.mubr.f32.gmra.mxu0 %v2753
        %v2755 = vpop.f32.mrf.mxu0
        %v2756 = vadd.f32 %v919, %v2755
        %v2757 = vpop.f32.mrf.mxu0
        %v2758 = vadd.f32 %v919, %v2757
        %2759 = vdwg.mxu0
        %2760 = vmatprep.subr.mxu0 0.0
        %2761 = vmatpush1.msra.mxu0 0.0
        %2762 = vmatprep.subr.mxu0 0.0
        %2763 = vmatpush1.msra.mxu0 0.0
        %2764 = vmatprep.subr.mxu0 0.0
        %2765 = vmatpush1.msra.mxu0 0.0
        %2766 = vmatprep.subr.mxu0 0.0
        %2767 = vmatpush1.msra.mxu0 0.0
        %2768 = vmatprep.subr.mxu0 0.0
        %2769 = vmatpush1.msra.mxu0 0.0
        %2770 = vmatprep.subr.mxu0 0.0
        %2771 = vmatpush1.msra.mxu0 0.0
        %2772 = vmatprep.subr.mxu0 0.0
        %2773 = vmatpush1.msra.mxu0 0.0
        %2774 = vmatprep.subr.mxu0 0.0
        %2775 = vmatpush1.msra.mxu0 0.0
        %2776 = vmatprep.subr.mxu0 0.0
        %2777 = vmatpush1.msra.mxu0 0.0
        %2778 = vmatprep.subr.mxu0 0.0
        %2779 = vmatpush1.msra.mxu0 0.0
        %2780 = vmatprep.subr.mxu0 0.0
        %2781 = vmatpush1.msra.mxu0 0.0
        %2782 = vmatprep.subr.mxu0 0.0
        %2783 = vmatpush1.msra.mxu0 0.0
        %2784 = vmatprep.subr.mxu0 0.0
        %2785 = vmatpush1.msra.mxu0 0.0
        %v2786 = vand.u32 %v943, 4294901760
        %v2787 = vsub.f32 %v943, %v2786
        %v2788 = vand.u32 %v2787, 4294901760
        %v2789 = vsub.f32 %v2787, %v2788
        %v2790 = vand.u32 %v2789, 4294901760
        %2791 = vmatprep.subr.mxu0 %v2790
        %v2792 = vand.u32 %v940, 4294901760
        %v2793 = vsub.f32 %v940, %v2792
        %v2794 = vand.u32 %v2793, 4294901760
        %v2795 = vsub.f32 %v2793, %v2794
        %v2796 = vand.u32 %v2795, 4294901760
        %2797 = vmatpush1.msra.mxu0 %v2796
        %v2798 = vand.u32 %v886, 4294901760
        %v2799 = vsub.f32 %v886, %v2798
        %v2800 = vand.u32 %v2799, 4294901760
        %v2801 = vsub.f32 %v2799, %v2800
        %v2802 = vand.u32 %v2801, 4294901760
        %2803 = vmatprep.subr.mxu0 %v2802
        %v2804 = vand.u32 %v885, 4294901760
        %v2805 = vsub.f32 %v885, %v2804
        %v2806 = vand.u32 %v2805, 4294901760
        %v2807 = vsub.f32 %v2805, %v2806
        %v2808 = vand.u32 %v2807, 4294901760
        %2809 = vmatpush1.msra.mxu0 %v2808
        %v2810 = vand.u32 %v870, 4294901760
        %v2811 = vsub.f32 %v870, %v2810
        %v2812 = vand.u32 %v2811, 4294901760
        %v2813 = vsub.f32 %v2811, %v2812
        %v2814 = vand.u32 %v2813, 4294901760
        %2815 = vmatprep.subr.mxu0 %v2814
        %v2816 = vand.u32 %v869, 4294901760
        %v2817 = vsub.f32 %v869, %v2816
        %v2818 = vand.u32 %v2817, 4294901760
        %v2819 = vsub.f32 %v2817, %v2818
        %v2820 = vand.u32 %v2819, 4294901760
        %2821 = vmatpush1.msra.mxu0 %v2820
        %2822 = vmatprep.subr.mxu0 0.0
        %2823 = vmatpush2.msra.mxu0 0.0
        %2824 = vmatprep.subr.mxu0 0.0
        %2825 = vmatpush2.msra.mxu0 0.0
        %2826 = vmatprep.subr.mxu0 0.0
        %2827 = vmatpush2.msra.mxu0 0.0
        %2828 = vmatprep.subr.mxu0 0.0
        %2829 = vmatpush2.msra.mxu0 0.0
        %2830 = vmatprep.subr.mxu0 0.0
        %2831 = vmatpush2.msra.mxu0 0.0
        %2832 = vmatprep.subr.mxu0 0.0
        %2833 = vmatpush2.msra.mxu0 0.0
        %2834 = vmatprep.subr.mxu0 0.0
        %2835 = vmatpush2.msra.mxu0 0.0
        %2836 = vmatprep.subr.mxu0 0.0
        %2837 = vmatpush2.msra.mxu0 0.0
        %2838 = vmatprep.subr.mxu0 0.0
        %2839 = vmatpush2.msra.mxu0 0.0
        %2840 = vmatprep.subr.mxu0 0.0
        %2841 = vmatpush2.msra.mxu0 0.0
        %2842 = vmatprep.subr.mxu0 0.0
        %2843 = vmatpush2.msra.mxu0 0.0
        %2844 = vmatprep.subr.mxu0 0.0
        %2845 = vmatpush2.msra.mxu0 0.0
        %2846 = vmatprep.subr.mxu0 0.0
        %2847 = vmatpush2.msra.mxu0 0.0
        %2848 = vmatprep.subr.mxu0 0.0
        %2849 = vmatpush2.msra.mxu0 0.0
        %2850 = vmatprep.subr.mxu0 0.0
        %2851 = vmatpush2.msra.mxu0 0.0
        %2852 = vmatprep.subr.mxu0 0.0
        %2853 = vmatpush2.msra.mxu0 0.0
        %2854 = vmatprep.mubr.f32.mxu0 0.0
        %v2855 = vand.u32 %v339, 4294901760
        %2856 = vmatmul.mubr.f32.gmra.mxu0 %v2855
        %v2857 = vpop.f32.mrf.mxu0
        %v2858 = vadd.f32 %v2745, %v2857
        %v2859 = vpop.f32.mrf.mxu0
        %v2860 = vadd.f32 %v2747, %v2859
        %2861 = vmatprep.mubr.f32.mxu0 0.0
        %v2862 = vand.u32 %v342, 4294901760
        %2863 = vmatmul.mubr.f32.gmra.mxu0 %v2862
        %v2864 = vpop.f32.mrf.mxu0
        %v2865 = vadd.f32 %v2756, %v2864
        %v2866 = vpop.f32.mrf.mxu0
        %v2867 = vadd.f32 %v2758, %v2866
        %2868 = vdwg.mxu0
        %2869 = vmatprep.subr.mxu0 0.0
        %2870 = vmatpush1.msra.mxu0 0.0
        %2871 = vmatprep.subr.mxu0 0.0
        %2872 = vmatpush1.msra.mxu0 0.0
        %2873 = vmatprep.subr.mxu0 0.0
        %2874 = vmatpush1.msra.mxu0 0.0
        %2875 = vmatprep.subr.mxu0 0.0
        %2876 = vmatpush1.msra.mxu0 0.0
        %2877 = vmatprep.subr.mxu0 0.0
        %2878 = vmatpush1.msra.mxu0 0.0
        %2879 = vmatprep.subr.mxu0 0.0
        %2880 = vmatpush1.msra.mxu0 0.0
        %2881 = vmatprep.subr.mxu0 0.0
        %2882 = vmatpush1.msra.mxu0 0.0
        %2883 = vmatprep.subr.mxu0 0.0
        %2884 = vmatpush1.msra.mxu0 0.0
        %2885 = vmatprep.subr.mxu0 0.0
        %2886 = vmatpush1.msra.mxu0 0.0
        %2887 = vmatprep.subr.mxu0 0.0
        %2888 = vmatpush1.msra.mxu0 0.0
        %2889 = vmatprep.subr.mxu0 0.0
        %2890 = vmatpush1.msra.mxu0 0.0
        %2891 = vmatprep.subr.mxu0 0.0
        %2892 = vmatpush1.msra.mxu0 0.0
        %2893 = vmatprep.subr.mxu0 0.0
        %2894 = vmatpush1.msra.mxu0 0.0
        %v2895 = vand.u32 %v943, 4294901760
        %v2896 = vsub.f32 %v943, %v2895
        %2897 = vmatprep.subr.mxu0 %v2896
        %v2898 = vand.u32 %v940, 4294901760
        %v2899 = vsub.f32 %v940, %v2898
        %2900 = vmatpush1.msra.mxu0 %v2899
        %v2901 = vand.u32 %v886, 4294901760
        %v2902 = vsub.f32 %v886, %v2901
        %2903 = vmatprep.subr.mxu0 %v2902
        %v2904 = vand.u32 %v885, 4294901760
        %v2905 = vsub.f32 %v885, %v2904
        %2906 = vmatpush1.msra.mxu0 %v2905
        %v2907 = vand.u32 %v870, 4294901760
        %v2908 = vsub.f32 %v870, %v2907
        %2909 = vmatprep.subr.mxu0 %v2908
        %v2910 = vand.u32 %v869, 4294901760
        %v2911 = vsub.f32 %v869, %v2910
        %2912 = vmatpush1.msra.mxu0 %v2911
        %2913 = vmatprep.subr.mxu0 0.0
        %2914 = vmatpush2.msra.mxu0 0.0
        %2915 = vmatprep.subr.mxu0 0.0
        %2916 = vmatpush2.msra.mxu0 0.0
        %2917 = vmatprep.subr.mxu0 0.0
        %2918 = vmatpush2.msra.mxu0 0.0
        %2919 = vmatprep.subr.mxu0 0.0
        %2920 = vmatpush2.msra.mxu0 0.0
        %2921 = vmatprep.subr.mxu0 0.0
        %2922 = vmatpush2.msra.mxu0 0.0
        %2923 = vmatprep.subr.mxu0 0.0
        %2924 = vmatpush2.msra.mxu0 0.0
        %2925 = vmatprep.subr.mxu0 0.0
        %2926 = vmatpush2.msra.mxu0 0.0
        %2927 = vmatprep.subr.mxu0 0.0
        %2928 = vmatpush2.msra.mxu0 0.0
        %2929 = vmatprep.subr.mxu0 0.0
        %2930 = vmatpush2.msra.mxu0 0.0
        %2931 = vmatprep.subr.mxu0 0.0
        %2932 = vmatpush2.msra.mxu0 0.0
        %2933 = vmatprep.subr.mxu0 0.0
        %2934 = vmatpush2.msra.mxu0 0.0
        %2935 = vmatprep.subr.mxu0 0.0
        %2936 = vmatpush2.msra.mxu0 0.0
        %2937 = vmatprep.subr.mxu0 0.0
        %2938 = vmatpush2.msra.mxu0 0.0
        %2939 = vmatprep.subr.mxu0 0.0
        %2940 = vmatpush2.msra.mxu0 0.0
        %2941 = vmatprep.subr.mxu0 0.0
        %2942 = vmatpush2.msra.mxu0 0.0
        %2943 = vmatprep.subr.mxu0 0.0
        %2944 = vmatpush2.msra.mxu0 0.0
        %2945 = vmatprep.mubr.f32.mxu0 0.0
        %v2946 = vand.u32 %v339, 4294901760
        %v2947 = vsub.f32 %v339, %v2946
        %2948 = vmatmul.mubr.f32.gmra.mxu0 %v2947
        %v2949 = vpop.f32.mrf.mxu0
        %v2950 = vadd.f32 %v2858, %v2949
        %v2951 = vpop.f32.mrf.mxu0
        %v2952 = vadd.f32 %v2860, %v2951
        %2953 = vmatprep.mubr.f32.mxu0 0.0
        %v2954 = vand.u32 %v342, 4294901760
        %v2955 = vsub.f32 %v342, %v2954
        %2956 = vmatmul.mubr.f32.gmra.mxu0 %v2955
        %v2957 = vpop.f32.mrf.mxu0
        %v2958 = vadd.f32 %v2865, %v2957
        %v2959 = vpop.f32.mrf.mxu0
        %v2960 = vadd.f32 %v2867, %v2959
        %2961 = vdwg.mxu0
        %2962 = vmatprep.subr.mxu0 0.0
        %2963 = vmatpush1.msra.mxu0 0.0
        %2964 = vmatprep.subr.mxu0 0.0
        %2965 = vmatpush1.msra.mxu0 0.0
        %2966 = vmatprep.subr.mxu0 0.0
        %2967 = vmatpush1.msra.mxu0 0.0
        %2968 = vmatprep.subr.mxu0 0.0
        %2969 = vmatpush1.msra.mxu0 0.0
        %2970 = vmatprep.subr.mxu0 0.0
        %2971 = vmatpush1.msra.mxu0 0.0
        %2972 = vmatprep.subr.mxu0 0.0
        %2973 = vmatpush1.msra.mxu0 0.0
        %2974 = vmatprep.subr.mxu0 0.0
        %2975 = vmatpush1.msra.mxu0 0.0
        %2976 = vmatprep.subr.mxu0 0.0
        %2977 = vmatpush1.msra.mxu0 0.0
        %2978 = vmatprep.subr.mxu0 0.0
        %2979 = vmatpush1.msra.mxu0 0.0
        %2980 = vmatprep.subr.mxu0 0.0
        %2981 = vmatpush1.msra.mxu0 0.0
        %2982 = vmatprep.subr.mxu0 0.0
        %2983 = vmatpush1.msra.mxu0 0.0
        %2984 = vmatprep.subr.mxu0 0.0
        %2985 = vmatpush1.msra.mxu0 0.0
        %2986 = vmatprep.subr.mxu0 0.0
        %2987 = vmatpush1.msra.mxu0 0.0
        %v2988 = vand.u32 %v943, 4294901760
        %2989 = vmatprep.subr.mxu0 %v2988
        %v2990 = vand.u32 %v940, 4294901760
        %2991 = vmatpush1.msra.mxu0 %v2990
        %v2992 = vand.u32 %v886, 4294901760
        %2993 = vmatprep.subr.mxu0 %v2992
        %v2994 = vand.u32 %v885, 4294901760
        %2995 = vmatpush1.msra.mxu0 %v2994
        %v2996 = vand.u32 %v870, 4294901760
        %2997 = vmatprep.subr.mxu0 %v2996
        %v2998 = vand.u32 %v869, 4294901760
        %2999 = vmatpush1.msra.mxu0 %v2998
        %3000 = vmatprep.subr.mxu0 0.0
        %3001 = vmatpush2.msra.mxu0 0.0
        %3002 = vmatprep.subr.mxu0 0.0
        %3003 = vmatpush2.msra.mxu0 0.0
        %3004 = vmatprep.subr.mxu0 0.0
        %3005 = vmatpush2.msra.mxu0 0.0
        %3006 = vmatprep.subr.mxu0 0.0
        %3007 = vmatpush2.msra.mxu0 0.0
        %3008 = vmatprep.subr.mxu0 0.0
        %3009 = vmatpush2.msra.mxu0 0.0
        %3010 = vmatprep.subr.mxu0 0.0
        %3011 = vmatpush2.msra.mxu0 0.0
        %3012 = vmatprep.subr.mxu0 0.0
        %3013 = vmatpush2.msra.mxu0 0.0
        %3014 = vmatprep.subr.mxu0 0.0
        %3015 = vmatpush2.msra.mxu0 0.0
        %3016 = vmatprep.subr.mxu0 0.0
        %3017 = vmatpush2.msra.mxu0 0.0
        %3018 = vmatprep.subr.mxu0 0.0
        %3019 = vmatpush2.msra.mxu0 0.0
        %3020 = vmatprep.subr.mxu0 0.0
        %3021 = vmatpush2.msra.mxu0 0.0
        %3022 = vmatprep.subr.mxu0 0.0
        %3023 = vmatpush2.msra.mxu0 0.0
        %3024 = vmatprep.subr.mxu0 0.0
        %3025 = vmatpush2.msra.mxu0 0.0
        %3026 = vmatprep.subr.mxu0 0.0
        %3027 = vmatpush2.msra.mxu0 0.0
        %3028 = vmatprep.subr.mxu0 0.0
        %3029 = vmatpush2.msra.mxu0 0.0
        %3030 = vmatprep.subr.mxu0 0.0
        %3031 = vmatpush2.msra.mxu0 0.0
        %3032 = vmatprep.mubr.f32.mxu0 0.0
        %v3033 = vand.u32 %v339, 4294901760
        %v3034 = vsub.f32 %v339, %v3033
        %v3035 = vand.u32 %v3034, 4294901760
        %3036 = vmatmul.mubr.f32.gmra.mxu0 %v3035
        %v3037 = vpop.f32.mrf.mxu0
        %v3038 = vadd.f32 %v2950, %v3037
        %v3039 = vpop.f32.mrf.mxu0
        %v3040 = vadd.f32 %v2952, %v3039
        %3041 = vmatprep.mubr.f32.mxu0 0.0
        %v3042 = vand.u32 %v342, 4294901760
        %v3043 = vsub.f32 %v342, %v3042
        %v3044 = vand.u32 %v3043, 4294901760
        %3045 = vmatmul.mubr.f32.gmra.mxu0 %v3044
        %v3046 = vpop.f32.mrf.mxu0
        %v3047 = vadd.f32 %v2958, %v3046
        %v3048 = vpop.f32.mrf.mxu0
        %v3049 = vadd.f32 %v2960, %v3048
        %3050 = vdwg.mxu0
        %3051 = vmatprep.subr.mxu0 0.0
        %3052 = vmatpush1.msra.mxu0 0.0
        %3053 = vmatprep.subr.mxu0 0.0
        %3054 = vmatpush1.msra.mxu0 0.0
        %3055 = vmatprep.subr.mxu0 0.0
        %3056 = vmatpush1.msra.mxu0 0.0
        %3057 = vmatprep.subr.mxu0 0.0
        %3058 = vmatpush1.msra.mxu0 0.0
        %3059 = vmatprep.subr.mxu0 0.0
        %3060 = vmatpush1.msra.mxu0 0.0
        %3061 = vmatprep.subr.mxu0 0.0
        %3062 = vmatpush1.msra.mxu0 0.0
        %3063 = vmatprep.subr.mxu0 0.0
        %3064 = vmatpush1.msra.mxu0 0.0
        %3065 = vmatprep.subr.mxu0 0.0
        %3066 = vmatpush1.msra.mxu0 0.0
        %3067 = vmatprep.subr.mxu0 0.0
        %3068 = vmatpush1.msra.mxu0 0.0
        %3069 = vmatprep.subr.mxu0 0.0
        %3070 = vmatpush1.msra.mxu0 0.0
        %3071 = vmatprep.subr.mxu0 0.0
        %3072 = vmatpush1.msra.mxu0 0.0
        %3073 = vmatprep.subr.mxu0 0.0
        %3074 = vmatpush1.msra.mxu0 0.0
        %3075 = vmatprep.subr.mxu0 0.0
        %3076 = vmatpush1.msra.mxu0 0.0
        %v3077 = vand.u32 %v943, 4294901760
        %v3078 = vsub.f32 %v943, %v3077
        %v3079 = vand.u32 %v3078, 4294901760
        %3080 = vmatprep.subr.mxu0 %v3079
        %v3081 = vand.u32 %v940, 4294901760
        %v3082 = vsub.f32 %v940, %v3081
        %v3083 = vand.u32 %v3082, 4294901760
        %3084 = vmatpush1.msra.mxu0 %v3083
        %v3085 = vand.u32 %v886, 4294901760
        %v3086 = vsub.f32 %v886, %v3085
        %v3087 = vand.u32 %v3086, 4294901760
        %3088 = vmatprep.subr.mxu0 %v3087
        %v3089 = vand.u32 %v885, 4294901760
        %v3090 = vsub.f32 %v885, %v3089
        %v3091 = vand.u32 %v3090, 4294901760
        %3092 = vmatpush1.msra.mxu0 %v3091
        %v3093 = vand.u32 %v870, 4294901760
        %v3094 = vsub.f32 %v870, %v3093
        %v3095 = vand.u32 %v3094, 4294901760
        %3096 = vmatprep.subr.mxu0 %v3095
        %v3097 = vand.u32 %v869, 4294901760
        %v3098 = vsub.f32 %v869, %v3097
        %v3099 = vand.u32 %v3098, 4294901760
        %3100 = vmatpush1.msra.mxu0 %v3099
        %3101 = vmatprep.subr.mxu0 0.0
        %3102 = vmatpush2.msra.mxu0 0.0
        %3103 = vmatprep.subr.mxu0 0.0
        %3104 = vmatpush2.msra.mxu0 0.0
        %3105 = vmatprep.subr.mxu0 0.0
        %3106 = vmatpush2.msra.mxu0 0.0
        %3107 = vmatprep.subr.mxu0 0.0
        %3108 = vmatpush2.msra.mxu0 0.0
        %3109 = vmatprep.subr.mxu0 0.0
        %3110 = vmatpush2.msra.mxu0 0.0
        %3111 = vmatprep.subr.mxu0 0.0
        %3112 = vmatpush2.msra.mxu0 0.0
        %3113 = vmatprep.subr.mxu0 0.0
        %3114 = vmatpush2.msra.mxu0 0.0
        %3115 = vmatprep.subr.mxu0 0.0
        %3116 = vmatpush2.msra.mxu0 0.0
        %3117 = vmatprep.subr.mxu0 0.0
        %3118 = vmatpush2.msra.mxu0 0.0
        %3119 = vmatprep.subr.mxu0 0.0
        %3120 = vmatpush2.msra.mxu0 0.0
        %3121 = vmatprep.subr.mxu0 0.0
        %3122 = vmatpush2.msra.mxu0 0.0
        %3123 = vmatprep.subr.mxu0 0.0
        %3124 = vmatpush2.msra.mxu0 0.0
        %3125 = vmatprep.subr.mxu0 0.0
        %3126 = vmatpush2.msra.mxu0 0.0
        %3127 = vmatprep.subr.mxu0 0.0
        %3128 = vmatpush2.msra.mxu0 0.0
        %3129 = vmatprep.subr.mxu0 0.0
        %3130 = vmatpush2.msra.mxu0 0.0
        %3131 = vmatprep.subr.mxu0 0.0
        %3132 = vmatpush2.msra.mxu0 0.0
        %3133 = vmatprep.mubr.f32.mxu0 0.0
        %v3134 = vand.u32 %v339, 4294901760
        %3135 = vmatmul.mubr.f32.gmra.mxu0 %v3134
        %v3136 = vpop.f32.mrf.mxu0
        %v3137 = vadd.f32 %v3038, %v3136
        %v3138 = vpop.f32.mrf.mxu0
        %v3139 = vadd.f32 %v3040, %v3138
        %3140 = vmatprep.mubr.f32.mxu0 0.0
        %v3141 = vand.u32 %v342, 4294901760
        %3142 = vmatmul.mubr.f32.gmra.mxu0 %v3141
        %v3143 = vpop.f32.mrf.mxu0
        %v3144 = vadd.f32 %v3047, %v3143
        %v3145 = vpop.f32.mrf.mxu0
        %v3146 = vadd.f32 %v3049, %v3145
        %3147 = vdwg.mxu0
        %3148 = vmatprep.subr.mxu0 0.0
        %3149 = vmatpush1.msra.mxu0 0.0
        %3150 = vmatprep.subr.mxu0 0.0
        %3151 = vmatpush1.msra.mxu0 0.0
        %3152 = vmatprep.subr.mxu0 0.0
        %3153 = vmatpush1.msra.mxu0 0.0
        %3154 = vmatprep.subr.mxu0 0.0
        %3155 = vmatpush1.msra.mxu0 0.0
        %3156 = vmatprep.subr.mxu0 0.0
        %3157 = vmatpush1.msra.mxu0 0.0
        %3158 = vmatprep.subr.mxu0 0.0
        %3159 = vmatpush1.msra.mxu0 0.0
        %3160 = vmatprep.subr.mxu0 0.0
        %3161 = vmatpush1.msra.mxu0 0.0
        %3162 = vmatprep.subr.mxu0 0.0
        %3163 = vmatpush1.msra.mxu0 0.0
        %3164 = vmatprep.subr.mxu0 0.0
        %3165 = vmatpush1.msra.mxu0 0.0
        %3166 = vmatprep.subr.mxu0 0.0
        %3167 = vmatpush1.msra.mxu0 0.0
        %3168 = vmatprep.subr.mxu0 0.0
        %3169 = vmatpush1.msra.mxu0 0.0
        %3170 = vmatprep.subr.mxu0 0.0
        %3171 = vmatpush1.msra.mxu0 0.0
        %3172 = vmatprep.subr.mxu0 0.0
        %3173 = vmatpush1.msra.mxu0 0.0
        %v3174 = vand.u32 %v943, 4294901760
        %3175 = vmatprep.subr.mxu0 %v3174
        %v3176 = vand.u32 %v940, 4294901760
        %3177 = vmatpush1.msra.mxu0 %v3176
        %v3178 = vand.u32 %v886, 4294901760
        %3179 = vmatprep.subr.mxu0 %v3178
        %v3180 = vand.u32 %v885, 4294901760
        %3181 = vmatpush1.msra.mxu0 %v3180
        %v3182 = vand.u32 %v870, 4294901760
        %3183 = vmatprep.subr.mxu0 %v3182
        %v3184 = vand.u32 %v869, 4294901760
        %3185 = vmatpush1.msra.mxu0 %v3184
        %3186 = vmatprep.subr.mxu0 0.0
        %3187 = vmatpush2.msra.mxu0 0.0
        %3188 = vmatprep.subr.mxu0 0.0
        %3189 = vmatpush2.msra.mxu0 0.0
        %3190 = vmatprep.subr.mxu0 0.0
        %3191 = vmatpush2.msra.mxu0 0.0
        %3192 = vmatprep.subr.mxu0 0.0
        %3193 = vmatpush2.msra.mxu0 0.0
        %3194 = vmatprep.subr.mxu0 0.0
        %3195 = vmatpush2.msra.mxu0 0.0
        %3196 = vmatprep.subr.mxu0 0.0
        %3197 = vmatpush2.msra.mxu0 0.0
        %3198 = vmatprep.subr.mxu0 0.0
        %3199 = vmatpush2.msra.mxu0 0.0
        %3200 = vmatprep.subr.mxu0 0.0
        %3201 = vmatpush2.msra.mxu0 0.0
        %3202 = vmatprep.subr.mxu0 0.0
        %3203 = vmatpush2.msra.mxu0 0.0
        %3204 = vmatprep.subr.mxu0 0.0
        %3205 = vmatpush2.msra.mxu0 0.0
        %3206 = vmatprep.subr.mxu0 0.0
        %3207 = vmatpush2.msra.mxu0 0.0
        %3208 = vmatprep.subr.mxu0 0.0
        %3209 = vmatpush2.msra.mxu0 0.0
        %3210 = vmatprep.subr.mxu0 0.0
        %3211 = vmatpush2.msra.mxu0 0.0
        %3212 = vmatprep.subr.mxu0 0.0
        %3213 = vmatpush2.msra.mxu0 0.0
        %3214 = vmatprep.subr.mxu0 0.0
        %3215 = vmatpush2.msra.mxu0 0.0
        %3216 = vmatprep.subr.mxu0 0.0
        %3217 = vmatpush2.msra.mxu0 0.0
        %3218 = vmatprep.mubr.f32.mxu0 0.0
        %v3219 = vand.u32 %v339, 4294901760
        %3220 = vmatmul.mubr.f32.gmra.mxu0 %v3219
        %v3221 = vpop.f32.mrf.mxu0
        %v3222 = vadd.f32 %v3137, %v3221
        %v3223 = vpop.f32.mrf.mxu0
        %v3224 = vadd.f32 %v3139, %v3223
        %3225 = vmatprep.mubr.f32.mxu0 0.0
        %v3226 = vand.u32 %v342, 4294901760
        %3227 = vmatmul.mubr.f32.gmra.mxu0 %v3226
        %v3228 = vpop.f32.mrf.mxu0
        %v3229 = vadd.f32 %v3144, %v3228
        %v3230 = vpop.f32.mrf.mxu0
        %v3231 = vadd.f32 %v3146, %v3230
        %3232 = vdwg.mxu0
        %3233 = vmatprep.subr.mxu0 0.0
        %3234 = vmatpush1.msra.mxu0 0.0
        %3235 = vmatprep.subr.mxu0 0.0
        %3236 = vmatpush1.msra.mxu0 0.0
        %3237 = vmatprep.subr.mxu0 0.0
        %3238 = vmatpush1.msra.mxu0 0.0
        %3239 = vmatprep.subr.mxu0 0.0
        %3240 = vmatpush1.msra.mxu0 0.0
        %3241 = vmatprep.subr.mxu0 0.0
        %3242 = vmatpush1.msra.mxu0 0.0
        %3243 = vmatprep.subr.mxu0 0.0
        %3244 = vmatpush1.msra.mxu0 0.0
        %3245 = vmatprep.subr.mxu0 0.0
        %3246 = vmatpush1.msra.mxu0 0.0
        %3247 = vmatprep.subr.mxu0 0.0
        %3248 = vmatpush1.msra.mxu0 0.0
        %3249 = vmatprep.subr.mxu0 0.0
        %3250 = vmatpush1.msra.mxu0 0.0
        %3251 = vmatprep.subr.mxu0 0.0
        %3252 = vmatpush1.msra.mxu0 0.0
        %3253 = vmatprep.subr.mxu0 0.0
        %3254 = vmatpush1.msra.mxu0 0.0
        %3255 = vmatprep.subr.mxu0 0.0
        %3256 = vmatpush1.msra.mxu0 0.0
        %3257 = vmatprep.subr.mxu0 0.0
        %3258 = vmatpush1.msra.mxu0 0.0
        %v3259 = vand.u32 %v949, 4294901760
        %3260 = vmatprep.subr.mxu0 %v3259
        %v3261 = vand.u32 %v946, 4294901760
        %3262 = vmatpush1.msra.mxu0 %v3261
        %v3263 = vand.u32 %v888, 4294901760
        %3264 = vmatprep.subr.mxu0 %v3263
        %v3265 = vand.u32 %v887, 4294901760
        %3266 = vmatpush1.msra.mxu0 %v3265
        %v3267 = vand.u32 %v872, 4294901760
        %3268 = vmatprep.subr.mxu0 %v3267
        %v3269 = vand.u32 %v871, 4294901760
        %3270 = vmatpush1.msra.mxu0 %v3269
        %3271 = vmatprep.subr.mxu0 0.0
        %3272 = vmatpush2.msra.mxu0 0.0
        %3273 = vmatprep.subr.mxu0 0.0
        %3274 = vmatpush2.msra.mxu0 0.0
        %3275 = vmatprep.subr.mxu0 0.0
        %3276 = vmatpush2.msra.mxu0 0.0
        %3277 = vmatprep.subr.mxu0 0.0
        %3278 = vmatpush2.msra.mxu0 0.0
        %3279 = vmatprep.subr.mxu0 0.0
        %3280 = vmatpush2.msra.mxu0 0.0
        %3281 = vmatprep.subr.mxu0 0.0
        %3282 = vmatpush2.msra.mxu0 0.0
        %3283 = vmatprep.subr.mxu0 0.0
        %3284 = vmatpush2.msra.mxu0 0.0
        %3285 = vmatprep.subr.mxu0 0.0
        %3286 = vmatpush2.msra.mxu0 0.0
        %3287 = vmatprep.subr.mxu0 0.0
        %3288 = vmatpush2.msra.mxu0 0.0
        %3289 = vmatprep.subr.mxu0 0.0
        %3290 = vmatpush2.msra.mxu0 0.0
        %3291 = vmatprep.subr.mxu0 0.0
        %3292 = vmatpush2.msra.mxu0 0.0
        %3293 = vmatprep.subr.mxu0 0.0
        %3294 = vmatpush2.msra.mxu0 0.0
        %3295 = vmatprep.subr.mxu0 0.0
        %3296 = vmatpush2.msra.mxu0 0.0
        %3297 = vmatprep.subr.mxu0 0.0
        %3298 = vmatpush2.msra.mxu0 0.0
        %3299 = vmatprep.subr.mxu0 0.0
        %3300 = vmatpush2.msra.mxu0 0.0
        %3301 = vmatprep.subr.mxu0 0.0
        %3302 = vmatpush2.msra.mxu0 0.0
        %3303 = vmatprep.mubr.f32.mxu0 0.0
        %v3304 = vand.u32 %v339, 4294901760
        %v3305 = vsub.f32 %v339, %v3304
        %v3306 = vand.u32 %v3305, 4294901760
        %v3307 = vsub.f32 %v3305, %v3306
        %v3308 = vand.u32 %v3307, 4294901760
        %3309 = vmatmul.mubr.f32.gmra.mxu0 %v3308
        %v3310 = vpop.f32.mrf.mxu0
        %v3311 = vadd.f32 %v914, %v3310
        %v3312 = vpop.f32.mrf.mxu0
        %v3313 = vadd.f32 %v914, %v3312
        %3314 = vmatprep.mubr.f32.mxu0 0.0
        %v3315 = vand.u32 %v342, 4294901760
        %v3316 = vsub.f32 %v342, %v3315
        %v3317 = vand.u32 %v3316, 4294901760
        %v3318 = vsub.f32 %v3316, %v3317
        %v3319 = vand.u32 %v3318, 4294901760
        %3320 = vmatmul.mubr.f32.gmra.mxu0 %v3319
        %v3321 = vpop.f32.mrf.mxu0
        %v3322 = vadd.f32 %v919, %v3321
        %v3323 = vpop.f32.mrf.mxu0
        %v3324 = vadd.f32 %v919, %v3323
        %3325 = vdwg.mxu0
        %3326 = vmatprep.subr.mxu0 0.0
        %3327 = vmatpush1.msra.mxu0 0.0
        %3328 = vmatprep.subr.mxu0 0.0
        %3329 = vmatpush1.msra.mxu0 0.0
        %3330 = vmatprep.subr.mxu0 0.0
        %3331 = vmatpush1.msra.mxu0 0.0
        %3332 = vmatprep.subr.mxu0 0.0
        %3333 = vmatpush1.msra.mxu0 0.0
        %3334 = vmatprep.subr.mxu0 0.0
        %3335 = vmatpush1.msra.mxu0 0.0
        %3336 = vmatprep.subr.mxu0 0.0
        %3337 = vmatpush1.msra.mxu0 0.0
        %3338 = vmatprep.subr.mxu0 0.0
        %3339 = vmatpush1.msra.mxu0 0.0
        %3340 = vmatprep.subr.mxu0 0.0
        %3341 = vmatpush1.msra.mxu0 0.0
        %3342 = vmatprep.subr.mxu0 0.0
        %3343 = vmatpush1.msra.mxu0 0.0
        %3344 = vmatprep.subr.mxu0 0.0
        %3345 = vmatpush1.msra.mxu0 0.0
        %3346 = vmatprep.subr.mxu0 0.0
        %3347 = vmatpush1.msra.mxu0 0.0
        %3348 = vmatprep.subr.mxu0 0.0
        %3349 = vmatpush1.msra.mxu0 0.0
        %3350 = vmatprep.subr.mxu0 0.0
        %3351 = vmatpush1.msra.mxu0 0.0
        %v3352 = vand.u32 %v949, 4294901760
        %v3353 = vsub.f32 %v949, %v3352
        %v3354 = vand.u32 %v3353, 4294901760
        %v3355 = vsub.f32 %v3353, %v3354
        %v3356 = vand.u32 %v3355, 4294901760
        %3357 = vmatprep.subr.mxu0 %v3356
        %v3358 = vand.u32 %v946, 4294901760
        %v3359 = vsub.f32 %v946, %v3358
        %v3360 = vand.u32 %v3359, 4294901760
        %v3361 = vsub.f32 %v3359, %v3360
        %v3362 = vand.u32 %v3361, 4294901760
        %3363 = vmatpush1.msra.mxu0 %v3362
        %v3364 = vand.u32 %v888, 4294901760
        %v3365 = vsub.f32 %v888, %v3364
        %v3366 = vand.u32 %v3365, 4294901760
        %v3367 = vsub.f32 %v3365, %v3366
        %v3368 = vand.u32 %v3367, 4294901760
        %3369 = vmatprep.subr.mxu0 %v3368
        %v3370 = vand.u32 %v887, 4294901760
        %v3371 = vsub.f32 %v887, %v3370
        %v3372 = vand.u32 %v3371, 4294901760
        %v3373 = vsub.f32 %v3371, %v3372
        %v3374 = vand.u32 %v3373, 4294901760
        %3375 = vmatpush1.msra.mxu0 %v3374
        %v3376 = vand.u32 %v872, 4294901760
        %v3377 = vsub.f32 %v872, %v3376
        %v3378 = vand.u32 %v3377, 4294901760
        %v3379 = vsub.f32 %v3377, %v3378
        %v3380 = vand.u32 %v3379, 4294901760
        %3381 = vmatprep.subr.mxu0 %v3380
        %v3382 = vand.u32 %v871, 4294901760
        %v3383 = vsub.f32 %v871, %v3382
        %v3384 = vand.u32 %v3383, 4294901760
        %v3385 = vsub.f32 %v3383, %v3384
        %v3386 = vand.u32 %v3385, 4294901760
        %3387 = vmatpush1.msra.mxu0 %v3386
        %3388 = vmatprep.subr.mxu0 0.0
        %3389 = vmatpush2.msra.mxu0 0.0
        %3390 = vmatprep.subr.mxu0 0.0
        %3391 = vmatpush2.msra.mxu0 0.0
        %3392 = vmatprep.subr.mxu0 0.0
        %3393 = vmatpush2.msra.mxu0 0.0
        %3394 = vmatprep.subr.mxu0 0.0
        %3395 = vmatpush2.msra.mxu0 0.0
        %3396 = vmatprep.subr.mxu0 0.0
        %3397 = vmatpush2.msra.mxu0 0.0
        %3398 = vmatprep.subr.mxu0 0.0
        %3399 = vmatpush2.msra.mxu0 0.0
        %3400 = vmatprep.subr.mxu0 0.0
        %3401 = vmatpush2.msra.mxu0 0.0
        %3402 = vmatprep.subr.mxu0 0.0
        %3403 = vmatpush2.msra.mxu0 0.0
        %3404 = vmatprep.subr.mxu0 0.0
        %3405 = vmatpush2.msra.mxu0 0.0
        %3406 = vmatprep.subr.mxu0 0.0
        %3407 = vmatpush2.msra.mxu0 0.0
        %3408 = vmatprep.subr.mxu0 0.0
        %3409 = vmatpush2.msra.mxu0 0.0
        %3410 = vmatprep.subr.mxu0 0.0
        %3411 = vmatpush2.msra.mxu0 0.0
        %3412 = vmatprep.subr.mxu0 0.0
        %3413 = vmatpush2.msra.mxu0 0.0
        %3414 = vmatprep.subr.mxu0 0.0
        %3415 = vmatpush2.msra.mxu0 0.0
        %3416 = vmatprep.subr.mxu0 0.0
        %3417 = vmatpush2.msra.mxu0 0.0
        %3418 = vmatprep.subr.mxu0 0.0
        %3419 = vmatpush2.msra.mxu0 0.0
        %3420 = vmatprep.mubr.f32.mxu0 0.0
        %v3421 = vand.u32 %v339, 4294901760
        %3422 = vmatmul.mubr.f32.gmra.mxu0 %v3421
        %v3423 = vpop.f32.mrf.mxu0
        %v3424 = vadd.f32 %v3311, %v3423
        %v3425 = vpop.f32.mrf.mxu0
        %v3426 = vadd.f32 %v3313, %v3425
        %3427 = vmatprep.mubr.f32.mxu0 0.0
        %v3428 = vand.u32 %v342, 4294901760
        %3429 = vmatmul.mubr.f32.gmra.mxu0 %v3428
        %v3430 = vpop.f32.mrf.mxu0
        %v3431 = vadd.f32 %v3322, %v3430
        %v3432 = vpop.f32.mrf.mxu0
        %v3433 = vadd.f32 %v3324, %v3432
        %3434 = vdwg.mxu0
        %3435 = vmatprep.subr.mxu0 0.0
        %3436 = vmatpush1.msra.mxu0 0.0
        %3437 = vmatprep.subr.mxu0 0.0
        %3438 = vmatpush1.msra.mxu0 0.0
        %3439 = vmatprep.subr.mxu0 0.0
        %3440 = vmatpush1.msra.mxu0 0.0
        %3441 = vmatprep.subr.mxu0 0.0
        %3442 = vmatpush1.msra.mxu0 0.0
        %3443 = vmatprep.subr.mxu0 0.0
        %3444 = vmatpush1.msra.mxu0 0.0
        %3445 = vmatprep.subr.mxu0 0.0
        %3446 = vmatpush1.msra.mxu0 0.0
        %3447 = vmatprep.subr.mxu0 0.0
        %3448 = vmatpush1.msra.mxu0 0.0
        %3449 = vmatprep.subr.mxu0 0.0
        %3450 = vmatpush1.msra.mxu0 0.0
        %3451 = vmatprep.subr.mxu0 0.0
        %3452 = vmatpush1.msra.mxu0 0.0
        %3453 = vmatprep.subr.mxu0 0.0
        %3454 = vmatpush1.msra.mxu0 0.0
        %3455 = vmatprep.subr.mxu0 0.0
        %3456 = vmatpush1.msra.mxu0 0.0
        %3457 = vmatprep.subr.mxu0 0.0
        %3458 = vmatpush1.msra.mxu0 0.0
        %3459 = vmatprep.subr.mxu0 0.0
        %3460 = vmatpush1.msra.mxu0 0.0
        %v3461 = vand.u32 %v949, 4294901760
        %v3462 = vsub.f32 %v949, %v3461
        %3463 = vmatprep.subr.mxu0 %v3462
        %v3464 = vand.u32 %v946, 4294901760
        %v3465 = vsub.f32 %v946, %v3464
        %3466 = vmatpush1.msra.mxu0 %v3465
        %v3467 = vand.u32 %v888, 4294901760
        %v3468 = vsub.f32 %v888, %v3467
        %3469 = vmatprep.subr.mxu0 %v3468
        %v3470 = vand.u32 %v887, 4294901760
        %v3471 = vsub.f32 %v887, %v3470
        %3472 = vmatpush1.msra.mxu0 %v3471
        %v3473 = vand.u32 %v872, 4294901760
        %v3474 = vsub.f32 %v872, %v3473
        %3475 = vmatprep.subr.mxu0 %v3474
        %v3476 = vand.u32 %v871, 4294901760
        %v3477 = vsub.f32 %v871, %v3476
        %3478 = vmatpush1.msra.mxu0 %v3477
        %3479 = vmatprep.subr.mxu0 0.0
        %3480 = vmatpush2.msra.mxu0 0.0
        %3481 = vmatprep.subr.mxu0 0.0
        %3482 = vmatpush2.msra.mxu0 0.0
        %3483 = vmatprep.subr.mxu0 0.0
        %3484 = vmatpush2.msra.mxu0 0.0
        %3485 = vmatprep.subr.mxu0 0.0
        %3486 = vmatpush2.msra.mxu0 0.0
        %3487 = vmatprep.subr.mxu0 0.0
        %3488 = vmatpush2.msra.mxu0 0.0
        %3489 = vmatprep.subr.mxu0 0.0
        %3490 = vmatpush2.msra.mxu0 0.0
        %3491 = vmatprep.subr.mxu0 0.0
        %3492 = vmatpush2.msra.mxu0 0.0
        %3493 = vmatprep.subr.mxu0 0.0
        %3494 = vmatpush2.msra.mxu0 0.0
        %3495 = vmatprep.subr.mxu0 0.0
        %3496 = vmatpush2.msra.mxu0 0.0
        %3497 = vmatprep.subr.mxu0 0.0
        %3498 = vmatpush2.msra.mxu0 0.0
        %3499 = vmatprep.subr.mxu0 0.0
        %3500 = vmatpush2.msra.mxu0 0.0
        %3501 = vmatprep.subr.mxu0 0.0
        %3502 = vmatpush2.msra.mxu0 0.0
        %3503 = vmatprep.subr.mxu0 0.0
        %3504 = vmatpush2.msra.mxu0 0.0
        %3505 = vmatprep.subr.mxu0 0.0
        %3506 = vmatpush2.msra.mxu0 0.0
        %3507 = vmatprep.subr.mxu0 0.0
        %3508 = vmatpush2.msra.mxu0 0.0
        %3509 = vmatprep.subr.mxu0 0.0
        %3510 = vmatpush2.msra.mxu0 0.0
        %3511 = vmatprep.mubr.f32.mxu0 0.0
        %v3512 = vand.u32 %v339, 4294901760
        %v3513 = vsub.f32 %v339, %v3512
        %3514 = vmatmul.mubr.f32.gmra.mxu0 %v3513
        %v3515 = vpop.f32.mrf.mxu0
        %v3516 = vadd.f32 %v3424, %v3515
        %v3517 = vpop.f32.mrf.mxu0
        %v3518 = vadd.f32 %v3426, %v3517
        %3519 = vmatprep.mubr.f32.mxu0 0.0
        %v3520 = vand.u32 %v342, 4294901760
        %v3521 = vsub.f32 %v342, %v3520
        %3522 = vmatmul.mubr.f32.gmra.mxu0 %v3521
        %v3523 = vpop.f32.mrf.mxu0
        %v3524 = vadd.f32 %v3431, %v3523
        %v3525 = vpop.f32.mrf.mxu0
        %v3526 = vadd.f32 %v3433, %v3525
        %3527 = vdwg.mxu0
        %3528 = vmatprep.subr.mxu0 0.0
        %3529 = vmatpush1.msra.mxu0 0.0
        %3530 = vmatprep.subr.mxu0 0.0
        %3531 = vmatpush1.msra.mxu0 0.0
        %3532 = vmatprep.subr.mxu0 0.0
        %3533 = vmatpush1.msra.mxu0 0.0
        %3534 = vmatprep.subr.mxu0 0.0
        %3535 = vmatpush1.msra.mxu0 0.0
        %3536 = vmatprep.subr.mxu0 0.0
        %3537 = vmatpush1.msra.mxu0 0.0
        %3538 = vmatprep.subr.mxu0 0.0
        %3539 = vmatpush1.msra.mxu0 0.0
        %3540 = vmatprep.subr.mxu0 0.0
        %3541 = vmatpush1.msra.mxu0 0.0
        %3542 = vmatprep.subr.mxu0 0.0
        %3543 = vmatpush1.msra.mxu0 0.0
        %3544 = vmatprep.subr.mxu0 0.0
        %3545 = vmatpush1.msra.mxu0 0.0
        %3546 = vmatprep.subr.mxu0 0.0
        %3547 = vmatpush1.msra.mxu0 0.0
        %3548 = vmatprep.subr.mxu0 0.0
        %3549 = vmatpush1.msra.mxu0 0.0
        %3550 = vmatprep.subr.mxu0 0.0
        %3551 = vmatpush1.msra.mxu0 0.0
        %3552 = vmatprep.subr.mxu0 0.0
        %3553 = vmatpush1.msra.mxu0 0.0
        %v3554 = vand.u32 %v949, 4294901760
        %3555 = vmatprep.subr.mxu0 %v3554
        %v3556 = vand.u32 %v946, 4294901760
        %3557 = vmatpush1.msra.mxu0 %v3556
        %v3558 = vand.u32 %v888, 4294901760
        %3559 = vmatprep.subr.mxu0 %v3558
        %v3560 = vand.u32 %v887, 4294901760
        %3561 = vmatpush1.msra.mxu0 %v3560
        %v3562 = vand.u32 %v872, 4294901760
        %3563 = vmatprep.subr.mxu0 %v3562
        %v3564 = vand.u32 %v871, 4294901760
        %3565 = vmatpush1.msra.mxu0 %v3564
        %3566 = vmatprep.subr.mxu0 0.0
        %3567 = vmatpush2.msra.mxu0 0.0
        %3568 = vmatprep.subr.mxu0 0.0
        %3569 = vmatpush2.msra.mxu0 0.0
        %3570 = vmatprep.subr.mxu0 0.0
        %3571 = vmatpush2.msra.mxu0 0.0
        %3572 = vmatprep.subr.mxu0 0.0
        %3573 = vmatpush2.msra.mxu0 0.0
        %3574 = vmatprep.subr.mxu0 0.0
        %3575 = vmatpush2.msra.mxu0 0.0
        %3576 = vmatprep.subr.mxu0 0.0
        %3577 = vmatpush2.msra.mxu0 0.0
        %3578 = vmatprep.subr.mxu0 0.0
        %3579 = vmatpush2.msra.mxu0 0.0
        %3580 = vmatprep.subr.mxu0 0.0
        %3581 = vmatpush2.msra.mxu0 0.0
        %3582 = vmatprep.subr.mxu0 0.0
        %3583 = vmatpush2.msra.mxu0 0.0
        %3584 = vmatprep.subr.mxu0 0.0
        %3585 = vmatpush2.msra.mxu0 0.0
        %3586 = vmatprep.subr.mxu0 0.0
        %3587 = vmatpush2.msra.mxu0 0.0
        %3588 = vmatprep.subr.mxu0 0.0
        %3589 = vmatpush2.msra.mxu0 0.0
        %3590 = vmatprep.subr.mxu0 0.0
        %3591 = vmatpush2.msra.mxu0 0.0
        %3592 = vmatprep.subr.mxu0 0.0
        %3593 = vmatpush2.msra.mxu0 0.0
        %3594 = vmatprep.subr.mxu0 0.0
        %3595 = vmatpush2.msra.mxu0 0.0
        %3596 = vmatprep.subr.mxu0 0.0
        %3597 = vmatpush2.msra.mxu0 0.0
        %3598 = vmatprep.mubr.f32.mxu0 0.0
        %v3599 = vand.u32 %v339, 4294901760
        %v3600 = vsub.f32 %v339, %v3599
        %v3601 = vand.u32 %v3600, 4294901760
        %3602 = vmatmul.mubr.f32.gmra.mxu0 %v3601
        %v3603 = vpop.f32.mrf.mxu0
        %v3604 = vadd.f32 %v3516, %v3603
        %v3605 = vpop.f32.mrf.mxu0
        %v3606 = vadd.f32 %v3518, %v3605
        %3607 = vmatprep.mubr.f32.mxu0 0.0
        %v3608 = vand.u32 %v342, 4294901760
        %v3609 = vsub.f32 %v342, %v3608
        %v3610 = vand.u32 %v3609, 4294901760
        %3611 = vmatmul.mubr.f32.gmra.mxu0 %v3610
        %v3612 = vpop.f32.mrf.mxu0
        %v3613 = vadd.f32 %v3524, %v3612
        %v3614 = vpop.f32.mrf.mxu0
        %v3615 = vadd.f32 %v3526, %v3614
        %3616 = vdwg.mxu0
        %3617 = vmatprep.subr.mxu0 0.0
        %3618 = vmatpush1.msra.mxu0 0.0
        %3619 = vmatprep.subr.mxu0 0.0
        %3620 = vmatpush1.msra.mxu0 0.0
        %3621 = vmatprep.subr.mxu0 0.0
        %3622 = vmatpush1.msra.mxu0 0.0
        %3623 = vmatprep.subr.mxu0 0.0
        %3624 = vmatpush1.msra.mxu0 0.0
        %3625 = vmatprep.subr.mxu0 0.0
        %3626 = vmatpush1.msra.mxu0 0.0
        %3627 = vmatprep.subr.mxu0 0.0
        %3628 = vmatpush1.msra.mxu0 0.0
        %3629 = vmatprep.subr.mxu0 0.0
        %3630 = vmatpush1.msra.mxu0 0.0
        %3631 = vmatprep.subr.mxu0 0.0
        %3632 = vmatpush1.msra.mxu0 0.0
        %3633 = vmatprep.subr.mxu0 0.0
        %3634 = vmatpush1.msra.mxu0 0.0
        %3635 = vmatprep.subr.mxu0 0.0
        %3636 = vmatpush1.msra.mxu0 0.0
        %3637 = vmatprep.subr.mxu0 0.0
        %3638 = vmatpush1.msra.mxu0 0.0
        %3639 = vmatprep.subr.mxu0 0.0
        %3640 = vmatpush1.msra.mxu0 0.0
        %3641 = vmatprep.subr.mxu0 0.0
        %3642 = vmatpush1.msra.mxu0 0.0
        %v3643 = vand.u32 %v949, 4294901760
        %v3644 = vsub.f32 %v949, %v3643
        %v3645 = vand.u32 %v3644, 4294901760
        %3646 = vmatprep.subr.mxu0 %v3645
        %v3647 = vand.u32 %v946, 4294901760
        %v3648 = vsub.f32 %v946, %v3647
        %v3649 = vand.u32 %v3648, 4294901760
        %3650 = vmatpush1.msra.mxu0 %v3649
        %v3651 = vand.u32 %v888, 4294901760
        %v3652 = vsub.f32 %v888, %v3651
        %v3653 = vand.u32 %v3652, 4294901760
        %3654 = vmatprep.subr.mxu0 %v3653
        %v3655 = vand.u32 %v887, 4294901760
        %v3656 = vsub.f32 %v887, %v3655
        %v3657 = vand.u32 %v3656, 4294901760
        %3658 = vmatpush1.msra.mxu0 %v3657
        %v3659 = vand.u32 %v872, 4294901760
        %v3660 = vsub.f32 %v872, %v3659
        %v3661 = vand.u32 %v3660, 4294901760
        %3662 = vmatprep.subr.mxu0 %v3661
        %v3663 = vand.u32 %v871, 4294901760
        %v3664 = vsub.f32 %v871, %v3663
        %v3665 = vand.u32 %v3664, 4294901760
        %3666 = vmatpush1.msra.mxu0 %v3665
        %3667 = vmatprep.subr.mxu0 0.0
        %3668 = vmatpush2.msra.mxu0 0.0
        %3669 = vmatprep.subr.mxu0 0.0
        %3670 = vmatpush2.msra.mxu0 0.0
        %3671 = vmatprep.subr.mxu0 0.0
        %3672 = vmatpush2.msra.mxu0 0.0
        %3673 = vmatprep.subr.mxu0 0.0
        %3674 = vmatpush2.msra.mxu0 0.0
        %3675 = vmatprep.subr.mxu0 0.0
        %3676 = vmatpush2.msra.mxu0 0.0
        %3677 = vmatprep.subr.mxu0 0.0
        %3678 = vmatpush2.msra.mxu0 0.0
        %3679 = vmatprep.subr.mxu0 0.0
        %3680 = vmatpush2.msra.mxu0 0.0
        %3681 = vmatprep.subr.mxu0 0.0
        %3682 = vmatpush2.msra.mxu0 0.0
        %3683 = vmatprep.subr.mxu0 0.0
        %3684 = vmatpush2.msra.mxu0 0.0
        %3685 = vmatprep.subr.mxu0 0.0
        %3686 = vmatpush2.msra.mxu0 0.0
        %3687 = vmatprep.subr.mxu0 0.0
        %3688 = vmatpush2.msra.mxu0 0.0
        %3689 = vmatprep.subr.mxu0 0.0
        %3690 = vmatpush2.msra.mxu0 0.0
        %3691 = vmatprep.subr.mxu0 0.0
        %3692 = vmatpush2.msra.mxu0 0.0
        %3693 = vmatprep.subr.mxu0 0.0
        %3694 = vmatpush2.msra.mxu0 0.0
        %3695 = vmatprep.subr.mxu0 0.0
        %3696 = vmatpush2.msra.mxu0 0.0
        %3697 = vmatprep.subr.mxu0 0.0
        %3698 = vmatpush2.msra.mxu0 0.0
        %3699 = vmatprep.mubr.f32.mxu0 0.0
        %v3700 = vand.u32 %v339, 4294901760
        %3701 = vmatmul.mubr.f32.gmra.mxu0 %v3700
        %v3702 = vpop.f32.mrf.mxu0
        %v3703 = vadd.f32 %v3604, %v3702
        %v3704 = vpop.f32.mrf.mxu0
        %v3705 = vadd.f32 %v3606, %v3704
        %3706 = vmatprep.mubr.f32.mxu0 0.0
        %v3707 = vand.u32 %v342, 4294901760
        %3708 = vmatmul.mubr.f32.gmra.mxu0 %v3707
        %v3709 = vpop.f32.mrf.mxu0
        %v3710 = vadd.f32 %v3613, %v3709
        %v3711 = vpop.f32.mrf.mxu0
        %v3712 = vadd.f32 %v3615, %v3711
        %3713 = vdwg.mxu0
        %3714 = vmatprep.subr.mxu0 0.0
        %3715 = vmatpush1.msra.mxu0 0.0
        %3716 = vmatprep.subr.mxu0 0.0
        %3717 = vmatpush1.msra.mxu0 0.0
        %3718 = vmatprep.subr.mxu0 0.0
        %3719 = vmatpush1.msra.mxu0 0.0
        %3720 = vmatprep.subr.mxu0 0.0
        %3721 = vmatpush1.msra.mxu0 0.0
        %3722 = vmatprep.subr.mxu0 0.0
        %3723 = vmatpush1.msra.mxu0 0.0
        %3724 = vmatprep.subr.mxu0 0.0
        %3725 = vmatpush1.msra.mxu0 0.0
        %3726 = vmatprep.subr.mxu0 0.0
        %3727 = vmatpush1.msra.mxu0 0.0
        %3728 = vmatprep.subr.mxu0 0.0
        %3729 = vmatpush1.msra.mxu0 0.0
        %3730 = vmatprep.subr.mxu0 0.0
        %3731 = vmatpush1.msra.mxu0 0.0
        %3732 = vmatprep.subr.mxu0 0.0
        %3733 = vmatpush1.msra.mxu0 0.0
        %3734 = vmatprep.subr.mxu0 0.0
        %3735 = vmatpush1.msra.mxu0 0.0
        %3736 = vmatprep.subr.mxu0 0.0
        %3737 = vmatpush1.msra.mxu0 0.0
        %3738 = vmatprep.subr.mxu0 0.0
        %3739 = vmatpush1.msra.mxu0 0.0
        %v3740 = vand.u32 %v949, 4294901760
        %3741 = vmatprep.subr.mxu0 %v3740
        %v3742 = vand.u32 %v946, 4294901760
        %3743 = vmatpush1.msra.mxu0 %v3742
        %v3744 = vand.u32 %v888, 4294901760
        %3745 = vmatprep.subr.mxu0 %v3744
        %v3746 = vand.u32 %v887, 4294901760
        %3747 = vmatpush1.msra.mxu0 %v3746
        %v3748 = vand.u32 %v872, 4294901760
        %3749 = vmatprep.subr.mxu0 %v3748
        %v3750 = vand.u32 %v871, 4294901760
        %3751 = vmatpush1.msra.mxu0 %v3750
        %3752 = vmatprep.subr.mxu0 0.0
        %3753 = vmatpush2.msra.mxu0 0.0
        %3754 = vmatprep.subr.mxu0 0.0
        %3755 = vmatpush2.msra.mxu0 0.0
        %3756 = vmatprep.subr.mxu0 0.0
        %3757 = vmatpush2.msra.mxu0 0.0
        %3758 = vmatprep.subr.mxu0 0.0
        %3759 = vmatpush2.msra.mxu0 0.0
        %3760 = vmatprep.subr.mxu0 0.0
        %3761 = vmatpush2.msra.mxu0 0.0
        %3762 = vmatprep.subr.mxu0 0.0
        %3763 = vmatpush2.msra.mxu0 0.0
        %3764 = vmatprep.subr.mxu0 0.0
        %3765 = vmatpush2.msra.mxu0 0.0
        %3766 = vmatprep.subr.mxu0 0.0
        %3767 = vmatpush2.msra.mxu0 0.0
        %3768 = vmatprep.subr.mxu0 0.0
        %3769 = vmatpush2.msra.mxu0 0.0
        %3770 = vmatprep.subr.mxu0 0.0
        %3771 = vmatpush2.msra.mxu0 0.0
        %3772 = vmatprep.subr.mxu0 0.0
        %3773 = vmatpush2.msra.mxu0 0.0
        %3774 = vmatprep.subr.mxu0 0.0
        %3775 = vmatpush2.msra.mxu0 0.0
        %3776 = vmatprep.subr.mxu0 0.0
        %3777 = vmatpush2.msra.mxu0 0.0
        %3778 = vmatprep.subr.mxu0 0.0
        %3779 = vmatpush2.msra.mxu0 0.0
        %3780 = vmatprep.subr.mxu0 0.0
        %3781 = vmatpush2.msra.mxu0 0.0
        %3782 = vmatprep.subr.mxu0 0.0
        %3783 = vmatpush2.msra.mxu0 0.0
        %3784 = vmatprep.mubr.f32.mxu0 0.0
        %v3785 = vand.u32 %v339, 4294901760
        %3786 = vmatmul.mubr.f32.gmra.mxu0 %v3785
        %v3787 = vpop.f32.mrf.mxu0
        %v3788 = vadd.f32 %v3703, %v3787
        %v3789 = vpop.f32.mrf.mxu0
        %v3790 = vadd.f32 %v3705, %v3789
        %3791 = vmatprep.mubr.f32.mxu0 0.0
        %v3792 = vand.u32 %v342, 4294901760
        %3793 = vmatmul.mubr.f32.gmra.mxu0 %v3792
        %v3794 = vpop.f32.mrf.mxu0
        %v3795 = vadd.f32 %v3710, %v3794
        %v3796 = vpop.f32.mrf.mxu0
        %v3797 = vadd.f32 %v3712, %v3796
        %3798 = vdwg.mxu0
        %3799 = vmatprep.subr.mxu0 0.0
        %3800 = vmatpush1.msra.mxu0 0.0
        %3801 = vmatprep.subr.mxu0 0.0
        %3802 = vmatpush1.msra.mxu0 0.0
        %3803 = vmatprep.subr.mxu0 0.0
        %3804 = vmatpush1.msra.mxu0 0.0
        %3805 = vmatprep.subr.mxu0 0.0
        %3806 = vmatpush1.msra.mxu0 0.0
        %3807 = vmatprep.subr.mxu0 0.0
        %3808 = vmatpush1.msra.mxu0 0.0
        %3809 = vmatprep.subr.mxu0 0.0
        %3810 = vmatpush1.msra.mxu0 0.0
        %3811 = vmatprep.subr.mxu0 0.0
        %3812 = vmatpush1.msra.mxu0 0.0
        %3813 = vmatprep.subr.mxu0 0.0
        %3814 = vmatpush1.msra.mxu0 0.0
        %3815 = vmatprep.subr.mxu0 0.0
        %3816 = vmatpush1.msra.mxu0 0.0
        %3817 = vmatprep.subr.mxu0 0.0
        %3818 = vmatpush1.msra.mxu0 0.0
        %3819 = vmatprep.subr.mxu0 0.0
        %3820 = vmatpush1.msra.mxu0 0.0
        %3821 = vmatprep.subr.mxu0 0.0
        %3822 = vmatpush1.msra.mxu0 0.0
        %3823 = vmatprep.subr.mxu0 0.0
        %3824 = vmatpush1.msra.mxu0 0.0
        %v3825 = vand.u32 %v955, 4294901760
        %3826 = vmatprep.subr.mxu0 %v3825
        %v3827 = vand.u32 %v952, 4294901760
        %3828 = vmatpush1.msra.mxu0 %v3827
        %v3829 = vand.u32 %v890, 4294901760
        %3830 = vmatprep.subr.mxu0 %v3829
        %v3831 = vand.u32 %v889, 4294901760
        %3832 = vmatpush1.msra.mxu0 %v3831
        %v3833 = vand.u32 %v874, 4294901760
        %3834 = vmatprep.subr.mxu0 %v3833
        %v3835 = vand.u32 %v873, 4294901760
        %3836 = vmatpush1.msra.mxu0 %v3835
        %3837 = vmatprep.subr.mxu0 0.0
        %3838 = vmatpush2.msra.mxu0 0.0
        %3839 = vmatprep.subr.mxu0 0.0
        %3840 = vmatpush2.msra.mxu0 0.0
        %3841 = vmatprep.subr.mxu0 0.0
        %3842 = vmatpush2.msra.mxu0 0.0
        %3843 = vmatprep.subr.mxu0 0.0
        %3844 = vmatpush2.msra.mxu0 0.0
        %3845 = vmatprep.subr.mxu0 0.0
        %3846 = vmatpush2.msra.mxu0 0.0
        %3847 = vmatprep.subr.mxu0 0.0
        %3848 = vmatpush2.msra.mxu0 0.0
        %3849 = vmatprep.subr.mxu0 0.0
        %3850 = vmatpush2.msra.mxu0 0.0
        %3851 = vmatprep.subr.mxu0 0.0
        %3852 = vmatpush2.msra.mxu0 0.0
        %3853 = vmatprep.subr.mxu0 0.0
        %3854 = vmatpush2.msra.mxu0 0.0
        %3855 = vmatprep.subr.mxu0 0.0
        %3856 = vmatpush2.msra.mxu0 0.0
        %3857 = vmatprep.subr.mxu0 0.0
        %3858 = vmatpush2.msra.mxu0 0.0
        %3859 = vmatprep.subr.mxu0 0.0
        %3860 = vmatpush2.msra.mxu0 0.0
        %3861 = vmatprep.subr.mxu0 0.0
        %3862 = vmatpush2.msra.mxu0 0.0
        %3863 = vmatprep.subr.mxu0 0.0
        %3864 = vmatpush2.msra.mxu0 0.0
        %3865 = vmatprep.subr.mxu0 0.0
        %3866 = vmatpush2.msra.mxu0 0.0
        %3867 = vmatprep.subr.mxu0 0.0
        %3868 = vmatpush2.msra.mxu0 0.0
        %3869 = vmatprep.mubr.f32.mxu0 0.0
        %v3870 = vand.u32 %v339, 4294901760
        %v3871 = vsub.f32 %v339, %v3870
        %v3872 = vand.u32 %v3871, 4294901760
        %v3873 = vsub.f32 %v3871, %v3872
        %v3874 = vand.u32 %v3873, 4294901760
        %3875 = vmatmul.mubr.f32.gmra.mxu0 %v3874
        %v3876 = vpop.f32.mrf.mxu0
        %v3877 = vadd.f32 %v914, %v3876
        %v3878 = vpop.f32.mrf.mxu0
        %v3879 = vadd.f32 %v914, %v3878
        %3880 = vmatprep.mubr.f32.mxu0 0.0
        %v3881 = vand.u32 %v342, 4294901760
        %v3882 = vsub.f32 %v342, %v3881
        %v3883 = vand.u32 %v3882, 4294901760
        %v3884 = vsub.f32 %v3882, %v3883
        %v3885 = vand.u32 %v3884, 4294901760
        %3886 = vmatmul.mubr.f32.gmra.mxu0 %v3885
        %v3887 = vpop.f32.mrf.mxu0
        %v3888 = vadd.f32 %v919, %v3887
        %v3889 = vpop.f32.mrf.mxu0
        %v3890 = vadd.f32 %v919, %v3889
        %3891 = vdwg.mxu0
        %3892 = vmatprep.subr.mxu0 0.0
        %3893 = vmatpush1.msra.mxu0 0.0
        %3894 = vmatprep.subr.mxu0 0.0
        %3895 = vmatpush1.msra.mxu0 0.0
        %3896 = vmatprep.subr.mxu0 0.0
        %3897 = vmatpush1.msra.mxu0 0.0
        %3898 = vmatprep.subr.mxu0 0.0
        %3899 = vmatpush1.msra.mxu0 0.0
        %3900 = vmatprep.subr.mxu0 0.0
        %3901 = vmatpush1.msra.mxu0 0.0
        %3902 = vmatprep.subr.mxu0 0.0
        %3903 = vmatpush1.msra.mxu0 0.0
        %3904 = vmatprep.subr.mxu0 0.0
        %3905 = vmatpush1.msra.mxu0 0.0
        %3906 = vmatprep.subr.mxu0 0.0
        %3907 = vmatpush1.msra.mxu0 0.0
        %3908 = vmatprep.subr.mxu0 0.0
        %3909 = vmatpush1.msra.mxu0 0.0
        %3910 = vmatprep.subr.mxu0 0.0
        %3911 = vmatpush1.msra.mxu0 0.0
        %3912 = vmatprep.subr.mxu0 0.0
        %3913 = vmatpush1.msra.mxu0 0.0
        %3914 = vmatprep.subr.mxu0 0.0
        %3915 = vmatpush1.msra.mxu0 0.0
        %3916 = vmatprep.subr.mxu0 0.0
        %3917 = vmatpush1.msra.mxu0 0.0
        %v3918 = vand.u32 %v955, 4294901760
        %v3919 = vsub.f32 %v955, %v3918
        %v3920 = vand.u32 %v3919, 4294901760
        %v3921 = vsub.f32 %v3919, %v3920
        %v3922 = vand.u32 %v3921, 4294901760
        %3923 = vmatprep.subr.mxu0 %v3922
        %v3924 = vand.u32 %v952, 4294901760
        %v3925 = vsub.f32 %v952, %v3924
        %v3926 = vand.u32 %v3925, 4294901760
        %v3927 = vsub.f32 %v3925, %v3926
        %v3928 = vand.u32 %v3927, 4294901760
        %3929 = vmatpush1.msra.mxu0 %v3928
        %v3930 = vand.u32 %v890, 4294901760
        %v3931 = vsub.f32 %v890, %v3930
        %v3932 = vand.u32 %v3931, 4294901760
        %v3933 = vsub.f32 %v3931, %v3932
        %v3934 = vand.u32 %v3933, 4294901760
        %3935 = vmatprep.subr.mxu0 %v3934
        %v3936 = vand.u32 %v889, 4294901760
        %v3937 = vsub.f32 %v889, %v3936
        %v3938 = vand.u32 %v3937, 4294901760
        %v3939 = vsub.f32 %v3937, %v3938
        %v3940 = vand.u32 %v3939, 4294901760
        %3941 = vmatpush1.msra.mxu0 %v3940
        %v3942 = vand.u32 %v874, 4294901760
        %v3943 = vsub.f32 %v874, %v3942
        %v3944 = vand.u32 %v3943, 4294901760
        %v3945 = vsub.f32 %v3943, %v3944
        %v3946 = vand.u32 %v3945, 4294901760
        %3947 = vmatprep.subr.mxu0 %v3946
        %v3948 = vand.u32 %v873, 4294901760
        %v3949 = vsub.f32 %v873, %v3948
        %v3950 = vand.u32 %v3949, 4294901760
        %v3951 = vsub.f32 %v3949, %v3950
        %v3952 = vand.u32 %v3951, 4294901760
        %3953 = vmatpush1.msra.mxu0 %v3952
        %3954 = vmatprep.subr.mxu0 0.0
        %3955 = vmatpush2.msra.mxu0 0.0
        %3956 = vmatprep.subr.mxu0 0.0
        %3957 = vmatpush2.msra.mxu0 0.0
        %3958 = vmatprep.subr.mxu0 0.0
        %3959 = vmatpush2.msra.mxu0 0.0
        %3960 = vmatprep.subr.mxu0 0.0
        %3961 = vmatpush2.msra.mxu0 0.0
        %3962 = vmatprep.subr.mxu0 0.0
        %3963 = vmatpush2.msra.mxu0 0.0
        %3964 = vmatprep.subr.mxu0 0.0
        %3965 = vmatpush2.msra.mxu0 0.0
        %3966 = vmatprep.subr.mxu0 0.0
        %3967 = vmatpush2.msra.mxu0 0.0
        %3968 = vmatprep.subr.mxu0 0.0
        %3969 = vmatpush2.msra.mxu0 0.0
        %3970 = vmatprep.subr.mxu0 0.0
        %3971 = vmatpush2.msra.mxu0 0.0
        %3972 = vmatprep.subr.mxu0 0.0
        %3973 = vmatpush2.msra.mxu0 0.0
        %3974 = vmatprep.subr.mxu0 0.0
        %3975 = vmatpush2.msra.mxu0 0.0
        %3976 = vmatprep.subr.mxu0 0.0
        %3977 = vmatpush2.msra.mxu0 0.0
        %3978 = vmatprep.subr.mxu0 0.0
        %3979 = vmatpush2.msra.mxu0 0.0
        %3980 = vmatprep.subr.mxu0 0.0
        %3981 = vmatpush2.msra.mxu0 0.0
        %3982 = vmatprep.subr.mxu0 0.0
        %3983 = vmatpush2.msra.mxu0 0.0
        %3984 = vmatprep.subr.mxu0 0.0
        %3985 = vmatpush2.msra.mxu0 0.0
        %3986 = vmatprep.mubr.f32.mxu0 0.0
        %v3987 = vand.u32 %v339, 4294901760
        %3988 = vmatmul.mubr.f32.gmra.mxu0 %v3987
        %v3989 = vpop.f32.mrf.mxu0
        %v3990 = vadd.f32 %v3877, %v3989
        %v3991 = vpop.f32.mrf.mxu0
        %v3992 = vadd.f32 %v3879, %v3991
        %3993 = vmatprep.mubr.f32.mxu0 0.0
        %v3994 = vand.u32 %v342, 4294901760
        %3995 = vmatmul.mubr.f32.gmra.mxu0 %v3994
        %v3996 = vpop.f32.mrf.mxu0
        %v3997 = vadd.f32 %v3888, %v3996
        %v3998 = vpop.f32.mrf.mxu0
        %v3999 = vadd.f32 %v3890, %v3998
        %4000 = vdwg.mxu0
        %4001 = vmatprep.subr.mxu0 0.0
        %4002 = vmatpush1.msra.mxu0 0.0
        %4003 = vmatprep.subr.mxu0 0.0
        %4004 = vmatpush1.msra.mxu0 0.0
        %4005 = vmatprep.subr.mxu0 0.0
        %4006 = vmatpush1.msra.mxu0 0.0
        %4007 = vmatprep.subr.mxu0 0.0
        %4008 = vmatpush1.msra.mxu0 0.0
        %4009 = vmatprep.subr.mxu0 0.0
        %4010 = vmatpush1.msra.mxu0 0.0
        %4011 = vmatprep.subr.mxu0 0.0
        %4012 = vmatpush1.msra.mxu0 0.0
        %4013 = vmatprep.subr.mxu0 0.0
        %4014 = vmatpush1.msra.mxu0 0.0
        %4015 = vmatprep.subr.mxu0 0.0
        %4016 = vmatpush1.msra.mxu0 0.0
        %4017 = vmatprep.subr.mxu0 0.0
        %4018 = vmatpush1.msra.mxu0 0.0
        %4019 = vmatprep.subr.mxu0 0.0
        %4020 = vmatpush1.msra.mxu0 0.0
        %4021 = vmatprep.subr.mxu0 0.0
        %4022 = vmatpush1.msra.mxu0 0.0
        %4023 = vmatprep.subr.mxu0 0.0
        %4024 = vmatpush1.msra.mxu0 0.0
        %4025 = vmatprep.subr.mxu0 0.0
        %4026 = vmatpush1.msra.mxu0 0.0
        %v4027 = vand.u32 %v955, 4294901760
        %v4028 = vsub.f32 %v955, %v4027
        %4029 = vmatprep.subr.mxu0 %v4028
        %v4030 = vand.u32 %v952, 4294901760
        %v4031 = vsub.f32 %v952, %v4030
        %4032 = vmatpush1.msra.mxu0 %v4031
        %v4033 = vand.u32 %v890, 4294901760
        %v4034 = vsub.f32 %v890, %v4033
        %4035 = vmatprep.subr.mxu0 %v4034
        %v4036 = vand.u32 %v889, 4294901760
        %v4037 = vsub.f32 %v889, %v4036
        %4038 = vmatpush1.msra.mxu0 %v4037
        %v4039 = vand.u32 %v874, 4294901760
        %v4040 = vsub.f32 %v874, %v4039
        %4041 = vmatprep.subr.mxu0 %v4040
        %v4042 = vand.u32 %v873, 4294901760
        %v4043 = vsub.f32 %v873, %v4042
        %4044 = vmatpush1.msra.mxu0 %v4043
        %4045 = vmatprep.subr.mxu0 0.0
        %4046 = vmatpush2.msra.mxu0 0.0
        %4047 = vmatprep.subr.mxu0 0.0
        %4048 = vmatpush2.msra.mxu0 0.0
        %4049 = vmatprep.subr.mxu0 0.0
        %4050 = vmatpush2.msra.mxu0 0.0
        %4051 = vmatprep.subr.mxu0 0.0
        %4052 = vmatpush2.msra.mxu0 0.0
        %4053 = vmatprep.subr.mxu0 0.0
        %4054 = vmatpush2.msra.mxu0 0.0
        %4055 = vmatprep.subr.mxu0 0.0
        %4056 = vmatpush2.msra.mxu0 0.0
        %4057 = vmatprep.subr.mxu0 0.0
        %4058 = vmatpush2.msra.mxu0 0.0
        %4059 = vmatprep.subr.mxu0 0.0
        %4060 = vmatpush2.msra.mxu0 0.0
        %4061 = vmatprep.subr.mxu0 0.0
        %4062 = vmatpush2.msra.mxu0 0.0
        %4063 = vmatprep.subr.mxu0 0.0
        %4064 = vmatpush2.msra.mxu0 0.0
        %4065 = vmatprep.subr.mxu0 0.0
        %4066 = vmatpush2.msra.mxu0 0.0
        %4067 = vmatprep.subr.mxu0 0.0
        %4068 = vmatpush2.msra.mxu0 0.0
        %4069 = vmatprep.subr.mxu0 0.0
        %4070 = vmatpush2.msra.mxu0 0.0
        %4071 = vmatprep.subr.mxu0 0.0
        %4072 = vmatpush2.msra.mxu0 0.0
        %4073 = vmatprep.subr.mxu0 0.0
        %4074 = vmatpush2.msra.mxu0 0.0
        %4075 = vmatprep.subr.mxu0 0.0
        %4076 = vmatpush2.msra.mxu0 0.0
        %4077 = vmatprep.mubr.f32.mxu0 0.0
        %v4078 = vand.u32 %v339, 4294901760
        %v4079 = vsub.f32 %v339, %v4078
        %4080 = vmatmul.mubr.f32.gmra.mxu0 %v4079
        %v4081 = vpop.f32.mrf.mxu0
        %v4082 = vadd.f32 %v3990, %v4081
        %v4083 = vpop.f32.mrf.mxu0
        %v4084 = vadd.f32 %v3992, %v4083
        %4085 = vmatprep.mubr.f32.mxu0 0.0
        %v4086 = vand.u32 %v342, 4294901760
        %v4087 = vsub.f32 %v342, %v4086
        %4088 = vmatmul.mubr.f32.gmra.mxu0 %v4087
        %v4089 = vpop.f32.mrf.mxu0
        %v4090 = vadd.f32 %v3997, %v4089
        %v4091 = vpop.f32.mrf.mxu0
        %v4092 = vadd.f32 %v3999, %v4091
        %4093 = vdwg.mxu0
        %4094 = vmatprep.subr.mxu0 0.0
        %4095 = vmatpush1.msra.mxu0 0.0
        %4096 = vmatprep.subr.mxu0 0.0
        %4097 = vmatpush1.msra.mxu0 0.0
        %4098 = vmatprep.subr.mxu0 0.0
        %4099 = vmatpush1.msra.mxu0 0.0
        %4100 = vmatprep.subr.mxu0 0.0
        %4101 = vmatpush1.msra.mxu0 0.0
        %4102 = vmatprep.subr.mxu0 0.0
        %4103 = vmatpush1.msra.mxu0 0.0
        %4104 = vmatprep.subr.mxu0 0.0
        %4105 = vmatpush1.msra.mxu0 0.0
        %4106 = vmatprep.subr.mxu0 0.0
        %4107 = vmatpush1.msra.mxu0 0.0
        %4108 = vmatprep.subr.mxu0 0.0
        %4109 = vmatpush1.msra.mxu0 0.0
        %4110 = vmatprep.subr.mxu0 0.0
        %4111 = vmatpush1.msra.mxu0 0.0
        %4112 = vmatprep.subr.mxu0 0.0
        %4113 = vmatpush1.msra.mxu0 0.0
        %4114 = vmatprep.subr.mxu0 0.0
        %4115 = vmatpush1.msra.mxu0 0.0
        %4116 = vmatprep.subr.mxu0 0.0
        %4117 = vmatpush1.msra.mxu0 0.0
        %4118 = vmatprep.subr.mxu0 0.0
        %4119 = vmatpush1.msra.mxu0 0.0
        %v4120 = vand.u32 %v955, 4294901760
        %4121 = vmatprep.subr.mxu0 %v4120
        %v4122 = vand.u32 %v952, 4294901760
        %4123 = vmatpush1.msra.mxu0 %v4122
        %v4124 = vand.u32 %v890, 4294901760
        %4125 = vmatprep.subr.mxu0 %v4124
        %v4126 = vand.u32 %v889, 4294901760
        %4127 = vmatpush1.msra.mxu0 %v4126
        %v4128 = vand.u32 %v874, 4294901760
        %4129 = vmatprep.subr.mxu0 %v4128
        %v4130 = vand.u32 %v873, 4294901760
        %4131 = vmatpush1.msra.mxu0 %v4130
        %4132 = vmatprep.subr.mxu0 0.0
        %4133 = vmatpush2.msra.mxu0 0.0
        %4134 = vmatprep.subr.mxu0 0.0
        %4135 = vmatpush2.msra.mxu0 0.0
        %4136 = vmatprep.subr.mxu0 0.0
        %4137 = vmatpush2.msra.mxu0 0.0
        %4138 = vmatprep.subr.mxu0 0.0
        %4139 = vmatpush2.msra.mxu0 0.0
        %4140 = vmatprep.subr.mxu0 0.0
        %4141 = vmatpush2.msra.mxu0 0.0
        %4142 = vmatprep.subr.mxu0 0.0
        %4143 = vmatpush2.msra.mxu0 0.0
        %4144 = vmatprep.subr.mxu0 0.0
        %4145 = vmatpush2.msra.mxu0 0.0
        %4146 = vmatprep.subr.mxu0 0.0
        %4147 = vmatpush2.msra.mxu0 0.0
        %4148 = vmatprep.subr.mxu0 0.0
        %4149 = vmatpush2.msra.mxu0 0.0
        %4150 = vmatprep.subr.mxu0 0.0
        %4151 = vmatpush2.msra.mxu0 0.0
        %4152 = vmatprep.subr.mxu0 0.0
        %4153 = vmatpush2.msra.mxu0 0.0
        %4154 = vmatprep.subr.mxu0 0.0
        %4155 = vmatpush2.msra.mxu0 0.0
        %4156 = vmatprep.subr.mxu0 0.0
        %4157 = vmatpush2.msra.mxu0 0.0
        %4158 = vmatprep.subr.mxu0 0.0
        %4159 = vmatpush2.msra.mxu0 0.0
        %4160 = vmatprep.subr.mxu0 0.0
        %4161 = vmatpush2.msra.mxu0 0.0
        %4162 = vmatprep.subr.mxu0 0.0
        %4163 = vmatpush2.msra.mxu0 0.0
        %4164 = vmatprep.mubr.f32.mxu0 0.0
        %v4165 = vand.u32 %v339, 4294901760
        %v4166 = vsub.f32 %v339, %v4165
        %v4167 = vand.u32 %v4166, 4294901760
        %4168 = vmatmul.mubr.f32.gmra.mxu0 %v4167
        %v4169 = vpop.f32.mrf.mxu0
        %v4170 = vadd.f32 %v4082, %v4169
        %v4171 = vpop.f32.mrf.mxu0
        %v4172 = vadd.f32 %v4084, %v4171
        %4173 = vmatprep.mubr.f32.mxu0 0.0
        %v4174 = vand.u32 %v342, 4294901760
        %v4175 = vsub.f32 %v342, %v4174
        %v4176 = vand.u32 %v4175, 4294901760
        %4177 = vmatmul.mubr.f32.gmra.mxu0 %v4176
        %v4178 = vpop.f32.mrf.mxu0
        %v4179 = vadd.f32 %v4090, %v4178
        %v4180 = vpop.f32.mrf.mxu0
        %v4181 = vadd.f32 %v4092, %v4180
        %4182 = vdwg.mxu0
        %4183 = vmatprep.subr.mxu0 0.0
        %4184 = vmatpush1.msra.mxu0 0.0
        %4185 = vmatprep.subr.mxu0 0.0
        %4186 = vmatpush1.msra.mxu0 0.0
        %4187 = vmatprep.subr.mxu0 0.0
        %4188 = vmatpush1.msra.mxu0 0.0
        %4189 = vmatprep.subr.mxu0 0.0
        %4190 = vmatpush1.msra.mxu0 0.0
        %4191 = vmatprep.subr.mxu0 0.0
        %4192 = vmatpush1.msra.mxu0 0.0
        %4193 = vmatprep.subr.mxu0 0.0
        %4194 = vmatpush1.msra.mxu0 0.0
        %4195 = vmatprep.subr.mxu0 0.0
        %4196 = vmatpush1.msra.mxu0 0.0
        %4197 = vmatprep.subr.mxu0 0.0
        %4198 = vmatpush1.msra.mxu0 0.0
        %4199 = vmatprep.subr.mxu0 0.0
        %4200 = vmatpush1.msra.mxu0 0.0
        %4201 = vmatprep.subr.mxu0 0.0
        %4202 = vmatpush1.msra.mxu0 0.0
        %4203 = vmatprep.subr.mxu0 0.0
        %4204 = vmatpush1.msra.mxu0 0.0
        %4205 = vmatprep.subr.mxu0 0.0
        %4206 = vmatpush1.msra.mxu0 0.0
        %4207 = vmatprep.subr.mxu0 0.0
        %4208 = vmatpush1.msra.mxu0 0.0
        %v4209 = vand.u32 %v955, 4294901760
        %v4210 = vsub.f32 %v955, %v4209
        %v4211 = vand.u32 %v4210, 4294901760
        %4212 = vmatprep.subr.mxu0 %v4211
        %v4213 = vand.u32 %v952, 4294901760
        %v4214 = vsub.f32 %v952, %v4213
        %v4215 = vand.u32 %v4214, 4294901760
        %4216 = vmatpush1.msra.mxu0 %v4215
        %v4217 = vand.u32 %v890, 4294901760
        %v4218 = vsub.f32 %v890, %v4217
        %v4219 = vand.u32 %v4218, 4294901760
        %4220 = vmatprep.subr.mxu0 %v4219
        %v4221 = vand.u32 %v889, 4294901760
        %v4222 = vsub.f32 %v889, %v4221
        %v4223 = vand.u32 %v4222, 4294901760
        %4224 = vmatpush1.msra.mxu0 %v4223
        %v4225 = vand.u32 %v874, 4294901760
        %v4226 = vsub.f32 %v874, %v4225
        %v4227 = vand.u32 %v4226, 4294901760
        %4228 = vmatprep.subr.mxu0 %v4227
        %v4229 = vand.u32 %v873, 4294901760
        %v4230 = vsub.f32 %v873, %v4229
        %v4231 = vand.u32 %v4230, 4294901760
        %4232 = vmatpush1.msra.mxu0 %v4231
        %4233 = vmatprep.subr.mxu0 0.0
        %4234 = vmatpush2.msra.mxu0 0.0
        %4235 = vmatprep.subr.mxu0 0.0
        %4236 = vmatpush2.msra.mxu0 0.0
        %4237 = vmatprep.subr.mxu0 0.0
        %4238 = vmatpush2.msra.mxu0 0.0
        %4239 = vmatprep.subr.mxu0 0.0
        %4240 = vmatpush2.msra.mxu0 0.0
        %4241 = vmatprep.subr.mxu0 0.0
        %4242 = vmatpush2.msra.mxu0 0.0
        %4243 = vmatprep.subr.mxu0 0.0
        %4244 = vmatpush2.msra.mxu0 0.0
        %4245 = vmatprep.subr.mxu0 0.0
        %4246 = vmatpush2.msra.mxu0 0.0
        %4247 = vmatprep.subr.mxu0 0.0
        %4248 = vmatpush2.msra.mxu0 0.0
        %4249 = vmatprep.subr.mxu0 0.0
        %4250 = vmatpush2.msra.mxu0 0.0
        %4251 = vmatprep.subr.mxu0 0.0
        %4252 = vmatpush2.msra.mxu0 0.0
        %4253 = vmatprep.subr.mxu0 0.0
        %4254 = vmatpush2.msra.mxu0 0.0
        %4255 = vmatprep.subr.mxu0 0.0
        %4256 = vmatpush2.msra.mxu0 0.0
        %4257 = vmatprep.subr.mxu0 0.0
        %4258 = vmatpush2.msra.mxu0 0.0
        %4259 = vmatprep.subr.mxu0 0.0
        %4260 = vmatpush2.msra.mxu0 0.0
        %4261 = vmatprep.subr.mxu0 0.0
        %4262 = vmatpush2.msra.mxu0 0.0
        %4263 = vmatprep.subr.mxu0 0.0
        %4264 = vmatpush2.msra.mxu0 0.0
        %4265 = vmatprep.mubr.f32.mxu0 0.0
        %v4266 = vand.u32 %v339, 4294901760
        %4267 = vmatmul.mubr.f32.gmra.mxu0 %v4266
        %v4268 = vpop.f32.mrf.mxu0
        %v4269 = vadd.f32 %v4170, %v4268
        %v4270 = vpop.f32.mrf.mxu0
        %v4271 = vadd.f32 %v4172, %v4270
        %4272 = vmatprep.mubr.f32.mxu0 0.0
        %v4273 = vand.u32 %v342, 4294901760
        %4274 = vmatmul.mubr.f32.gmra.mxu0 %v4273
        %v4275 = vpop.f32.mrf.mxu0
        %v4276 = vadd.f32 %v4179, %v4275
        %v4277 = vpop.f32.mrf.mxu0
        %v4278 = vadd.f32 %v4181, %v4277
        %4279 = vdwg.mxu0
        %4280 = vmatprep.subr.mxu0 0.0
        %4281 = vmatpush1.msra.mxu0 0.0
        %4282 = vmatprep.subr.mxu0 0.0
        %4283 = vmatpush1.msra.mxu0 0.0
        %4284 = vmatprep.subr.mxu0 0.0
        %4285 = vmatpush1.msra.mxu0 0.0
        %4286 = vmatprep.subr.mxu0 0.0
        %4287 = vmatpush1.msra.mxu0 0.0
        %4288 = vmatprep.subr.mxu0 0.0
        %4289 = vmatpush1.msra.mxu0 0.0
        %4290 = vmatprep.subr.mxu0 0.0
        %4291 = vmatpush1.msra.mxu0 0.0
        %4292 = vmatprep.subr.mxu0 0.0
        %4293 = vmatpush1.msra.mxu0 0.0
        %4294 = vmatprep.subr.mxu0 0.0
        %4295 = vmatpush1.msra.mxu0 0.0
        %4296 = vmatprep.subr.mxu0 0.0
        %4297 = vmatpush1.msra.mxu0 0.0
        %4298 = vmatprep.subr.mxu0 0.0
        %4299 = vmatpush1.msra.mxu0 0.0
        %4300 = vmatprep.subr.mxu0 0.0
        %4301 = vmatpush1.msra.mxu0 0.0
        %4302 = vmatprep.subr.mxu0 0.0
        %4303 = vmatpush1.msra.mxu0 0.0
        %4304 = vmatprep.subr.mxu0 0.0
        %4305 = vmatpush1.msra.mxu0 0.0
        %v4306 = vand.u32 %v955, 4294901760
        %4307 = vmatprep.subr.mxu0 %v4306
        %v4308 = vand.u32 %v952, 4294901760
        %4309 = vmatpush1.msra.mxu0 %v4308
        %v4310 = vand.u32 %v890, 4294901760
        %4311 = vmatprep.subr.mxu0 %v4310
        %v4312 = vand.u32 %v889, 4294901760
        %4313 = vmatpush1.msra.mxu0 %v4312
        %v4314 = vand.u32 %v874, 4294901760
        %4315 = vmatprep.subr.mxu0 %v4314
        %v4316 = vand.u32 %v873, 4294901760
        %4317 = vmatpush1.msra.mxu0 %v4316
        %4318 = vmatprep.subr.mxu0 0.0
        %4319 = vmatpush2.msra.mxu0 0.0
        %4320 = vmatprep.subr.mxu0 0.0
        %4321 = vmatpush2.msra.mxu0 0.0
        %4322 = vmatprep.subr.mxu0 0.0
        %4323 = vmatpush2.msra.mxu0 0.0
        %4324 = vmatprep.subr.mxu0 0.0
        %4325 = vmatpush2.msra.mxu0 0.0
        %4326 = vmatprep.subr.mxu0 0.0
        %4327 = vmatpush2.msra.mxu0 0.0
        %4328 = vmatprep.subr.mxu0 0.0
        %4329 = vmatpush2.msra.mxu0 0.0
        %4330 = vmatprep.subr.mxu0 0.0
        %4331 = vmatpush2.msra.mxu0 0.0
        %4332 = vmatprep.subr.mxu0 0.0
        %4333 = vmatpush2.msra.mxu0 0.0
        %4334 = vmatprep.subr.mxu0 0.0
        %4335 = vmatpush2.msra.mxu0 0.0
        %4336 = vmatprep.subr.mxu0 0.0
        %4337 = vmatpush2.msra.mxu0 0.0
        %4338 = vmatprep.subr.mxu0 0.0
        %4339 = vmatpush2.msra.mxu0 0.0
        %4340 = vmatprep.subr.mxu0 0.0
        %4341 = vmatpush2.msra.mxu0 0.0
        %4342 = vmatprep.subr.mxu0 0.0
        %4343 = vmatpush2.msra.mxu0 0.0
        %4344 = vmatprep.subr.mxu0 0.0
        %4345 = vmatpush2.msra.mxu0 0.0
        %4346 = vmatprep.subr.mxu0 0.0
        %4347 = vmatpush2.msra.mxu0 0.0
        %4348 = vmatprep.subr.mxu0 0.0
        %4349 = vmatpush2.msra.mxu0 0.0
        %4350 = vmatprep.mubr.f32.mxu0 0.0
        %v4351 = vand.u32 %v339, 4294901760
        %4352 = vmatmul.mubr.f32.gmra.mxu0 %v4351
        %v4353 = vpop.f32.mrf.mxu0
        %v4354 = vadd.f32 %v4269, %v4353
        %v4355 = vpop.f32.mrf.mxu0
        %v4356 = vadd.f32 %v4271, %v4355
        %4357 = vmatprep.mubr.f32.mxu0 0.0
        %v4358 = vand.u32 %v342, 4294901760
        %4359 = vmatmul.mubr.f32.gmra.mxu0 %v4358
        %v4360 = vpop.f32.mrf.mxu0
        %v4361 = vadd.f32 %v4276, %v4360
        %v4362 = vpop.f32.mrf.mxu0
        %v4363 = vadd.f32 %v4278, %v4362
        %4364 = vdwg.mxu0
        %4365 = vmatprep.subr.mxu0 0.0
        %4366 = vmatpush1.msra.mxu0 0.0
        %4367 = vmatprep.subr.mxu0 0.0
        %4368 = vmatpush1.msra.mxu0 0.0
        %4369 = vmatprep.subr.mxu0 0.0
        %4370 = vmatpush1.msra.mxu0 0.0
        %4371 = vmatprep.subr.mxu0 0.0
        %4372 = vmatpush1.msra.mxu0 0.0
        %4373 = vmatprep.subr.mxu0 0.0
        %4374 = vmatpush1.msra.mxu0 0.0
        %4375 = vmatprep.subr.mxu0 0.0
        %4376 = vmatpush1.msra.mxu0 0.0
        %4377 = vmatprep.subr.mxu0 0.0
        %4378 = vmatpush1.msra.mxu0 0.0
        %4379 = vmatprep.subr.mxu0 0.0
        %4380 = vmatpush1.msra.mxu0 0.0
        %4381 = vmatprep.subr.mxu0 0.0
        %4382 = vmatpush1.msra.mxu0 0.0
        %4383 = vmatprep.subr.mxu0 0.0
        %4384 = vmatpush1.msra.mxu0 0.0
        %4385 = vmatprep.subr.mxu0 0.0
        %4386 = vmatpush1.msra.mxu0 0.0
        %4387 = vmatprep.subr.mxu0 0.0
        %4388 = vmatpush1.msra.mxu0 0.0
        %4389 = vmatprep.subr.mxu0 0.0
        %4390 = vmatpush1.msra.mxu0 0.0
        %v4391 = vand.u32 %v961, 4294901760
        %4392 = vmatprep.subr.mxu0 %v4391
        %v4393 = vand.u32 %v958, 4294901760
        %4394 = vmatpush1.msra.mxu0 %v4393
        %v4395 = vand.u32 %v892, 4294901760
        %4396 = vmatprep.subr.mxu0 %v4395
        %v4397 = vand.u32 %v891, 4294901760
        %4398 = vmatpush1.msra.mxu0 %v4397
        %v4399 = vand.u32 %v876, 4294901760
        %4400 = vmatprep.subr.mxu0 %v4399
        %v4401 = vand.u32 %v875, 4294901760
        %4402 = vmatpush1.msra.mxu0 %v4401
        %4403 = vmatprep.subr.mxu0 0.0
        %4404 = vmatpush2.msra.mxu0 0.0
        %4405 = vmatprep.subr.mxu0 0.0
        %4406 = vmatpush2.msra.mxu0 0.0
        %4407 = vmatprep.subr.mxu0 0.0
        %4408 = vmatpush2.msra.mxu0 0.0
        %4409 = vmatprep.subr.mxu0 0.0
        %4410 = vmatpush2.msra.mxu0 0.0
        %4411 = vmatprep.subr.mxu0 0.0
        %4412 = vmatpush2.msra.mxu0 0.0
        %4413 = vmatprep.subr.mxu0 0.0
        %4414 = vmatpush2.msra.mxu0 0.0
        %4415 = vmatprep.subr.mxu0 0.0
        %4416 = vmatpush2.msra.mxu0 0.0
        %4417 = vmatprep.subr.mxu0 0.0
        %4418 = vmatpush2.msra.mxu0 0.0
        %4419 = vmatprep.subr.mxu0 0.0
        %4420 = vmatpush2.msra.mxu0 0.0
        %4421 = vmatprep.subr.mxu0 0.0
        %4422 = vmatpush2.msra.mxu0 0.0
        %4423 = vmatprep.subr.mxu0 0.0
        %4424 = vmatpush2.msra.mxu0 0.0
        %4425 = vmatprep.subr.mxu0 0.0
        %4426 = vmatpush2.msra.mxu0 0.0
        %4427 = vmatprep.subr.mxu0 0.0
        %4428 = vmatpush2.msra.mxu0 0.0
        %4429 = vmatprep.subr.mxu0 0.0
        %4430 = vmatpush2.msra.mxu0 0.0
        %4431 = vmatprep.subr.mxu0 0.0
        %4432 = vmatpush2.msra.mxu0 0.0
        %4433 = vmatprep.subr.mxu0 0.0
        %4434 = vmatpush2.msra.mxu0 0.0
        %4435 = vmatprep.mubr.f32.mxu0 0.0
        %v4436 = vand.u32 %v339, 4294901760
        %v4437 = vsub.f32 %v339, %v4436
        %v4438 = vand.u32 %v4437, 4294901760
        %v4439 = vsub.f32 %v4437, %v4438
        %v4440 = vand.u32 %v4439, 4294901760
        %4441 = vmatmul.mubr.f32.gmra.mxu0 %v4440
        %v4442 = vpop.f32.mrf.mxu0
        %v4443 = vadd.f32 %v914, %v4442
        %v4444 = vpop.f32.mrf.mxu0
        %v4445 = vadd.f32 %v914, %v4444
        %4446 = vmatprep.mubr.f32.mxu0 0.0
        %v4447 = vand.u32 %v342, 4294901760
        %v4448 = vsub.f32 %v342, %v4447
        %v4449 = vand.u32 %v4448, 4294901760
        %v4450 = vsub.f32 %v4448, %v4449
        %v4451 = vand.u32 %v4450, 4294901760
        %4452 = vmatmul.mubr.f32.gmra.mxu0 %v4451
        %v4453 = vpop.f32.mrf.mxu0
        %v4454 = vadd.f32 %v919, %v4453
        %v4455 = vpop.f32.mrf.mxu0
        %v4456 = vadd.f32 %v919, %v4455
        %4457 = vdwg.mxu0
        %4458 = vmatprep.subr.mxu0 0.0
        %4459 = vmatpush1.msra.mxu0 0.0
        %4460 = vmatprep.subr.mxu0 0.0
        %4461 = vmatpush1.msra.mxu0 0.0
        %4462 = vmatprep.subr.mxu0 0.0
        %4463 = vmatpush1.msra.mxu0 0.0
        %4464 = vmatprep.subr.mxu0 0.0
        %4465 = vmatpush1.msra.mxu0 0.0
        %4466 = vmatprep.subr.mxu0 0.0
        %4467 = vmatpush1.msra.mxu0 0.0
        %4468 = vmatprep.subr.mxu0 0.0
        %4469 = vmatpush1.msra.mxu0 0.0
        %4470 = vmatprep.subr.mxu0 0.0
        %4471 = vmatpush1.msra.mxu0 0.0
        %4472 = vmatprep.subr.mxu0 0.0
        %4473 = vmatpush1.msra.mxu0 0.0
        %4474 = vmatprep.subr.mxu0 0.0
        %4475 = vmatpush1.msra.mxu0 0.0
        %4476 = vmatprep.subr.mxu0 0.0
        %4477 = vmatpush1.msra.mxu0 0.0
        %4478 = vmatprep.subr.mxu0 0.0
        %4479 = vmatpush1.msra.mxu0 0.0
        %4480 = vmatprep.subr.mxu0 0.0
        %4481 = vmatpush1.msra.mxu0 0.0
        %4482 = vmatprep.subr.mxu0 0.0
        %4483 = vmatpush1.msra.mxu0 0.0
        %v4484 = vand.u32 %v961, 4294901760
        %v4485 = vsub.f32 %v961, %v4484
        %v4486 = vand.u32 %v4485, 4294901760
        %v4487 = vsub.f32 %v4485, %v4486
        %v4488 = vand.u32 %v4487, 4294901760
        %4489 = vmatprep.subr.mxu0 %v4488
        %v4490 = vand.u32 %v958, 4294901760
        %v4491 = vsub.f32 %v958, %v4490
        %v4492 = vand.u32 %v4491, 4294901760
        %v4493 = vsub.f32 %v4491, %v4492
        %v4494 = vand.u32 %v4493, 4294901760
        %4495 = vmatpush1.msra.mxu0 %v4494
        %v4496 = vand.u32 %v892, 4294901760
        %v4497 = vsub.f32 %v892, %v4496
        %v4498 = vand.u32 %v4497, 4294901760
        %v4499 = vsub.f32 %v4497, %v4498
        %v4500 = vand.u32 %v4499, 4294901760
        %4501 = vmatprep.subr.mxu0 %v4500
        %v4502 = vand.u32 %v891, 4294901760
        %v4503 = vsub.f32 %v891, %v4502
        %v4504 = vand.u32 %v4503, 4294901760
        %v4505 = vsub.f32 %v4503, %v4504
        %v4506 = vand.u32 %v4505, 4294901760
        %4507 = vmatpush1.msra.mxu0 %v4506
        %v4508 = vand.u32 %v876, 4294901760
        %v4509 = vsub.f32 %v876, %v4508
        %v4510 = vand.u32 %v4509, 4294901760
        %v4511 = vsub.f32 %v4509, %v4510
        %v4512 = vand.u32 %v4511, 4294901760
        %4513 = vmatprep.subr.mxu0 %v4512
        %v4514 = vand.u32 %v875, 4294901760
        %v4515 = vsub.f32 %v875, %v4514
        %v4516 = vand.u32 %v4515, 4294901760
        %v4517 = vsub.f32 %v4515, %v4516
        %v4518 = vand.u32 %v4517, 4294901760
        %4519 = vmatpush1.msra.mxu0 %v4518
        %4520 = vmatprep.subr.mxu0 0.0
        %4521 = vmatpush2.msra.mxu0 0.0
        %4522 = vmatprep.subr.mxu0 0.0
        %4523 = vmatpush2.msra.mxu0 0.0
        %4524 = vmatprep.subr.mxu0 0.0
        %4525 = vmatpush2.msra.mxu0 0.0
        %4526 = vmatprep.subr.mxu0 0.0
        %4527 = vmatpush2.msra.mxu0 0.0
        %4528 = vmatprep.subr.mxu0 0.0
        %4529 = vmatpush2.msra.mxu0 0.0
        %4530 = vmatprep.subr.mxu0 0.0
        %4531 = vmatpush2.msra.mxu0 0.0
        %4532 = vmatprep.subr.mxu0 0.0
        %4533 = vmatpush2.msra.mxu0 0.0
        %4534 = vmatprep.subr.mxu0 0.0
        %4535 = vmatpush2.msra.mxu0 0.0
        %4536 = vmatprep.subr.mxu0 0.0
        %4537 = vmatpush2.msra.mxu0 0.0
        %4538 = vmatprep.subr.mxu0 0.0
        %4539 = vmatpush2.msra.mxu0 0.0
        %4540 = vmatprep.subr.mxu0 0.0
        %4541 = vmatpush2.msra.mxu0 0.0
        %4542 = vmatprep.subr.mxu0 0.0
        %4543 = vmatpush2.msra.mxu0 0.0
        %4544 = vmatprep.subr.mxu0 0.0
        %4545 = vmatpush2.msra.mxu0 0.0
        %4546 = vmatprep.subr.mxu0 0.0
        %4547 = vmatpush2.msra.mxu0 0.0
        %4548 = vmatprep.subr.mxu0 0.0
        %4549 = vmatpush2.msra.mxu0 0.0
        %4550 = vmatprep.subr.mxu0 0.0
        %4551 = vmatpush2.msra.mxu0 0.0
        %4552 = vmatprep.mubr.f32.mxu0 0.0
        %v4553 = vand.u32 %v339, 4294901760
        %4554 = vmatmul.mubr.f32.gmra.mxu0 %v4553
        %v4555 = vpop.f32.mrf.mxu0
        %v4556 = vadd.f32 %v4443, %v4555
        %v4557 = vpop.f32.mrf.mxu0
        %v4558 = vadd.f32 %v4445, %v4557
        %4559 = vmatprep.mubr.f32.mxu0 0.0
        %v4560 = vand.u32 %v342, 4294901760
        %4561 = vmatmul.mubr.f32.gmra.mxu0 %v4560
        %v4562 = vpop.f32.mrf.mxu0
        %v4563 = vadd.f32 %v4454, %v4562
        %v4564 = vpop.f32.mrf.mxu0
        %v4565 = vadd.f32 %v4456, %v4564
        %4566 = vdwg.mxu0
        %4567 = vmatprep.subr.mxu0 0.0
        %4568 = vmatpush1.msra.mxu0 0.0
        %4569 = vmatprep.subr.mxu0 0.0
        %4570 = vmatpush1.msra.mxu0 0.0
        %4571 = vmatprep.subr.mxu0 0.0
        %4572 = vmatpush1.msra.mxu0 0.0
        %4573 = vmatprep.subr.mxu0 0.0
        %4574 = vmatpush1.msra.mxu0 0.0
        %4575 = vmatprep.subr.mxu0 0.0
        %4576 = vmatpush1.msra.mxu0 0.0
        %4577 = vmatprep.subr.mxu0 0.0
        %4578 = vmatpush1.msra.mxu0 0.0
        %4579 = vmatprep.subr.mxu0 0.0
        %4580 = vmatpush1.msra.mxu0 0.0
        %4581 = vmatprep.subr.mxu0 0.0
        %4582 = vmatpush1.msra.mxu0 0.0
        %4583 = vmatprep.subr.mxu0 0.0
        %4584 = vmatpush1.msra.mxu0 0.0
        %4585 = vmatprep.subr.mxu0 0.0
        %4586 = vmatpush1.msra.mxu0 0.0
        %4587 = vmatprep.subr.mxu0 0.0
        %4588 = vmatpush1.msra.mxu0 0.0
        %4589 = vmatprep.subr.mxu0 0.0
        %4590 = vmatpush1.msra.mxu0 0.0
        %4591 = vmatprep.subr.mxu0 0.0
        %4592 = vmatpush1.msra.mxu0 0.0
        %v4593 = vand.u32 %v961, 4294901760
        %v4594 = vsub.f32 %v961, %v4593
        %4595 = vmatprep.subr.mxu0 %v4594
        %v4596 = vand.u32 %v958, 4294901760
        %v4597 = vsub.f32 %v958, %v4596
        %4598 = vmatpush1.msra.mxu0 %v4597
        %v4599 = vand.u32 %v892, 4294901760
        %v4600 = vsub.f32 %v892, %v4599
        %4601 = vmatprep.subr.mxu0 %v4600
        %v4602 = vand.u32 %v891, 4294901760
        %v4603 = vsub.f32 %v891, %v4602
        %4604 = vmatpush1.msra.mxu0 %v4603
        %v4605 = vand.u32 %v876, 4294901760
        %v4606 = vsub.f32 %v876, %v4605
        %4607 = vmatprep.subr.mxu0 %v4606
        %v4608 = vand.u32 %v875, 4294901760
        %v4609 = vsub.f32 %v875, %v4608
        %4610 = vmatpush1.msra.mxu0 %v4609
        %4611 = vmatprep.subr.mxu0 0.0
        %4612 = vmatpush2.msra.mxu0 0.0
        %4613 = vmatprep.subr.mxu0 0.0
        %4614 = vmatpush2.msra.mxu0 0.0
        %4615 = vmatprep.subr.mxu0 0.0
        %4616 = vmatpush2.msra.mxu0 0.0
        %4617 = vmatprep.subr.mxu0 0.0
        %4618 = vmatpush2.msra.mxu0 0.0
        %4619 = vmatprep.subr.mxu0 0.0
        %4620 = vmatpush2.msra.mxu0 0.0
        %4621 = vmatprep.subr.mxu0 0.0
        %4622 = vmatpush2.msra.mxu0 0.0
        %4623 = vmatprep.subr.mxu0 0.0
        %4624 = vmatpush2.msra.mxu0 0.0
        %4625 = vmatprep.subr.mxu0 0.0
        %4626 = vmatpush2.msra.mxu0 0.0
        %4627 = vmatprep.subr.mxu0 0.0
        %4628 = vmatpush2.msra.mxu0 0.0
        %4629 = vmatprep.subr.mxu0 0.0
        %4630 = vmatpush2.msra.mxu0 0.0
        %4631 = vmatprep.subr.mxu0 0.0
        %4632 = vmatpush2.msra.mxu0 0.0
        %4633 = vmatprep.subr.mxu0 0.0
        %4634 = vmatpush2.msra.mxu0 0.0
        %4635 = vmatprep.subr.mxu0 0.0
        %4636 = vmatpush2.msra.mxu0 0.0
        %4637 = vmatprep.subr.mxu0 0.0
        %4638 = vmatpush2.msra.mxu0 0.0
        %4639 = vmatprep.subr.mxu0 0.0
        %4640 = vmatpush2.msra.mxu0 0.0
        %4641 = vmatprep.subr.mxu0 0.0
        %4642 = vmatpush2.msra.mxu0 0.0
        %4643 = vmatprep.mubr.f32.mxu0 0.0
        %v4644 = vand.u32 %v339, 4294901760
        %v4645 = vsub.f32 %v339, %v4644
        %4646 = vmatmul.mubr.f32.gmra.mxu0 %v4645
        %v4647 = vpop.f32.mrf.mxu0
        %v4648 = vadd.f32 %v4556, %v4647
        %v4649 = vpop.f32.mrf.mxu0
        %v4650 = vadd.f32 %v4558, %v4649
        %4651 = vmatprep.mubr.f32.mxu0 0.0
        %v4652 = vand.u32 %v342, 4294901760
        %v4653 = vsub.f32 %v342, %v4652
        %4654 = vmatmul.mubr.f32.gmra.mxu0 %v4653
        %v4655 = vpop.f32.mrf.mxu0
        %v4656 = vadd.f32 %v4563, %v4655
        %v4657 = vpop.f32.mrf.mxu0
        %v4658 = vadd.f32 %v4565, %v4657
        %4659 = vdwg.mxu0
        %4660 = vmatprep.subr.mxu0 0.0
        %4661 = vmatpush1.msra.mxu0 0.0
        %4662 = vmatprep.subr.mxu0 0.0
        %4663 = vmatpush1.msra.mxu0 0.0
        %4664 = vmatprep.subr.mxu0 0.0
        %4665 = vmatpush1.msra.mxu0 0.0
        %4666 = vmatprep.subr.mxu0 0.0
        %4667 = vmatpush1.msra.mxu0 0.0
        %4668 = vmatprep.subr.mxu0 0.0
        %4669 = vmatpush1.msra.mxu0 0.0
        %4670 = vmatprep.subr.mxu0 0.0
        %4671 = vmatpush1.msra.mxu0 0.0
        %4672 = vmatprep.subr.mxu0 0.0
        %4673 = vmatpush1.msra.mxu0 0.0
        %4674 = vmatprep.subr.mxu0 0.0
        %4675 = vmatpush1.msra.mxu0 0.0
        %4676 = vmatprep.subr.mxu0 0.0
        %4677 = vmatpush1.msra.mxu0 0.0
        %4678 = vmatprep.subr.mxu0 0.0
        %4679 = vmatpush1.msra.mxu0 0.0
        %4680 = vmatprep.subr.mxu0 0.0
        %4681 = vmatpush1.msra.mxu0 0.0
        %4682 = vmatprep.subr.mxu0 0.0
        %4683 = vmatpush1.msra.mxu0 0.0
        %4684 = vmatprep.subr.mxu0 0.0
        %4685 = vmatpush1.msra.mxu0 0.0
        %v4686 = vand.u32 %v961, 4294901760
        %4687 = vmatprep.subr.mxu0 %v4686
        %v4688 = vand.u32 %v958, 4294901760
        %4689 = vmatpush1.msra.mxu0 %v4688
        %v4690 = vand.u32 %v892, 4294901760
        %4691 = vmatprep.subr.mxu0 %v4690
        %v4692 = vand.u32 %v891, 4294901760
        %4693 = vmatpush1.msra.mxu0 %v4692
        %v4694 = vand.u32 %v876, 4294901760
        %4695 = vmatprep.subr.mxu0 %v4694
        %v4696 = vand.u32 %v875, 4294901760
        %4697 = vmatpush1.msra.mxu0 %v4696
        %4698 = vmatprep.subr.mxu0 0.0
        %4699 = vmatpush2.msra.mxu0 0.0
        %4700 = vmatprep.subr.mxu0 0.0
        %4701 = vmatpush2.msra.mxu0 0.0
        %4702 = vmatprep.subr.mxu0 0.0
        %4703 = vmatpush2.msra.mxu0 0.0
        %4704 = vmatprep.subr.mxu0 0.0
        %4705 = vmatpush2.msra.mxu0 0.0
        %4706 = vmatprep.subr.mxu0 0.0
        %4707 = vmatpush2.msra.mxu0 0.0
        %4708 = vmatprep.subr.mxu0 0.0
        %4709 = vmatpush2.msra.mxu0 0.0
        %4710 = vmatprep.subr.mxu0 0.0
        %4711 = vmatpush2.msra.mxu0 0.0
        %4712 = vmatprep.subr.mxu0 0.0
        %4713 = vmatpush2.msra.mxu0 0.0
        %4714 = vmatprep.subr.mxu0 0.0
        %4715 = vmatpush2.msra.mxu0 0.0
        %4716 = vmatprep.subr.mxu0 0.0
        %4717 = vmatpush2.msra.mxu0 0.0
        %4718 = vmatprep.subr.mxu0 0.0
        %4719 = vmatpush2.msra.mxu0 0.0
        %4720 = vmatprep.subr.mxu0 0.0
        %4721 = vmatpush2.msra.mxu0 0.0
        %4722 = vmatprep.subr.mxu0 0.0
        %4723 = vmatpush2.msra.mxu0 0.0
        %4724 = vmatprep.subr.mxu0 0.0
        %4725 = vmatpush2.msra.mxu0 0.0
        %4726 = vmatprep.subr.mxu0 0.0
        %4727 = vmatpush2.msra.mxu0 0.0
        %4728 = vmatprep.subr.mxu0 0.0
        %4729 = vmatpush2.msra.mxu0 0.0
        %4730 = vmatprep.mubr.f32.mxu0 0.0
        %v4731 = vand.u32 %v339, 4294901760
        %v4732 = vsub.f32 %v339, %v4731
        %v4733 = vand.u32 %v4732, 4294901760
        %4734 = vmatmul.mubr.f32.gmra.mxu0 %v4733
        %v4735 = vpop.f32.mrf.mxu0
        %v4736 = vadd.f32 %v4648, %v4735
        %v4737 = vpop.f32.mrf.mxu0
        %v4738 = vadd.f32 %v4650, %v4737
        %4739 = vmatprep.mubr.f32.mxu0 0.0
        %v4740 = vand.u32 %v342, 4294901760
        %v4741 = vsub.f32 %v342, %v4740
        %v4742 = vand.u32 %v4741, 4294901760
        %4743 = vmatmul.mubr.f32.gmra.mxu0 %v4742
        %v4744 = vpop.f32.mrf.mxu0
        %v4745 = vadd.f32 %v4656, %v4744
        %v4746 = vpop.f32.mrf.mxu0
        %v4747 = vadd.f32 %v4658, %v4746
        %4748 = vdwg.mxu0
        %4749 = vmatprep.subr.mxu0 0.0
        %4750 = vmatpush1.msra.mxu0 0.0
        %4751 = vmatprep.subr.mxu0 0.0
        %4752 = vmatpush1.msra.mxu0 0.0
        %4753 = vmatprep.subr.mxu0 0.0
        %4754 = vmatpush1.msra.mxu0 0.0
        %4755 = vmatprep.subr.mxu0 0.0
        %4756 = vmatpush1.msra.mxu0 0.0
        %4757 = vmatprep.subr.mxu0 0.0
        %4758 = vmatpush1.msra.mxu0 0.0
        %4759 = vmatprep.subr.mxu0 0.0
        %4760 = vmatpush1.msra.mxu0 0.0
        %4761 = vmatprep.subr.mxu0 0.0
        %4762 = vmatpush1.msra.mxu0 0.0
        %4763 = vmatprep.subr.mxu0 0.0
        %4764 = vmatpush1.msra.mxu0 0.0
        %4765 = vmatprep.subr.mxu0 0.0
        %4766 = vmatpush1.msra.mxu0 0.0
        %4767 = vmatprep.subr.mxu0 0.0
        %4768 = vmatpush1.msra.mxu0 0.0
        %4769 = vmatprep.subr.mxu0 0.0
        %4770 = vmatpush1.msra.mxu0 0.0
        %4771 = vmatprep.subr.mxu0 0.0
        %4772 = vmatpush1.msra.mxu0 0.0
        %4773 = vmatprep.subr.mxu0 0.0
        %4774 = vmatpush1.msra.mxu0 0.0
        %v4775 = vand.u32 %v961, 4294901760
        %v4776 = vsub.f32 %v961, %v4775
        %v4777 = vand.u32 %v4776, 4294901760
        %4778 = vmatprep.subr.mxu0 %v4777
        %v4779 = vand.u32 %v958, 4294901760
        %v4780 = vsub.f32 %v958, %v4779
        %v4781 = vand.u32 %v4780, 4294901760
        %4782 = vmatpush1.msra.mxu0 %v4781
        %v4783 = vand.u32 %v892, 4294901760
        %v4784 = vsub.f32 %v892, %v4783
        %v4785 = vand.u32 %v4784, 4294901760
        %4786 = vmatprep.subr.mxu0 %v4785
        %v4787 = vand.u32 %v891, 4294901760
        %v4788 = vsub.f32 %v891, %v4787
        %v4789 = vand.u32 %v4788, 4294901760
        %4790 = vmatpush1.msra.mxu0 %v4789
        %v4791 = vand.u32 %v876, 4294901760
        %v4792 = vsub.f32 %v876, %v4791
        %v4793 = vand.u32 %v4792, 4294901760
        %4794 = vmatprep.subr.mxu0 %v4793
        %v4795 = vand.u32 %v875, 4294901760
        %v4796 = vsub.f32 %v875, %v4795
        %v4797 = vand.u32 %v4796, 4294901760
        %4798 = vmatpush1.msra.mxu0 %v4797
        %4799 = vmatprep.subr.mxu0 0.0
        %4800 = vmatpush2.msra.mxu0 0.0
        %4801 = vmatprep.subr.mxu0 0.0
        %4802 = vmatpush2.msra.mxu0 0.0
        %4803 = vmatprep.subr.mxu0 0.0
        %4804 = vmatpush2.msra.mxu0 0.0
        %4805 = vmatprep.subr.mxu0 0.0
        %4806 = vmatpush2.msra.mxu0 0.0
        %4807 = vmatprep.subr.mxu0 0.0
        %4808 = vmatpush2.msra.mxu0 0.0
        %4809 = vmatprep.subr.mxu0 0.0
        %4810 = vmatpush2.msra.mxu0 0.0
        %4811 = vmatprep.subr.mxu0 0.0
        %4812 = vmatpush2.msra.mxu0 0.0
        %4813 = vmatprep.subr.mxu0 0.0
        %4814 = vmatpush2.msra.mxu0 0.0
        %4815 = vmatprep.subr.mxu0 0.0
        %4816 = vmatpush2.msra.mxu0 0.0
        %4817 = vmatprep.subr.mxu0 0.0
        %4818 = vmatpush2.msra.mxu0 0.0
        %4819 = vmatprep.subr.mxu0 0.0
        %4820 = vmatpush2.msra.mxu0 0.0
        %4821 = vmatprep.subr.mxu0 0.0
        %4822 = vmatpush2.msra.mxu0 0.0
        %4823 = vmatprep.subr.mxu0 0.0
        %4824 = vmatpush2.msra.mxu0 0.0
        %4825 = vmatprep.subr.mxu0 0.0
        %4826 = vmatpush2.msra.mxu0 0.0
        %4827 = vmatprep.subr.mxu0 0.0
        %4828 = vmatpush2.msra.mxu0 0.0
        %4829 = vmatprep.subr.mxu0 0.0
        %4830 = vmatpush2.msra.mxu0 0.0
        %4831 = vmatprep.mubr.f32.mxu0 0.0
        %v4832 = vand.u32 %v339, 4294901760
        %4833 = vmatmul.mubr.f32.gmra.mxu0 %v4832
        %v4834 = vpop.f32.mrf.mxu0
        %v4835 = vadd.f32 %v4736, %v4834
        %v4836 = vpop.f32.mrf.mxu0
        %v4837 = vadd.f32 %v4738, %v4836
        %4838 = vmatprep.mubr.f32.mxu0 0.0
        %v4839 = vand.u32 %v342, 4294901760
        %4840 = vmatmul.mubr.f32.gmra.mxu0 %v4839
        %v4841 = vpop.f32.mrf.mxu0
        %v4842 = vadd.f32 %v4745, %v4841
        %v4843 = vpop.f32.mrf.mxu0
        %v4844 = vadd.f32 %v4747, %v4843
        %4845 = vdwg.mxu0
        %4846 = vmatprep.subr.mxu0 0.0
        %4847 = vmatpush1.msra.mxu0 0.0
        %4848 = vmatprep.subr.mxu0 0.0
        %4849 = vmatpush1.msra.mxu0 0.0
        %4850 = vmatprep.subr.mxu0 0.0
        %4851 = vmatpush1.msra.mxu0 0.0
        %4852 = vmatprep.subr.mxu0 0.0
        %4853 = vmatpush1.msra.mxu0 0.0
        %4854 = vmatprep.subr.mxu0 0.0
        %4855 = vmatpush1.msra.mxu0 0.0
        %4856 = vmatprep.subr.mxu0 0.0
        %4857 = vmatpush1.msra.mxu0 0.0
        %4858 = vmatprep.subr.mxu0 0.0
        %4859 = vmatpush1.msra.mxu0 0.0
        %4860 = vmatprep.subr.mxu0 0.0
        %4861 = vmatpush1.msra.mxu0 0.0
        %4862 = vmatprep.subr.mxu0 0.0
        %4863 = vmatpush1.msra.mxu0 0.0
        %4864 = vmatprep.subr.mxu0 0.0
        %4865 = vmatpush1.msra.mxu0 0.0
        %4866 = vmatprep.subr.mxu0 0.0
        %4867 = vmatpush1.msra.mxu0 0.0
        %4868 = vmatprep.subr.mxu0 0.0
        %4869 = vmatpush1.msra.mxu0 0.0
        %4870 = vmatprep.subr.mxu0 0.0
        %4871 = vmatpush1.msra.mxu0 0.0
        %v4872 = vand.u32 %v961, 4294901760
        %4873 = vmatprep.subr.mxu0 %v4872
        %v4874 = vand.u32 %v958, 4294901760
        %4875 = vmatpush1.msra.mxu0 %v4874
        %v4876 = vand.u32 %v892, 4294901760
        %4877 = vmatprep.subr.mxu0 %v4876
        %v4878 = vand.u32 %v891, 4294901760
        %4879 = vmatpush1.msra.mxu0 %v4878
        %v4880 = vand.u32 %v876, 4294901760
        %4881 = vmatprep.subr.mxu0 %v4880
        %v4882 = vand.u32 %v875, 4294901760
        %4883 = vmatpush1.msra.mxu0 %v4882
        %4884 = vmatprep.subr.mxu0 0.0
        %4885 = vmatpush2.msra.mxu0 0.0
        %4886 = vmatprep.subr.mxu0 0.0
        %4887 = vmatpush2.msra.mxu0 0.0
        %4888 = vmatprep.subr.mxu0 0.0
        %4889 = vmatpush2.msra.mxu0 0.0
        %4890 = vmatprep.subr.mxu0 0.0
        %4891 = vmatpush2.msra.mxu0 0.0
        %4892 = vmatprep.subr.mxu0 0.0
        %4893 = vmatpush2.msra.mxu0 0.0
        %4894 = vmatprep.subr.mxu0 0.0
        %4895 = vmatpush2.msra.mxu0 0.0
        %4896 = vmatprep.subr.mxu0 0.0
        %4897 = vmatpush2.msra.mxu0 0.0
        %4898 = vmatprep.subr.mxu0 0.0
        %4899 = vmatpush2.msra.mxu0 0.0
        %4900 = vmatprep.subr.mxu0 0.0
        %4901 = vmatpush2.msra.mxu0 0.0
        %4902 = vmatprep.subr.mxu0 0.0
        %4903 = vmatpush2.msra.mxu0 0.0
        %4904 = vmatprep.subr.mxu0 0.0
        %4905 = vmatpush2.msra.mxu0 0.0
        %4906 = vmatprep.subr.mxu0 0.0
        %4907 = vmatpush2.msra.mxu0 0.0
        %4908 = vmatprep.subr.mxu0 0.0
        %4909 = vmatpush2.msra.mxu0 0.0
        %4910 = vmatprep.subr.mxu0 0.0
        %4911 = vmatpush2.msra.mxu0 0.0
        %4912 = vmatprep.subr.mxu0 0.0
        %4913 = vmatpush2.msra.mxu0 0.0
        %4914 = vmatprep.subr.mxu0 0.0
        %4915 = vmatpush2.msra.mxu0 0.0
        %4916 = vmatprep.mubr.f32.mxu0 0.0
        %v4917 = vand.u32 %v339, 4294901760
        %4918 = vmatmul.mubr.f32.gmra.mxu0 %v4917
        %v4919 = vpop.f32.mrf.mxu0
        %v4920 = vadd.f32 %v4835, %v4919
        %v4921 = vpop.f32.mrf.mxu0
        %v4922 = vadd.f32 %v4837, %v4921
        %4923 = vmatprep.mubr.f32.mxu0 0.0
        %v4924 = vand.u32 %v342, 4294901760
        %4925 = vmatmul.mubr.f32.gmra.mxu0 %v4924
        %v4926 = vpop.f32.mrf.mxu0
        %v4927 = vadd.f32 %v4842, %v4926
        %v4928 = vpop.f32.mrf.mxu0
        %v4929 = vadd.f32 %v4844, %v4928
        %4930 = vdwg.mxu0
        %4931 = vmatprep.subr.mxu0 0.0
        %4932 = vmatpush1.msra.mxu0 0.0
        %4933 = vmatprep.subr.mxu0 0.0
        %4934 = vmatpush1.msra.mxu0 0.0
        %4935 = vmatprep.subr.mxu0 0.0
        %4936 = vmatpush1.msra.mxu0 0.0
        %4937 = vmatprep.subr.mxu0 0.0
        %4938 = vmatpush1.msra.mxu0 0.0
        %4939 = vmatprep.subr.mxu0 0.0
        %4940 = vmatpush1.msra.mxu0 0.0
        %4941 = vmatprep.subr.mxu0 0.0
        %4942 = vmatpush1.msra.mxu0 0.0
        %4943 = vmatprep.subr.mxu0 0.0
        %4944 = vmatpush1.msra.mxu0 0.0
        %4945 = vmatprep.subr.mxu0 0.0
        %4946 = vmatpush1.msra.mxu0 0.0
        %4947 = vmatprep.subr.mxu0 0.0
        %4948 = vmatpush1.msra.mxu0 0.0
        %4949 = vmatprep.subr.mxu0 0.0
        %4950 = vmatpush1.msra.mxu0 0.0
        %4951 = vmatprep.subr.mxu0 0.0
        %4952 = vmatpush1.msra.mxu0 0.0
        %4953 = vmatprep.subr.mxu0 0.0
        %4954 = vmatpush1.msra.mxu0 0.0
        %4955 = vmatprep.subr.mxu0 0.0
        %4956 = vmatpush1.msra.mxu0 0.0
        %v4957 = vand.u32 %v967, 4294901760
        %4958 = vmatprep.subr.mxu0 %v4957
        %v4959 = vand.u32 %v964, 4294901760
        %4960 = vmatpush1.msra.mxu0 %v4959
        %v4961 = vand.u32 %v894, 4294901760
        %4962 = vmatprep.subr.mxu0 %v4961
        %v4963 = vand.u32 %v893, 4294901760
        %4964 = vmatpush1.msra.mxu0 %v4963
        %v4965 = vand.u32 %v878, 4294901760
        %4966 = vmatprep.subr.mxu0 %v4965
        %v4967 = vand.u32 %v877, 4294901760
        %4968 = vmatpush1.msra.mxu0 %v4967
        %4969 = vmatprep.subr.mxu0 0.0
        %4970 = vmatpush2.msra.mxu0 0.0
        %4971 = vmatprep.subr.mxu0 0.0
        %4972 = vmatpush2.msra.mxu0 0.0
        %4973 = vmatprep.subr.mxu0 0.0
        %4974 = vmatpush2.msra.mxu0 0.0
        %4975 = vmatprep.subr.mxu0 0.0
        %4976 = vmatpush2.msra.mxu0 0.0
        %4977 = vmatprep.subr.mxu0 0.0
        %4978 = vmatpush2.msra.mxu0 0.0
        %4979 = vmatprep.subr.mxu0 0.0
        %4980 = vmatpush2.msra.mxu0 0.0
        %4981 = vmatprep.subr.mxu0 0.0
        %4982 = vmatpush2.msra.mxu0 0.0
        %4983 = vmatprep.subr.mxu0 0.0
        %4984 = vmatpush2.msra.mxu0 0.0
        %4985 = vmatprep.subr.mxu0 0.0
        %4986 = vmatpush2.msra.mxu0 0.0
        %4987 = vmatprep.subr.mxu0 0.0
        %4988 = vmatpush2.msra.mxu0 0.0
        %4989 = vmatprep.subr.mxu0 0.0
        %4990 = vmatpush2.msra.mxu0 0.0
        %4991 = vmatprep.subr.mxu0 0.0
        %4992 = vmatpush2.msra.mxu0 0.0
        %4993 = vmatprep.subr.mxu0 0.0
        %4994 = vmatpush2.msra.mxu0 0.0
        %4995 = vmatprep.subr.mxu0 0.0
        %4996 = vmatpush2.msra.mxu0 0.0
        %4997 = vmatprep.subr.mxu0 0.0
        %4998 = vmatpush2.msra.mxu0 0.0
        %4999 = vmatprep.subr.mxu0 0.0
        %5000 = vmatpush2.msra.mxu0 0.0
        %5001 = vmatprep.mubr.f32.mxu0 0.0
        %v5002 = vand.u32 %v339, 4294901760
        %v5003 = vsub.f32 %v339, %v5002
        %v5004 = vand.u32 %v5003, 4294901760
        %v5005 = vsub.f32 %v5003, %v5004
        %v5006 = vand.u32 %v5005, 4294901760
        %5007 = vmatmul.mubr.f32.gmra.mxu0 %v5006
        %v5008 = vpop.f32.mrf.mxu0
        %v5009 = vadd.f32 %v914, %v5008
        %v5010 = vpop.f32.mrf.mxu0
        %v5011 = vadd.f32 %v914, %v5010
        %5012 = vmatprep.mubr.f32.mxu0 0.0
        %v5013 = vand.u32 %v342, 4294901760
        %v5014 = vsub.f32 %v342, %v5013
        %v5015 = vand.u32 %v5014, 4294901760
        %v5016 = vsub.f32 %v5014, %v5015
        %v5017 = vand.u32 %v5016, 4294901760
        %5018 = vmatmul.mubr.f32.gmra.mxu0 %v5017
        %v5019 = vpop.f32.mrf.mxu0
        %v5020 = vadd.f32 %v919, %v5019
        %v5021 = vpop.f32.mrf.mxu0
        %v5022 = vadd.f32 %v919, %v5021
        %5023 = vdwg.mxu0
        %5024 = vmatprep.subr.mxu0 0.0
        %5025 = vmatpush1.msra.mxu0 0.0
        %5026 = vmatprep.subr.mxu0 0.0
        %5027 = vmatpush1.msra.mxu0 0.0
        %5028 = vmatprep.subr.mxu0 0.0
        %5029 = vmatpush1.msra.mxu0 0.0
        %5030 = vmatprep.subr.mxu0 0.0
        %5031 = vmatpush1.msra.mxu0 0.0
        %5032 = vmatprep.subr.mxu0 0.0
        %5033 = vmatpush1.msra.mxu0 0.0
        %5034 = vmatprep.subr.mxu0 0.0
        %5035 = vmatpush1.msra.mxu0 0.0
        %5036 = vmatprep.subr.mxu0 0.0
        %5037 = vmatpush1.msra.mxu0 0.0
        %5038 = vmatprep.subr.mxu0 0.0
        %5039 = vmatpush1.msra.mxu0 0.0
        %5040 = vmatprep.subr.mxu0 0.0
        %5041 = vmatpush1.msra.mxu0 0.0
        %5042 = vmatprep.subr.mxu0 0.0
        %5043 = vmatpush1.msra.mxu0 0.0
        %5044 = vmatprep.subr.mxu0 0.0
        %5045 = vmatpush1.msra.mxu0 0.0
        %5046 = vmatprep.subr.mxu0 0.0
        %5047 = vmatpush1.msra.mxu0 0.0
        %5048 = vmatprep.subr.mxu0 0.0
        %5049 = vmatpush1.msra.mxu0 0.0
        %v5050 = vand.u32 %v967, 4294901760
        %v5051 = vsub.f32 %v967, %v5050
        %v5052 = vand.u32 %v5051, 4294901760
        %v5053 = vsub.f32 %v5051, %v5052
        %v5054 = vand.u32 %v5053, 4294901760
        %5055 = vmatprep.subr.mxu0 %v5054
        %v5056 = vand.u32 %v964, 4294901760
        %v5057 = vsub.f32 %v964, %v5056
        %v5058 = vand.u32 %v5057, 4294901760
        %v5059 = vsub.f32 %v5057, %v5058
        %v5060 = vand.u32 %v5059, 4294901760
        %5061 = vmatpush1.msra.mxu0 %v5060
        %v5062 = vand.u32 %v894, 4294901760
        %v5063 = vsub.f32 %v894, %v5062
        %v5064 = vand.u32 %v5063, 4294901760
        %v5065 = vsub.f32 %v5063, %v5064
        %v5066 = vand.u32 %v5065, 4294901760
        %5067 = vmatprep.subr.mxu0 %v5066
        %v5068 = vand.u32 %v893, 4294901760
        %v5069 = vsub.f32 %v893, %v5068
        %v5070 = vand.u32 %v5069, 4294901760
        %v5071 = vsub.f32 %v5069, %v5070
        %v5072 = vand.u32 %v5071, 4294901760
        %5073 = vmatpush1.msra.mxu0 %v5072
        %v5074 = vand.u32 %v878, 4294901760
        %v5075 = vsub.f32 %v878, %v5074
        %v5076 = vand.u32 %v5075, 4294901760
        %v5077 = vsub.f32 %v5075, %v5076
        %v5078 = vand.u32 %v5077, 4294901760
        %5079 = vmatprep.subr.mxu0 %v5078
        %v5080 = vand.u32 %v877, 4294901760
        %v5081 = vsub.f32 %v877, %v5080
        %v5082 = vand.u32 %v5081, 4294901760
        %v5083 = vsub.f32 %v5081, %v5082
        %v5084 = vand.u32 %v5083, 4294901760
        %5085 = vmatpush1.msra.mxu0 %v5084
        %5086 = vmatprep.subr.mxu0 0.0
        %5087 = vmatpush2.msra.mxu0 0.0
        %5088 = vmatprep.subr.mxu0 0.0
        %5089 = vmatpush2.msra.mxu0 0.0
        %5090 = vmatprep.subr.mxu0 0.0
        %5091 = vmatpush2.msra.mxu0 0.0
        %5092 = vmatprep.subr.mxu0 0.0
        %5093 = vmatpush2.msra.mxu0 0.0
        %5094 = vmatprep.subr.mxu0 0.0
        %5095 = vmatpush2.msra.mxu0 0.0
        %5096 = vmatprep.subr.mxu0 0.0
        %5097 = vmatpush2.msra.mxu0 0.0
        %5098 = vmatprep.subr.mxu0 0.0
        %5099 = vmatpush2.msra.mxu0 0.0
        %5100 = vmatprep.subr.mxu0 0.0
        %5101 = vmatpush2.msra.mxu0 0.0
        %5102 = vmatprep.subr.mxu0 0.0
        %5103 = vmatpush2.msra.mxu0 0.0
        %5104 = vmatprep.subr.mxu0 0.0
        %5105 = vmatpush2.msra.mxu0 0.0
        %5106 = vmatprep.subr.mxu0 0.0
        %5107 = vmatpush2.msra.mxu0 0.0
        %5108 = vmatprep.subr.mxu0 0.0
        %5109 = vmatpush2.msra.mxu0 0.0
        %5110 = vmatprep.subr.mxu0 0.0
        %5111 = vmatpush2.msra.mxu0 0.0
        %5112 = vmatprep.subr.mxu0 0.0
        %5113 = vmatpush2.msra.mxu0 0.0
        %5114 = vmatprep.subr.mxu0 0.0
        %5115 = vmatpush2.msra.mxu0 0.0
        %5116 = vmatprep.subr.mxu0 0.0
        %5117 = vmatpush2.msra.mxu0 0.0
        %5118 = vmatprep.mubr.f32.mxu0 0.0
        %v5119 = vand.u32 %v339, 4294901760
        %5120 = vmatmul.mubr.f32.gmra.mxu0 %v5119
        %v5121 = vpop.f32.mrf.mxu0
        %v5122 = vadd.f32 %v5009, %v5121
        %v5123 = vpop.f32.mrf.mxu0
        %v5124 = vadd.f32 %v5011, %v5123
        %5125 = vmatprep.mubr.f32.mxu0 0.0
        %v5126 = vand.u32 %v342, 4294901760
        %5127 = vmatmul.mubr.f32.gmra.mxu0 %v5126
        %v5128 = vpop.f32.mrf.mxu0
        %v5129 = vadd.f32 %v5020, %v5128
        %v5130 = vpop.f32.mrf.mxu0
        %v5131 = vadd.f32 %v5022, %v5130
        %5132 = vdwg.mxu0
        %5133 = vmatprep.subr.mxu0 0.0
        %5134 = vmatpush1.msra.mxu0 0.0
        %5135 = vmatprep.subr.mxu0 0.0
        %5136 = vmatpush1.msra.mxu0 0.0
        %5137 = vmatprep.subr.mxu0 0.0
        %5138 = vmatpush1.msra.mxu0 0.0
        %5139 = vmatprep.subr.mxu0 0.0
        %5140 = vmatpush1.msra.mxu0 0.0
        %5141 = vmatprep.subr.mxu0 0.0
        %5142 = vmatpush1.msra.mxu0 0.0
        %5143 = vmatprep.subr.mxu0 0.0
        %5144 = vmatpush1.msra.mxu0 0.0
        %5145 = vmatprep.subr.mxu0 0.0
        %5146 = vmatpush1.msra.mxu0 0.0
        %5147 = vmatprep.subr.mxu0 0.0
        %5148 = vmatpush1.msra.mxu0 0.0
        %5149 = vmatprep.subr.mxu0 0.0
        %5150 = vmatpush1.msra.mxu0 0.0
        %5151 = vmatprep.subr.mxu0 0.0
        %5152 = vmatpush1.msra.mxu0 0.0
        %5153 = vmatprep.subr.mxu0 0.0
        %5154 = vmatpush1.msra.mxu0 0.0
        %5155 = vmatprep.subr.mxu0 0.0
        %5156 = vmatpush1.msra.mxu0 0.0
        %5157 = vmatprep.subr.mxu0 0.0
        %5158 = vmatpush1.msra.mxu0 0.0
        %v5159 = vand.u32 %v967, 4294901760
        %v5160 = vsub.f32 %v967, %v5159
        %5161 = vmatprep.subr.mxu0 %v5160
        %v5162 = vand.u32 %v964, 4294901760
        %v5163 = vsub.f32 %v964, %v5162
        %5164 = vmatpush1.msra.mxu0 %v5163
        %v5165 = vand.u32 %v894, 4294901760
        %v5166 = vsub.f32 %v894, %v5165
        %5167 = vmatprep.subr.mxu0 %v5166
        %v5168 = vand.u32 %v893, 4294901760
        %v5169 = vsub.f32 %v893, %v5168
        %5170 = vmatpush1.msra.mxu0 %v5169
        %v5171 = vand.u32 %v878, 4294901760
        %v5172 = vsub.f32 %v878, %v5171
        %5173 = vmatprep.subr.mxu0 %v5172
        %v5174 = vand.u32 %v877, 4294901760
        %v5175 = vsub.f32 %v877, %v5174
        %5176 = vmatpush1.msra.mxu0 %v5175
        %5177 = vmatprep.subr.mxu0 0.0
        %5178 = vmatpush2.msra.mxu0 0.0
        %5179 = vmatprep.subr.mxu0 0.0
        %5180 = vmatpush2.msra.mxu0 0.0
        %5181 = vmatprep.subr.mxu0 0.0
        %5182 = vmatpush2.msra.mxu0 0.0
        %5183 = vmatprep.subr.mxu0 0.0
        %5184 = vmatpush2.msra.mxu0 0.0
        %5185 = vmatprep.subr.mxu0 0.0
        %5186 = vmatpush2.msra.mxu0 0.0
        %5187 = vmatprep.subr.mxu0 0.0
        %5188 = vmatpush2.msra.mxu0 0.0
        %5189 = vmatprep.subr.mxu0 0.0
        %5190 = vmatpush2.msra.mxu0 0.0
        %5191 = vmatprep.subr.mxu0 0.0
        %5192 = vmatpush2.msra.mxu0 0.0
        %5193 = vmatprep.subr.mxu0 0.0
        %5194 = vmatpush2.msra.mxu0 0.0
        %5195 = vmatprep.subr.mxu0 0.0
        %5196 = vmatpush2.msra.mxu0 0.0
        %5197 = vmatprep.subr.mxu0 0.0
        %5198 = vmatpush2.msra.mxu0 0.0
        %5199 = vmatprep.subr.mxu0 0.0
        %5200 = vmatpush2.msra.mxu0 0.0
        %5201 = vmatprep.subr.mxu0 0.0
        %5202 = vmatpush2.msra.mxu0 0.0
        %5203 = vmatprep.subr.mxu0 0.0
        %5204 = vmatpush2.msra.mxu0 0.0
        %5205 = vmatprep.subr.mxu0 0.0
        %5206 = vmatpush2.msra.mxu0 0.0
        %5207 = vmatprep.subr.mxu0 0.0
        %5208 = vmatpush2.msra.mxu0 0.0
        %5209 = vmatprep.mubr.f32.mxu0 0.0
        %v5210 = vand.u32 %v339, 4294901760
        %v5211 = vsub.f32 %v339, %v5210
        %5212 = vmatmul.mubr.f32.gmra.mxu0 %v5211
        %v5213 = vpop.f32.mrf.mxu0
        %v5214 = vadd.f32 %v5122, %v5213
        %v5215 = vpop.f32.mrf.mxu0
        %v5216 = vadd.f32 %v5124, %v5215
        %5217 = vmatprep.mubr.f32.mxu0 0.0
        %v5218 = vand.u32 %v342, 4294901760
        %v5219 = vsub.f32 %v342, %v5218
        %5220 = vmatmul.mubr.f32.gmra.mxu0 %v5219
        %v5221 = vpop.f32.mrf.mxu0
        %v5222 = vadd.f32 %v5129, %v5221
        %v5223 = vpop.f32.mrf.mxu0
        %v5224 = vadd.f32 %v5131, %v5223
        %5225 = vdwg.mxu0
        %5226 = vmatprep.subr.mxu0 0.0
        %5227 = vmatpush1.msra.mxu0 0.0
        %5228 = vmatprep.subr.mxu0 0.0
        %5229 = vmatpush1.msra.mxu0 0.0
        %5230 = vmatprep.subr.mxu0 0.0
        %5231 = vmatpush1.msra.mxu0 0.0
        %5232 = vmatprep.subr.mxu0 0.0
        %5233 = vmatpush1.msra.mxu0 0.0
        %5234 = vmatprep.subr.mxu0 0.0
        %5235 = vmatpush1.msra.mxu0 0.0
        %5236 = vmatprep.subr.mxu0 0.0
        %5237 = vmatpush1.msra.mxu0 0.0
        %5238 = vmatprep.subr.mxu0 0.0
        %5239 = vmatpush1.msra.mxu0 0.0
        %5240 = vmatprep.subr.mxu0 0.0
        %5241 = vmatpush1.msra.mxu0 0.0
        %5242 = vmatprep.subr.mxu0 0.0
        %5243 = vmatpush1.msra.mxu0 0.0
        %5244 = vmatprep.subr.mxu0 0.0
        %5245 = vmatpush1.msra.mxu0 0.0
        %5246 = vmatprep.subr.mxu0 0.0
        %5247 = vmatpush1.msra.mxu0 0.0
        %5248 = vmatprep.subr.mxu0 0.0
        %5249 = vmatpush1.msra.mxu0 0.0
        %5250 = vmatprep.subr.mxu0 0.0
        %5251 = vmatpush1.msra.mxu0 0.0
        %v5252 = vand.u32 %v967, 4294901760
        %5253 = vmatprep.subr.mxu0 %v5252
        %v5254 = vand.u32 %v964, 4294901760
        %5255 = vmatpush1.msra.mxu0 %v5254
        %v5256 = vand.u32 %v894, 4294901760
        %5257 = vmatprep.subr.mxu0 %v5256
        %v5258 = vand.u32 %v893, 4294901760
        %5259 = vmatpush1.msra.mxu0 %v5258
        %v5260 = vand.u32 %v878, 4294901760
        %5261 = vmatprep.subr.mxu0 %v5260
        %v5262 = vand.u32 %v877, 4294901760
        %5263 = vmatpush1.msra.mxu0 %v5262
        %5264 = vmatprep.subr.mxu0 0.0
        %5265 = vmatpush2.msra.mxu0 0.0
        %5266 = vmatprep.subr.mxu0 0.0
        %5267 = vmatpush2.msra.mxu0 0.0
        %5268 = vmatprep.subr.mxu0 0.0
        %5269 = vmatpush2.msra.mxu0 0.0
        %5270 = vmatprep.subr.mxu0 0.0
        %5271 = vmatpush2.msra.mxu0 0.0
        %5272 = vmatprep.subr.mxu0 0.0
        %5273 = vmatpush2.msra.mxu0 0.0
        %5274 = vmatprep.subr.mxu0 0.0
        %5275 = vmatpush2.msra.mxu0 0.0
        %5276 = vmatprep.subr.mxu0 0.0
        %5277 = vmatpush2.msra.mxu0 0.0
        %5278 = vmatprep.subr.mxu0 0.0
        %5279 = vmatpush2.msra.mxu0 0.0
        %5280 = vmatprep.subr.mxu0 0.0
        %5281 = vmatpush2.msra.mxu0 0.0
        %5282 = vmatprep.subr.mxu0 0.0
        %5283 = vmatpush2.msra.mxu0 0.0
        %5284 = vmatprep.subr.mxu0 0.0
        %5285 = vmatpush2.msra.mxu0 0.0
        %5286 = vmatprep.subr.mxu0 0.0
        %5287 = vmatpush2.msra.mxu0 0.0
        %5288 = vmatprep.subr.mxu0 0.0
        %5289 = vmatpush2.msra.mxu0 0.0
        %5290 = vmatprep.subr.mxu0 0.0
        %5291 = vmatpush2.msra.mxu0 0.0
        %5292 = vmatprep.subr.mxu0 0.0
        %5293 = vmatpush2.msra.mxu0 0.0
        %5294 = vmatprep.subr.mxu0 0.0
        %5295 = vmatpush2.msra.mxu0 0.0
        %5296 = vmatprep.mubr.f32.mxu0 0.0
        %v5297 = vand.u32 %v339, 4294901760
        %v5298 = vsub.f32 %v339, %v5297
        %v5299 = vand.u32 %v5298, 4294901760
        %5300 = vmatmul.mubr.f32.gmra.mxu0 %v5299
        %v5301 = vpop.f32.mrf.mxu0
        %v5302 = vadd.f32 %v5214, %v5301
        %v5303 = vpop.f32.mrf.mxu0
        %v5304 = vadd.f32 %v5216, %v5303
        %5305 = vmatprep.mubr.f32.mxu0 0.0
        %v5306 = vand.u32 %v342, 4294901760
        %v5307 = vsub.f32 %v342, %v5306
        %v5308 = vand.u32 %v5307, 4294901760
        %5309 = vmatmul.mubr.f32.gmra.mxu0 %v5308
        %v5310 = vpop.f32.mrf.mxu0
        %v5311 = vadd.f32 %v5222, %v5310
        %v5312 = vpop.f32.mrf.mxu0
        %v5313 = vadd.f32 %v5224, %v5312
        %5314 = vdwg.mxu0
        %5315 = vmatprep.subr.mxu0 0.0
        %5316 = vmatpush1.msra.mxu0 0.0
        %5317 = vmatprep.subr.mxu0 0.0
        %5318 = vmatpush1.msra.mxu0 0.0
        %5319 = vmatprep.subr.mxu0 0.0
        %5320 = vmatpush1.msra.mxu0 0.0
        %5321 = vmatprep.subr.mxu0 0.0
        %5322 = vmatpush1.msra.mxu0 0.0
        %5323 = vmatprep.subr.mxu0 0.0
        %5324 = vmatpush1.msra.mxu0 0.0
        %5325 = vmatprep.subr.mxu0 0.0
        %5326 = vmatpush1.msra.mxu0 0.0
        %5327 = vmatprep.subr.mxu0 0.0
        %5328 = vmatpush1.msra.mxu0 0.0
        %5329 = vmatprep.subr.mxu0 0.0
        %5330 = vmatpush1.msra.mxu0 0.0
        %5331 = vmatprep.subr.mxu0 0.0
        %5332 = vmatpush1.msra.mxu0 0.0
        %5333 = vmatprep.subr.mxu0 0.0
        %5334 = vmatpush1.msra.mxu0 0.0
        %5335 = vmatprep.subr.mxu0 0.0
        %5336 = vmatpush1.msra.mxu0 0.0
        %5337 = vmatprep.subr.mxu0 0.0
        %5338 = vmatpush1.msra.mxu0 0.0
        %5339 = vmatprep.subr.mxu0 0.0
        %5340 = vmatpush1.msra.mxu0 0.0
        %v5341 = vand.u32 %v967, 4294901760
        %v5342 = vsub.f32 %v967, %v5341
        %v5343 = vand.u32 %v5342, 4294901760
        %5344 = vmatprep.subr.mxu0 %v5343
        %v5345 = vand.u32 %v964, 4294901760
        %v5346 = vsub.f32 %v964, %v5345
        %v5347 = vand.u32 %v5346, 4294901760
        %5348 = vmatpush1.msra.mxu0 %v5347
        %v5349 = vand.u32 %v894, 4294901760
        %v5350 = vsub.f32 %v894, %v5349
        %v5351 = vand.u32 %v5350, 4294901760
        %5352 = vmatprep.subr.mxu0 %v5351
        %v5353 = vand.u32 %v893, 4294901760
        %v5354 = vsub.f32 %v893, %v5353
        %v5355 = vand.u32 %v5354, 4294901760
        %5356 = vmatpush1.msra.mxu0 %v5355
        %v5357 = vand.u32 %v878, 4294901760
        %v5358 = vsub.f32 %v878, %v5357
        %v5359 = vand.u32 %v5358, 4294901760
        %5360 = vmatprep.subr.mxu0 %v5359
        %v5361 = vand.u32 %v877, 4294901760
        %v5362 = vsub.f32 %v877, %v5361
        %v5363 = vand.u32 %v5362, 4294901760
        %5364 = vmatpush1.msra.mxu0 %v5363
        %5365 = vmatprep.subr.mxu0 0.0
        %5366 = vmatpush2.msra.mxu0 0.0
        %5367 = vmatprep.subr.mxu0 0.0
        %5368 = vmatpush2.msra.mxu0 0.0
        %5369 = vmatprep.subr.mxu0 0.0
        %5370 = vmatpush2.msra.mxu0 0.0
        %5371 = vmatprep.subr.mxu0 0.0
        %5372 = vmatpush2.msra.mxu0 0.0
        %5373 = vmatprep.subr.mxu0 0.0
        %5374 = vmatpush2.msra.mxu0 0.0
        %5375 = vmatprep.subr.mxu0 0.0
        %5376 = vmatpush2.msra.mxu0 0.0
        %5377 = vmatprep.subr.mxu0 0.0
        %5378 = vmatpush2.msra.mxu0 0.0
        %5379 = vmatprep.subr.mxu0 0.0
        %5380 = vmatpush2.msra.mxu0 0.0
        %5381 = vmatprep.subr.mxu0 0.0
        %5382 = vmatpush2.msra.mxu0 0.0
        %5383 = vmatprep.subr.mxu0 0.0
        %5384 = vmatpush2.msra.mxu0 0.0
        %5385 = vmatprep.subr.mxu0 0.0
        %5386 = vmatpush2.msra.mxu0 0.0
        %5387 = vmatprep.subr.mxu0 0.0
        %5388 = vmatpush2.msra.mxu0 0.0
        %5389 = vmatprep.subr.mxu0 0.0
        %5390 = vmatpush2.msra.mxu0 0.0
        %5391 = vmatprep.subr.mxu0 0.0
        %5392 = vmatpush2.msra.mxu0 0.0
        %5393 = vmatprep.subr.mxu0 0.0
        %5394 = vmatpush2.msra.mxu0 0.0
        %5395 = vmatprep.subr.mxu0 0.0
        %5396 = vmatpush2.msra.mxu0 0.0
        %5397 = vmatprep.mubr.f32.mxu0 0.0
        %v5398 = vand.u32 %v339, 4294901760
        %5399 = vmatmul.mubr.f32.gmra.mxu0 %v5398
        %v5400 = vpop.f32.mrf.mxu0
        %v5401 = vadd.f32 %v5302, %v5400
        %v5402 = vpop.f32.mrf.mxu0
        %v5403 = vadd.f32 %v5304, %v5402
        %5404 = vmatprep.mubr.f32.mxu0 0.0
        %v5405 = vand.u32 %v342, 4294901760
        %5406 = vmatmul.mubr.f32.gmra.mxu0 %v5405
        %v5407 = vpop.f32.mrf.mxu0
        %v5408 = vadd.f32 %v5311, %v5407
        %v5409 = vpop.f32.mrf.mxu0
        %v5410 = vadd.f32 %v5313, %v5409
        %5411 = vdwg.mxu0
        %5412 = vmatprep.subr.mxu0 0.0
        %5413 = vmatpush1.msra.mxu0 0.0
        %5414 = vmatprep.subr.mxu0 0.0
        %5415 = vmatpush1.msra.mxu0 0.0
        %5416 = vmatprep.subr.mxu0 0.0
        %5417 = vmatpush1.msra.mxu0 0.0
        %5418 = vmatprep.subr.mxu0 0.0
        %5419 = vmatpush1.msra.mxu0 0.0
        %5420 = vmatprep.subr.mxu0 0.0
        %5421 = vmatpush1.msra.mxu0 0.0
        %5422 = vmatprep.subr.mxu0 0.0
        %5423 = vmatpush1.msra.mxu0 0.0
        %5424 = vmatprep.subr.mxu0 0.0
        %5425 = vmatpush1.msra.mxu0 0.0
        %5426 = vmatprep.subr.mxu0 0.0
        %5427 = vmatpush1.msra.mxu0 0.0
        %5428 = vmatprep.subr.mxu0 0.0
        %5429 = vmatpush1.msra.mxu0 0.0
        %5430 = vmatprep.subr.mxu0 0.0
        %5431 = vmatpush1.msra.mxu0 0.0
        %5432 = vmatprep.subr.mxu0 0.0
        %5433 = vmatpush1.msra.mxu0 0.0
        %5434 = vmatprep.subr.mxu0 0.0
        %5435 = vmatpush1.msra.mxu0 0.0
        %5436 = vmatprep.subr.mxu0 0.0
        %5437 = vmatpush1.msra.mxu0 0.0
        %v5438 = vand.u32 %v967, 4294901760
        %5439 = vmatprep.subr.mxu0 %v5438
        %v5440 = vand.u32 %v964, 4294901760
        %5441 = vmatpush1.msra.mxu0 %v5440
        %v5442 = vand.u32 %v894, 4294901760
        %5443 = vmatprep.subr.mxu0 %v5442
        %v5444 = vand.u32 %v893, 4294901760
        %5445 = vmatpush1.msra.mxu0 %v5444
        %v5446 = vand.u32 %v878, 4294901760
        %5447 = vmatprep.subr.mxu0 %v5446
        %v5448 = vand.u32 %v877, 4294901760
        %5449 = vmatpush1.msra.mxu0 %v5448
        %5450 = vmatprep.subr.mxu0 0.0
        %5451 = vmatpush2.msra.mxu0 0.0
        %5452 = vmatprep.subr.mxu0 0.0
        %5453 = vmatpush2.msra.mxu0 0.0
        %5454 = vmatprep.subr.mxu0 0.0
        %5455 = vmatpush2.msra.mxu0 0.0
        %5456 = vmatprep.subr.mxu0 0.0
        %5457 = vmatpush2.msra.mxu0 0.0
        %5458 = vmatprep.subr.mxu0 0.0
        %5459 = vmatpush2.msra.mxu0 0.0
        %5460 = vmatprep.subr.mxu0 0.0
        %5461 = vmatpush2.msra.mxu0 0.0
        %5462 = vmatprep.subr.mxu0 0.0
        %5463 = vmatpush2.msra.mxu0 0.0
        %5464 = vmatprep.subr.mxu0 0.0
        %5465 = vmatpush2.msra.mxu0 0.0
        %5466 = vmatprep.subr.mxu0 0.0
        %5467 = vmatpush2.msra.mxu0 0.0
        %5468 = vmatprep.subr.mxu0 0.0
        %5469 = vmatpush2.msra.mxu0 0.0
        %5470 = vmatprep.subr.mxu0 0.0
        %5471 = vmatpush2.msra.mxu0 0.0
        %5472 = vmatprep.subr.mxu0 0.0
        %5473 = vmatpush2.msra.mxu0 0.0
        %5474 = vmatprep.subr.mxu0 0.0
        %5475 = vmatpush2.msra.mxu0 0.0
        %5476 = vmatprep.subr.mxu0 0.0
        %5477 = vmatpush2.msra.mxu0 0.0
        %5478 = vmatprep.subr.mxu0 0.0
        %5479 = vmatpush2.msra.mxu0 0.0
        %5480 = vmatprep.subr.mxu0 0.0
        %5481 = vmatpush2.msra.mxu0 0.0
        %5482 = vmatprep.mubr.f32.mxu0 0.0
        %v5483 = vand.u32 %v339, 4294901760
        %5484 = vmatmul.mubr.f32.gmra.mxu0 %v5483
        %v5485 = vpop.f32.mrf.mxu0
        %v5486 = vadd.f32 %v5401, %v5485
        %v5487 = vpop.f32.mrf.mxu0
        %v5488 = vadd.f32 %v5403, %v5487
        %5489 = vmatprep.mubr.f32.mxu0 0.0
        %v5490 = vand.u32 %v342, 4294901760
        %5491 = vmatmul.mubr.f32.gmra.mxu0 %v5490
        %v5492 = vpop.f32.mrf.mxu0
        %v5493 = vadd.f32 %v5408, %v5492
        %v5494 = vpop.f32.mrf.mxu0
        %v5495 = vadd.f32 %v5410, %v5494
        %5496 = vdwg.mxu0
        %5497 = vst [vmem:[%s296] sm:$0xff] %v1524
        %5498 = vst [vmem:[%s296 + $0x8] sm:$0xff] %v1526
        %5499 = vst [vmem:[%s296 + $0x10] sm:$0xff] %v2090
        %5500 = vst [vmem:[%s296 + $0x18] sm:$0xff] %v2092
        %5501 = vst [vmem:[%s296 + $0x20] sm:$0xff] %v2656
        %5502 = vst [vmem:[%s296 + $0x28] sm:$0xff] %v2658
        %5503 = vst [vmem:[%s296 + $0x30] sm:$0xff] %v3222
        %5504 = vst [vmem:[%s296 + $0x38] sm:$0xff] %v3224
        %5505 = vst [vmem:[%s296 + $0x40] sm:$0xff] %v3788
        %5506 = vst [vmem:[%s296 + $0x48] sm:$0xff] %v3790
        %5507 = vst [vmem:[%s296 + $0x50] sm:$0xff] %v4354
        %5508 = vst [vmem:[%s296 + $0x58] sm:$0xff] %v4356
        %5509 = vst [vmem:[%s296 + $0x60] sm:$0xff] %v4920
        %5510 = vst [vmem:[%s296 + $0x68] sm:$0xff] %v4922
        %5511 = vst [vmem:[%s296 + $0x70] sm:$0xff] %v5486
        %5512 = vst [vmem:[%s296 + $0x78] sm:$0xff] %v5488
        %5513 = vst [vmem:[%s296 + $0x80] sm:$0x3] %v1531
        %5514 = vst [vmem:[%s296 + $0x88] sm:$0x3] %v1533
        %5515 = vst [vmem:[%s296 + $0x90] sm:$0x3] %v2097
        %5516 = vst [vmem:[%s296 + $0x98] sm:$0x3] %v2099
        %5517 = vst [vmem:[%s296 + $0xa0] sm:$0x3] %v2663
        %5518 = vst [vmem:[%s296 + $0xa8] sm:$0x3] %v2665
        %5519 = vst [vmem:[%s296 + $0xb0] sm:$0x3] %v3229
        %5520 = vst [vmem:[%s296 + $0xb8] sm:$0x3] %v3231
        %5521 = vst [vmem:[%s296 + $0xc0] sm:$0x3] %v3795
        %5522 = vst [vmem:[%s296 + $0xc8] sm:$0x3] %v3797
        %5523 = vst [vmem:[%s296 + $0xd0] sm:$0x3] %v4361
        %5524 = vst [vmem:[%s296 + $0xd8] sm:$0x3] %v4363
        %5525 = vst [vmem:[%s296 + $0xe0] sm:$0x3] %v4927
        %5526 = vst [vmem:[%s296 + $0xe8] sm:$0x3] %v4929
        %5527 = vst [vmem:[%s296 + $0xf0] sm:$0x3] %v5493
        %5528 = vst [vmem:[%s296 + $0xf8] sm:$0x3] %v5495
        %s5529 = sand.u32 %s106, 1
        %s5530 = sand.u32 %s106, 1
        %s5531 = smul.addr %s5530, 256
        %s5532 = scalar_lea.vmem [#allocation3], %s5531
        // Predicated region
        $region56: #{tpu_custom_call.1} parent=50 // pred_check
          %p5533 = pneg %p116
        $region57: #{tpu_custom_call.1} parent=50 // pred_check_branch
          %5535 = sbr.rel (%p5533) target = $region59
        $region58: #{tpu_custom_call.1} parent=50 // pred_region
          %s5536 = smul.u32 16, %s19
          %s5537 = smul.addr %s18, 64
          %s5538 = sadd.s32 %s5536, %s5537
          %s5539 = smul.addr %s5538, 8
          %s5540 = scalar_lea.vmem %s3, %s5539
          // Predicated region
          $region60: #{tpu_custom_call.1} parent=58 // pred_check
            _
          $region61: #{tpu_custom_call.1} parent=58 // pred_check_branch
            %5542 = sbr.rel (0) target = $region63
          $region62: #{tpu_custom_call.1} parent=58 // pred_region
            // Predicated region
            $region64: #{tpu_custom_call.1} parent=62 // pred_check
              _
            $region65: #{tpu_custom_call.1} parent=62 // pred_check_branch
              %5544 = sbr.rel (0) target = $region67
            $region66: #{tpu_custom_call.1} parent=62 // pred_region
              loop: start=0, step=1, limit=1
              $region68: #{tpu_custom_call.1} parent=66 // loop_pre_header
                _
              $region69: #{tpu_custom_call.1} parent=66 // loop_header
                %s5546 = sphi 0, %s5550
                %p5547 = scmp.ge.s32.totalorder %s5546, 1
                %s5551 = sphi %s5532, %s5532
                %s5552 = sphi %s5540, %s5540
              $region70: #{tpu_custom_call.1} parent=66 // loop_header_branch
                %5549 = sbr.rel (%p5547) target = $region74
              $region71: #{tpu_custom_call.1} parent=66 // loop_body
                %v5553 = vld [vmem:[%s5551] sm:$0xff]
                %5554 = vst [vmem:[%s5552] sm:$0xff] %v5553
                %v5555 = vld [vmem:[%s5551 + $0x8] sm:$0xff]
                %5556 = vst [vmem:[%s5552 + $0x8] sm:$0xff] %v5555
                %v5557 = vld [vmem:[%s5551 + $0x10] sm:$0xff]
                %5558 = vst [vmem:[%s5552 + $0x10] sm:$0xff] %v5557
                %v5559 = vld [vmem:[%s5551 + $0x18] sm:$0xff]
                %5560 = vst [vmem:[%s5552 + $0x18] sm:$0xff] %v5559
                %v5561 = vld [vmem:[%s5551 + $0x20] sm:$0xff]
                %5562 = vst [vmem:[%s5552 + $0x20] sm:$0xff] %v5561
                %v5563 = vld [vmem:[%s5551 + $0x28] sm:$0xff]
                %5564 = vst [vmem:[%s5552 + $0x28] sm:$0xff] %v5563
                %v5565 = vld [vmem:[%s5551 + $0x30] sm:$0xff]
                %5566 = vst [vmem:[%s5552 + $0x30] sm:$0xff] %v5565
                %v5567 = vld [vmem:[%s5551 + $0x38] sm:$0xff]
                %5568 = vst [vmem:[%s5552 + $0x38] sm:$0xff] %v5567
                %v5569 = vld [vmem:[%s5551 + $0x40] sm:$0xff]
                %5570 = vst [vmem:[%s5552 + $0x40] sm:$0xff] %v5569
                %v5571 = vld [vmem:[%s5551 + $0x48] sm:$0xff]
                %5572 = vst [vmem:[%s5552 + $0x48] sm:$0xff] %v5571
                %v5573 = vld [vmem:[%s5551 + $0x50] sm:$0xff]
                %5574 = vst [vmem:[%s5552 + $0x50] sm:$0xff] %v5573
                %v5575 = vld [vmem:[%s5551 + $0x58] sm:$0xff]
                %5576 = vst [vmem:[%s5552 + $0x58] sm:$0xff] %v5575
                %v5577 = vld [vmem:[%s5551 + $0x60] sm:$0xff]
                %5578 = vst [vmem:[%s5552 + $0x60] sm:$0xff] %v5577
                %v5579 = vld [vmem:[%s5551 + $0x68] sm:$0xff]
                %5580 = vst [vmem:[%s5552 + $0x68] sm:$0xff] %v5579
                %v5581 = vld [vmem:[%s5551 + $0x70] sm:$0xff]
                %5582 = vst [vmem:[%s5552 + $0x70] sm:$0xff] %v5581
                %v5583 = vld [vmem:[%s5551 + $0x78] sm:$0xff]
                %5584 = vst [vmem:[%s5552 + $0x78] sm:$0xff] %v5583
                %v5585 = vld [vmem:[%s5551 + $0x80] sm:$0xff]
                %5586 = vst [vmem:[%s5552 + $0x100] sm:$0xff] %v5585
                %v5587 = vld [vmem:[%s5551 + $0x88] sm:$0xff]
                %5588 = vst [vmem:[%s5552 + $0x108] sm:$0xff] %v5587
                %v5589 = vld [vmem:[%s5551 + $0x90] sm:$0xff]
                %5590 = vst [vmem:[%s5552 + $0x110] sm:$0xff] %v5589
                %v5591 = vld [vmem:[%s5551 + $0x98] sm:$0xff]
                %5592 = vst [vmem:[%s5552 + $0x118] sm:$0xff] %v5591
                %v5593 = vld [vmem:[%s5551 + $0xa0] sm:$0xff]
                %5594 = vst [vmem:[%s5552 + $0x120] sm:$0xff] %v5593
                %v5595 = vld [vmem:[%s5551 + $0xa8] sm:$0xff]
                %5596 = vst [vmem:[%s5552 + $0x128] sm:$0xff] %v5595
                %v5597 = vld [vmem:[%s5551 + $0xb0] sm:$0xff]
                %5598 = vst [vmem:[%s5552 + $0x130] sm:$0xff] %v5597
                %v5599 = vld [vmem:[%s5551 + $0xb8] sm:$0xff]
                %5600 = vst [vmem:[%s5552 + $0x138] sm:$0xff] %v5599
                %v5601 = vld [vmem:[%s5551 + $0xc0] sm:$0xff]
                %5602 = vst [vmem:[%s5552 + $0x140] sm:$0xff] %v5601
                %v5603 = vld [vmem:[%s5551 + $0xc8] sm:$0xff]
                %5604 = vst [vmem:[%s5552 + $0x148] sm:$0xff] %v5603
                %v5605 = vld [vmem:[%s5551 + $0xd0] sm:$0xff]
                %5606 = vst [vmem:[%s5552 + $0x150] sm:$0xff] %v5605
                %v5607 = vld [vmem:[%s5551 + $0xd8] sm:$0xff]
                %5608 = vst [vmem:[%s5552 + $0x158] sm:$0xff] %v5607
                %v5609 = vld [vmem:[%s5551 + $0xe0] sm:$0xff]
                %5610 = vst [vmem:[%s5552 + $0x160] sm:$0xff] %v5609
                %v5611 = vld [vmem:[%s5551 + $0xe8] sm:$0xff]
                %5612 = vst [vmem:[%s5552 + $0x168] sm:$0xff] %v5611
                %v5613 = vld [vmem:[%s5551 + $0xf0] sm:$0xff]
                %5614 = vst [vmem:[%s5552 + $0x170] sm:$0xff] %v5613
                %v5615 = vld [vmem:[%s5551 + $0xf8] sm:$0xff]
                %5616 = vst [vmem:[%s5552 + $0x178] sm:$0xff] %v5615
              $region72: #{tpu_custom_call.1} parent=66 // loop_footer
                %s5550 = sadd.s32 1, %s5546
              $region73: #{tpu_custom_call.1} parent=66 // loop_footer_branch
                %5545 = sbr.rel target = $region69
              $region74: #{tpu_custom_call.1} parent=66 // loop_exit
                _
            $region67: #{tpu_custom_call.1} parent=62 // pred_fallthru
              _
            // Predicated region
            $region75: #{tpu_custom_call.1} parent=62 // pred_check
              _
            $region76: #{tpu_custom_call.1} parent=62 // pred_check_branch
              %5618 = sbr.rel target = $region78
            $region77: #{tpu_custom_call.1} parent=62 // pred_region
              _
            $region78: #{tpu_custom_call.1} parent=62 // pred_fallthru
              _
          $region63: #{tpu_custom_call.1} parent=58 // pred_fallthru
            _
          %5619 = vnop
        $region59: #{tpu_custom_call.1} parent=50 // pred_fallthru
          _
      $region51: #{tpu_custom_call.1} parent=5 // pred_fallthru
        _
      %p5620 = scmp.le.s32.totalorder 2, %s9
      // Predicated region
      $region79: #{tpu_custom_call.1} parent=5 // pred_check
        %p5621 = pneg %p5620
      $region80: #{tpu_custom_call.1} parent=5 // pred_check_branch
        %5623 = sbr.rel (%p5621) target = $region82
      $region81: #{tpu_custom_call.1} parent=5 // pred_region
        %s5624 = ssub.s32 %s9, 2
        // Predicated region
        $region83: #{tpu_custom_call.1} parent=81 // pred_check
          %p5625 = pneg %p122
        $region84: #{tpu_custom_call.1} parent=81 // pred_check_branch
          %5627 = sbr.rel (%p5625) target = $region86
        $region85: #{tpu_custom_call.1} parent=81 // pred_region
          %s5628 = sand.u32 %s107, 1
          %s5629 = sand.u32 %s107, 1
          %s5630 = smul.addr %s5629, 256
          %s5631 = scalar_lea.vmem [#allocation3], %s5630
        $region86: #{tpu_custom_call.1} parent=81 // pred_fallthru
          _
      $region82: #{tpu_custom_call.1} parent=5 // pred_fallthru
        _
    $region6: #{tpu_custom_call.1} parent=1 // loop_footer
      %s13 = sadd.s32 1, %s9
    $region7: #{tpu_custom_call.1} parent=1 // loop_footer_branch
      %8 = sbr.rel target = $region3
    $region8: #{tpu_custom_call.1} parent=1 // loop_exit
      _

</llo_original>
